<compile_context>
chip_gen: v5e
topology: v5e:2x2
jax: 0.10.0
libtpu: 0.0.40
codegen_flags: <defaults>
</compile_context>

<pallas_src>
import jax
import jax.numpy as jnp
import numpy as np
from jax import lax
from jax.experimental import pallas as pl
from jax.experimental.pallas import tpu as pltpu


def _round_up(x, m):
    return ((x + m - 1) // m) * m


def _argmax_last(x):
    """First-occurrence argmax along the last axis (torch.argmax-style), keepdims."""
    m = jnp.max(x, axis=-1, keepdims=True)
    idx = lax.broadcasted_iota(jnp.int32, x.shape, x.ndim - 1)
    cand = jnp.where(x == m, idx, jnp.int32(np.iinfo(np.int32).max))
    return jnp.min(cand, axis=-1, keepdims=True)  # (..., 1) int32


def choice_kernel(card_prob_ref, card_embed_ref, pos_x_ref, pos_y_ref,
                  out_ref, idx_ref):
    cp = card_prob_ref[...]                  # (TB, C)
    ce = card_embed_ref[...]                 # (C, D)  VMEM-resident (constant index_map)
    px = pos_x_ref[...]                      # (TB, X, D)
    py = pos_y_ref[...]                      # (TB, Y, D)

    TB, C = cp.shape
    D = ce.shape[1]
    X = px.shape[1]
    Y = py.shape[1]

    # eval-path choice_index = argmax over cards
    cidx = _argmax_last(cp)                                          # (TB, 1)
    onehot = lax.broadcasted_iota(jnp.int32, (TB, C), 1) == cidx     # (TB, C) bool
    onehot_f = onehot.astype(jnp.float32)

    # choice_card = card_embed[choice_index]  ==  onehot @ card_embed  (MXU)
    choice_card = lax.dot_general(
        onehot_f, ce.astype(jnp.float32),
        dimension_numbers=(((1,), (0,)), ((), ())),
        precision=lax.Precision.HIGHEST,
        preferred_element_type=jnp.float32)                          # (TB, D)

    ce_s = ce.astype(px.dtype)  # match pos dtype for the score matmuls

    def scores(pv, n):
        # All-card scores on the MXU: (TB*n, D) @ (D, C) -> (TB*n, C) in f32,
        # then select the chosen card's column with a C-wide select + reduce.
        flat = pv.reshape(TB * n, D)
        sc = lax.dot_general(
            flat, ce_s,
            dimension_numbers=(((1,), (1,)), ((), ())),              # contract D
            precision=lax.Precision.HIGHEST,
            preferred_element_type=jnp.float32).reshape(TB, n, C)
        return jnp.sum(jnp.where(onehot[:, None, :], sc, 0.0), axis=-1)  # (TB, n)

    sx = scores(px, X)
    sy = scores(py, Y)

    # argmax on pre-softmax scores == argmax on softmax probabilities.
    px_idx = _argmax_last(sx)                                        # (TB, 1)
    py_idx = _argmax_last(sy)                                        # (TB, 1)

    def _softmax(z):
        z = z - jnp.max(z, axis=-1, keepdims=True)
        e = jnp.exp(z)
        return e / jnp.sum(e, axis=-1, keepdims=True)                # exact divide

    px_prob = _softmax(sx)                                           # (TB, X)
    py_prob = _softmax(sy)                                           # (TB, Y)

    # single fused f32 output block: [choice_card | pos_x_prob | pos_y_prob]
    out_ref[:, 0:D] = choice_card.astype(out_ref.dtype)
    out_ref[:, D:D + X] = px_prob.astype(out_ref.dtype)
    out_ref[:, D + X:D + X + Y] = py_prob.astype(out_ref.dtype)

    # packed int32 indices: [choice_index, pos_x, pos_y, 0, ...]
    col = lax.broadcasted_iota(jnp.int32, idx_ref.shape, 1)
    idx_ref[...] = jnp.where(col == 0, cidx,
                   jnp.where(col == 1, px_idx,
                   jnp.where(col == 2, py_idx, 0)))


def _vmem_block_bytes(shape, dtype):
    """Rough VMEM footprint of one block, with (8, 128) tile padding."""
    s = list(shape)
    s[-1] = _round_up(s[-1], 128)
    if len(s) >= 2:
        s[-2] = _round_up(s[-2], 8)
    n = 1
    for v in s:
        n *= int(v)
    return n * np.dtype(dtype).itemsize


def choice_processor_pallas(card_prob, pos_x_vector, pos_y_vector, card_embed,
                            *, batch_tile=512, compute_dtype=None,
                            vmem_limit_bytes=None):
    """Eval-mode forward of the torch ChoiceProcessor.

    Returns (choice_card, pos_x_prob, pos_y_prob, choice_index, pos_x, pos_y).

    batch_tile: batch rows per grid step.  Default 512 fits every generation
      (v7x has 64 MiB VMEM/TC); raise to 1024-2048 on v5e/v6e (128 MiB) and
      pass vmem_limit_bytes accordingly.  compute_dtype=jnp.bfloat16 halves
      the HBM traffic of the dominant pos stream (scores still accumulate in
      f32 on the MXU) at a small numerical cost.
    """
    B, C = card_prob.shape
    Ce, D = card_embed.shape
    X = pos_x_vector.shape[1]
    Y = pos_y_vector.shape[1]

    if compute_dtype is not None:
        # TODO(synk): ideally the producer emits bf16 directly; this cast is an
        # extra HBM pass and is only worth it if the result is reused.
        pos_x_vector = pos_x_vector.astype(compute_dtype)
        pos_y_vector = pos_y_vector.astype(compute_dtype)
        card_embed = card_embed.astype(compute_dtype)

    # Batch tile: multiple of 8 (sublane constraint); ragged last block is
    # handled by Pallas (masked writeback -> no row >= B is ever written).
    TB = min(_round_up(max(batch_tile, 8), 8), _round_up(B, 8))
    grid = (pl.cdiv(B, TB),)

    out_shape = (
        jax.ShapeDtypeStruct((B, D + X + Y), jnp.float32),  # [card | px | py]
        jax.ShapeDtypeStruct((B, 8), jnp.int32),            # [cidx, px, py, 0...]
    )
    in_specs = [
        pl.BlockSpec((TB, C), lambda i: (i, 0)),
        pl.BlockSpec((Ce, D), lambda i: (0, 0)),            # resident across steps
        pl.BlockSpec((TB, X, D), lambda i: (i, 0, 0)),
        pl.BlockSpec((TB, Y, D), lambda i: (i, 0, 0)),
    ]
    out_specs = (
        pl.BlockSpec((TB, D + X + Y), lambda i: (i, 0)),
        pl.BlockSpec((TB, 8), lambda i: (i, 0)),
    )

    if vmem_limit_bytes is None:
        blk = (_vmem_block_bytes((TB, C), card_prob.dtype)
               + _vmem_block_bytes((Ce, D), card_embed.dtype)
               + _vmem_block_bytes((TB, X, D), pos_x_vector.dtype)
               + _vmem_block_bytes((TB, Y, D), pos_y_vector.dtype)
               + _vmem_block_bytes((TB, D + X + Y), jnp.float32)
               + _vmem_block_bytes((TB, 8), jnp.int32))
        # x2 double buffering + headroom for f32 in-kernel intermediates
        inter = 4 * _vmem_block_bytes((TB, max(X, Y), 128), jnp.float32)
        vmem_limit_bytes = int(min(2 * blk + inter + (8 << 20), 60 << 20))

    fused, idx = pl.pallas_call(
        choice_kernel,
        grid=grid,
        in_specs=in_specs,
        out_specs=out_specs,
        out_shape=out_shape,
        compiler_params=pltpu.CompilerParams(
            dimension_semantics=("parallel",),      # megacore shard on v7x
            vmem_limit_bytes=vmem_limit_bytes),
    )(card_prob, card_embed, pos_x_vector, pos_y_vector)

    choice_card = fused[:, :D]
    px_prob = fused[:, D:D + X]
    py_prob = fused[:, D + X:D + X + Y]
    return choice_card, px_prob, py_prob, idx[:, 0], idx[:, 1], idx[:, 2]


def _reference(card_prob, card_embed, pos_x_vector, pos_y_vector):
    """Plain-JAX re-statement of the torch eval-mode forward, for checking."""
    cidx = jnp.argmax(card_prob, axis=-1)
    choice_card = card_embed[cidx]
    sx = jnp.sum(pos_x_vector * choice_card[:, None, :], axis=-1)
    sy = jnp.sum(pos_y_vector * choice_card[:, None, :], axis=-1)
    px_prob = jax.nn.softmax(sx, axis=-1)
    py_prob = jax.nn.softmax(sy, axis=-1)
    return (choice_card, px_prob, py_prob, cidx,
            jnp.argmax(px_prob, -1), jnp.argmax(py_prob, -1))


if __name__ == "__main__":
    key = jax.random.PRNGKey(0)
    # small shapes; B=32 with batch_tile=8 exercises the 4-step batch pipeline
    B, C, D, X, Y = 32, 8, 32, 16, 16
    k1, k2, k3, k4 = jax.random.split(key, 4)

    card_prob = jax.nn.softmax(jax.random.normal(k1, (B, C), jnp.float32), axis=-1)
    card_embed = jax.random.normal(k2, (C, D), jnp.float32)
    pos_x_vector = jax.random.normal(k3, (B, X, D), jnp.float32)
    pos_y_vector = jax.random.normal(k4, (B, Y, D), jnp.float32)

    outs = choice_processor_pallas(card_prob, pos_x_vector, pos_y_vector,
                                   card_embed, batch_tile=8)
    outs = jax.block_until_ready(outs)
    choice_card, px_prob, py_prob, cidx, pxi, pyi = [np.asarray(o) for o in outs]

    # correctness check vs plain-JAX reference (exact softmax, HIGHEST-precision dots)
    ref = [np.asarray(r) for r in
           _reference(card_prob, card_embed, pos_x_vector, pos_y_vector)]
    assert np.allclose(choice_card, ref[0], rtol=1e-4, atol=1e-4)
    assert np.allclose(px_prob, ref[1], rtol=1e-3, atol=1e-5)
    assert np.allclose(py_prob, ref[2], rtol=1e-3, atol=1e-5)
    assert np.array_equal(cidx, ref[3])
    assert np.array_equal(pxi, ref[4])
    assert np.array_equal(pyi, ref[5])

    # host-side glue reproducing the torch module's `action` dict + return tuple
    # TODO(synk): training-mode Categorical sampling / choice_index override live here.
    card_prob_np = np.asarray(card_prob)
    action = {
        'card': [int(i) for i in cidx],
        'card_prob': [float(card_prob_np[i, j]) for i, j in enumerate(cidx)],
        'pos_x': [int(i) for i in pxi],
        'pos_x_prob': [float(px_prob[i, j]) for i, j in enumerate(pxi)],
        'pos_y': [int(i) for i in pyi],
        'pos_y_prob': [float(py_prob[i, j]) for i, j in enumerate(pyi)],
    }
    _ = (action, choice_card)  # same return structure as the torch module

    print("KERNEL_OK")
</pallas_src>

<mosaic_0001>
module attributes {stable_mosaic.version = 11 : i64} {
  func.func @choice_kernel(%arg0: i32, %arg1: memref<8x8xf32, #tpu.memory_space<vmem>>, %arg2: memref<8x32xf32, #tpu.memory_space<vmem>>, %arg3: memref<8x16x32xf32, #tpu.memory_space<vmem>>, %arg4: memref<8x16x32xf32, #tpu.memory_space<vmem>>, %arg5: memref<8x64xf32, #tpu.memory_space<vmem>>, %arg6: memref<8x8xi32, #tpu.memory_space<vmem>>) attributes {dimension_semantics = [#tpu.dimension_semantics<parallel>], iteration_bounds = array<i64: 4>, scalar_prefetch = 0 : i64, scratch_operands = 0 : i64, tpu.core_type = #tpu.core_type<tc>, window_params = [{transform_indices = @transform_0, window_bounds = array<i64: 8, 8>}, {pipeline_mode = #tpu.pipeline_mode<synchronous>, transform_indices = @transform_1, window_bounds = array<i64: 8, 32>}, {transform_indices = @transform_2, window_bounds = array<i64: 8, 16, 32>}, {transform_indices = @transform_3, window_bounds = array<i64: 8, 16, 32>}, {transform_indices = @transform_4, window_bounds = array<i64: 8, 64>}, {transform_indices = @transform_5, window_bounds = array<i64: 8, 8>}]} {
    %c0 = arith.constant 0 : index
    %c0_0 = arith.constant 0 : index
    %0 = vector.load %arg1[%c0, %c0_0] : memref<8x8xf32, #tpu.memory_space<vmem>>, vector<8x8xf32>
    %c0_1 = arith.constant 0 : index
    %c0_2 = arith.constant 0 : index
    %1 = vector.load %arg2[%c0_1, %c0_2] : memref<8x32xf32, #tpu.memory_space<vmem>>, vector<8x32xf32>
    %c0_3 = arith.constant 0 : index
    %c0_4 = arith.constant 0 : index
    %c0_5 = arith.constant 0 : index
    %2 = vector.load %arg3[%c0_3, %c0_4, %c0_5] : memref<8x16x32xf32, #tpu.memory_space<vmem>>, vector<8x16x32xf32>
    %c0_6 = arith.constant 0 : index
    %c0_7 = arith.constant 0 : index
    %c0_8 = arith.constant 0 : index
    %3 = vector.load %arg4[%c0_6, %c0_7, %c0_8] : memref<8x16x32xf32, #tpu.memory_space<vmem>>, vector<8x16x32xf32>
    %cst = arith.constant dense<0xFF800000> : vector<8xf32>
    %4 = vector.multi_reduction <maximumf>, %0, %cst [1] : vector<8x8xf32> to vector<8xf32>
    %5 = vector.shape_cast %4 : vector<8xf32> to vector<8x1xf32>
    %6 = tpu.iota {dimensions = array<i32: 1>} : vector<8x8xi32>
    %7 = vector.broadcast %5 : vector<8x1xf32> to vector<8x8xf32>
    %8 = arith.cmpf oeq, %0, %7 : vector<8x8xf32>
    %c2147483647_i32 = arith.constant 2147483647 : i32
    %9 = vector.broadcast %c2147483647_i32 : i32 to vector<8x8xi32>
    %10 = arith.select %8, %6, %9 : vector<8x8xi1>, vector<8x8xi32>
    %cst_9 = arith.constant dense<2147483647> : vector<8xi32>
    %11 = vector.multi_reduction <minsi>, %10, %cst_9 [1] : vector<8x8xi32> to vector<8xi32>
    %12 = vector.shape_cast %11 : vector<8xi32> to vector<8x1xi32>
    %13 = tpu.iota {dimensions = array<i32: 1>} : vector<8x8xi32>
    %14 = vector.broadcast %12 : vector<8x1xi32> to vector<8x8xi32>
    %15 = arith.cmpi eq, %13, %14 : vector<8x8xi32>
    %16 = arith.extui %15 : vector<8x8xi1> to vector<8x8xi32>
    %17 = arith.sitofp %16 : vector<8x8xi32> to vector<8x8xf32>
    %cst_10 = arith.constant dense<0.000000e+00> : vector<8x32xf32>
    %18 = tpu.matmul %17, %1, %cst_10 {dimension_numbers = #tpu.dot_dimension_numbers<[1], [0], [0], [1], [0, 0, 1, 1], [], []>, precision = #tpu.contract_precision<fp32>} : vector<8x8xf32>, vector<8x32xf32>, vector<8x32xf32> -> vector<8x32xf32>
    %19 = vector.shape_cast %2 : vector<8x16x32xf32> to vector<128x32xf32>
    %cst_11 = arith.constant dense<0.000000e+00> : vector<128x8xf32>
    %20 = tpu.matmul %19, %1, %cst_11 {dimension_numbers = #tpu.dot_dimension_numbers<[1], [1], [0], [0], [0, 0, 1, 0], [], []>, precision = #tpu.contract_precision<fp32>} : vector<128x32xf32>, vector<8x32xf32>, vector<128x8xf32> -> vector<128x8xf32>
    %21 = vector.shape_cast %20 : vector<128x8xf32> to vector<8x16x8xf32>
    %22 = vector.shape_cast %15 : vector<8x8xi1> to vector<8x1x8xi1>
    %cst_12 = arith.constant 0.000000e+00 : f32
    %23 = vector.shape_cast %22 : vector<8x1x8xi1> to vector<8x1x8xi1>
    %24 = vector.broadcast %23 : vector<8x1x8xi1> to vector<8x16x8xi1>
    %25 = vector.broadcast %cst_12 : f32 to vector<8x16x8xf32>
    %26 = arith.select %24, %21, %25 : vector<8x16x8xi1>, vector<8x16x8xf32>
    %cst_13 = arith.constant dense<0.000000e+00> : vector<8x16xf32>
    %27 = vector.multi_reduction <add>, %26, %cst_13 [2] : vector<8x16x8xf32> to vector<8x16xf32>
    %28 = vector.shape_cast %3 : vector<8x16x32xf32> to vector<128x32xf32>
    %cst_14 = arith.constant dense<0.000000e+00> : vector<128x8xf32>
    %29 = tpu.matmul %28, %1, %cst_14 {dimension_numbers = #tpu.dot_dimension_numbers<[1], [1], [0], [0], [0, 0, 1, 0], [], []>, precision = #tpu.contract_precision<fp32>} : vector<128x32xf32>, vector<8x32xf32>, vector<128x8xf32> -> vector<128x8xf32>
    %30 = vector.shape_cast %29 : vector<128x8xf32> to vector<8x16x8xf32>
    %31 = vector.shape_cast %15 : vector<8x8xi1> to vector<8x1x8xi1>
    %cst_15 = arith.constant 0.000000e+00 : f32
    %32 = vector.shape_cast %31 : vector<8x1x8xi1> to vector<8x1x8xi1>
    %33 = vector.broadcast %32 : vector<8x1x8xi1> to vector<8x16x8xi1>
    %34 = vector.broadcast %cst_15 : f32 to vector<8x16x8xf32>
    %35 = arith.select %33, %30, %34 : vector<8x16x8xi1>, vector<8x16x8xf32>
    %cst_16 = arith.constant dense<0.000000e+00> : vector<8x16xf32>
    %36 = vector.multi_reduction <add>, %35, %cst_16 [2] : vector<8x16x8xf32> to vector<8x16xf32>
    %cst_17 = arith.constant dense<0xFF800000> : vector<8xf32>
    %37 = vector.multi_reduction <maximumf>, %27, %cst_17 [1] : vector<8x16xf32> to vector<8xf32>
    %38 = vector.shape_cast %37 : vector<8xf32> to vector<8x1xf32>
    %39 = tpu.iota {dimensions = array<i32: 1>} : vector<8x16xi32>
    %40 = vector.broadcast %38 : vector<8x1xf32> to vector<8x16xf32>
    %41 = arith.cmpf oeq, %27, %40 : vector<8x16xf32>
    %c2147483647_i32_18 = arith.constant 2147483647 : i32
    %42 = vector.broadcast %c2147483647_i32_18 : i32 to vector<8x16xi32>
    %43 = arith.select %41, %39, %42 : vector<8x16xi1>, vector<8x16xi32>
    %cst_19 = arith.constant dense<2147483647> : vector<8xi32>
    %44 = vector.multi_reduction <minsi>, %43, %cst_19 [1] : vector<8x16xi32> to vector<8xi32>
    %45 = vector.shape_cast %44 : vector<8xi32> to vector<8x1xi32>
    %cst_20 = arith.constant dense<0xFF800000> : vector<8xf32>
    %46 = vector.multi_reduction <maximumf>, %36, %cst_20 [1] : vector<8x16xf32> to vector<8xf32>
    %47 = vector.shape_cast %46 : vector<8xf32> to vector<8x1xf32>
    %48 = tpu.iota {dimensions = array<i32: 1>} : vector<8x16xi32>
    %49 = vector.broadcast %47 : vector<8x1xf32> to vector<8x16xf32>
    %50 = arith.cmpf oeq, %36, %49 : vector<8x16xf32>
    %c2147483647_i32_21 = arith.constant 2147483647 : i32
    %51 = vector.broadcast %c2147483647_i32_21 : i32 to vector<8x16xi32>
    %52 = arith.select %50, %48, %51 : vector<8x16xi1>, vector<8x16xi32>
    %cst_22 = arith.constant dense<2147483647> : vector<8xi32>
    %53 = vector.multi_reduction <minsi>, %52, %cst_22 [1] : vector<8x16xi32> to vector<8xi32>
    %54 = vector.shape_cast %53 : vector<8xi32> to vector<8x1xi32>
    %cst_23 = arith.constant dense<0xFF800000> : vector<8xf32>
    %55 = vector.multi_reduction <maximumf>, %27, %cst_23 [1] : vector<8x16xf32> to vector<8xf32>
    %56 = vector.shape_cast %55 : vector<8xf32> to vector<8x1xf32>
    %57 = vector.broadcast %56 : vector<8x1xf32> to vector<8x16xf32>
    %58 = arith.subf %27, %57 : vector<8x16xf32>
    %59 = math.exp %58 : vector<8x16xf32>
    %cst_24 = arith.constant dense<0.000000e+00> : vector<8xf32>
    %60 = vector.multi_reduction <add>, %59, %cst_24 [1] : vector<8x16xf32> to vector<8xf32>
    %61 = vector.shape_cast %60 : vector<8xf32> to vector<8x1xf32>
    %62 = vector.broadcast %61 : vector<8x1xf32> to vector<8x16xf32>
    %63 = arith.divf %59, %62 : vector<8x16xf32>
    %cst_25 = arith.constant dense<0xFF800000> : vector<8xf32>
    %64 = vector.multi_reduction <maximumf>, %36, %cst_25 [1] : vector<8x16xf32> to vector<8xf32>
    %65 = vector.shape_cast %64 : vector<8xf32> to vector<8x1xf32>
    %66 = vector.broadcast %65 : vector<8x1xf32> to vector<8x16xf32>
    %67 = arith.subf %36, %66 : vector<8x16xf32>
    %68 = math.exp %67 : vector<8x16xf32>
    %cst_26 = arith.constant dense<0.000000e+00> : vector<8xf32>
    %69 = vector.multi_reduction <add>, %68, %cst_26 [1] : vector<8x16xf32> to vector<8xf32>
    %70 = vector.shape_cast %69 : vector<8xf32> to vector<8x1xf32>
    %71 = vector.broadcast %70 : vector<8x1xf32> to vector<8x16xf32>
    %72 = arith.divf %68, %71 : vector<8x16xf32>
    %c0_27 = arith.constant 0 : index
    %c0_28 = arith.constant 0 : index
    %73 = vector.load %arg5[%c0_27, %c0_28] : memref<8x64xf32, #tpu.memory_space<vmem>>, vector<8x32xf32>
    tpu.vector_store %arg5[%c0_27, %c0_28], %18 {strides = array<i32>} : memref<8x64xf32, #tpu.memory_space<vmem>>, vector<8x32xf32>,
    %c0_29 = arith.constant 0 : index
    %c32 = arith.constant 32 : index
    %74 = vector.load %arg5[%c0_29, %c32] : memref<8x64xf32, #tpu.memory_space<vmem>>, vector<8x16xf32>
    tpu.vector_store %arg5[%c0_29, %c32], %63 {strides = array<i32>} : memref<8x64xf32, #tpu.memory_space<vmem>>, vector<8x16xf32>,
    %c0_30 = arith.constant 0 : index
    %c48 = arith.constant 48 : index
    %75 = vector.load %arg5[%c0_30, %c48] : memref<8x64xf32, #tpu.memory_space<vmem>>, vector<8x16xf32>
    tpu.vector_store %arg5[%c0_30, %c48], %72 {strides = array<i32>} : memref<8x64xf32, #tpu.memory_space<vmem>>, vector<8x16xf32>,
    %76 = tpu.iota {dimensions = array<i32: 1>} : vector<8x8xi32>
    %c0_i32 = arith.constant 0 : i32
    %77 = vector.broadcast %c0_i32 : i32 to vector<8x8xi32>
    %78 = arith.cmpi eq, %76, %77 : vector<8x8xi32>
    %c1_i32 = arith.constant 1 : i32
    %79 = vector.broadcast %c1_i32 : i32 to vector<8x8xi32>
    %80 = arith.cmpi eq, %76, %79 : vector<8x8xi32>
    %c2_i32 = arith.constant 2 : i32
    %81 = vector.broadcast %c2_i32 : i32 to vector<8x8xi32>
    %82 = arith.cmpi eq, %76, %81 : vector<8x8xi32>
    %c0_i32_31 = arith.constant 0 : i32
    %83 = vector.shape_cast %54 : vector<8x1xi32> to vector<8x1xi32>
    %84 = vector.broadcast %83 : vector<8x1xi32> to vector<8x8xi32>
    %85 = vector.broadcast %c0_i32_31 : i32 to vector<8x8xi32>
    %86 = arith.select %82, %84, %85 : vector<8x8xi1>, vector<8x8xi32>
    %87 = vector.shape_cast %45 : vector<8x1xi32> to vector<8x1xi32>
    %88 = vector.broadcast %87 : vector<8x1xi32> to vector<8x8xi32>
    %89 = arith.select %80, %88, %86 : vector<8x8xi1>, vector<8x8xi32>
    %90 = vector.shape_cast %12 : vector<8x1xi32> to vector<8x1xi32>
    %91 = vector.broadcast %90 : vector<8x1xi32> to vector<8x8xi32>
    %92 = arith.select %78, %91, %89 : vector<8x8xi1>, vector<8x8xi32>
    %c0_32 = arith.constant 0 : index
    %c0_33 = arith.constant 0 : index
    %93 = vector.load %arg6[%c0_32, %c0_33] : memref<8x8xi32, #tpu.memory_space<vmem>>, vector<8x8xi32>
    tpu.vector_store %arg6[%c0_32, %c0_33], %92 {strides = array<i32>} : memref<8x8xi32, #tpu.memory_space<vmem>>, vector<8x8xi32>,
    return
  }
  func.func @transform_0(%arg0: i32) -> (i32, i32) {
    %c0_i32 = arith.constant 0 : i32
    %c0_i32_0 = arith.constant 0 : i32
    return %arg0, %c0_i32 : i32, i32
  }
  func.func @transform_1(%arg0: i32) -> (i32, i32) {
    %c0_i32 = arith.constant 0 : i32
    %c0_i32_0 = arith.constant 0 : i32
    %c0_i32_1 = arith.constant 0 : i32
    return %c0_i32, %c0_i32_0 : i32, i32
  }
  func.func @transform_2(%arg0: i32) -> (i32, i32, i32) {
    %c0_i32 = arith.constant 0 : i32
    %c0_i32_0 = arith.constant 0 : i32
    %c0_i32_1 = arith.constant 0 : i32
    return %arg0, %c0_i32, %c0_i32_0 : i32, i32, i32
  }
  func.func @transform_3(%arg0: i32) -> (i32, i32, i32) {
    %c0_i32 = arith.constant 0 : i32
    %c0_i32_0 = arith.constant 0 : i32
    %c0_i32_1 = arith.constant 0 : i32
    return %arg0, %c0_i32, %c0_i32_0 : i32, i32, i32
  }
  func.func @transform_4(%arg0: i32) -> (i32, i32) {
    %c0_i32 = arith.constant 0 : i32
    %c0_i32_0 = arith.constant 0 : i32
    return %arg0, %c0_i32 : i32, i32
  }
  func.func @transform_5(%arg0: i32) -> (i32, i32) {
    %c0_i32 = arith.constant 0 : i32
    %c0_i32_0 = arith.constant 0 : i32
    return %arg0, %c0_i32 : i32, i32
  }
}

</mosaic_0001>

<llo_original>
// kernel: tpu_custom_call.1
$region0: #{tpu_custom_call.1}
  #allocation0 [shape = 'u32[]', space=smem, size = 0x4, offset = 0x4, fixed_abs, tag = 'smem constant byte address 0x4 - core index']
  #allocation1 [shape = 'u32[72,128]{1,0:T(1,128)}', space=vmem, size = 0x9000, scoped, tag = 'internal scratch']
  %s0 = inlined_call_operand.vmem [shape: f32[32,8], index: 0, kind: input, shape index: {}]
  %s1 = inlined_call_operand.vmem [shape: f32[8,32], index: 1, kind: input, shape index: {}]
  %s2 = inlined_call_operand.hbm [shape: f32[32,16,32], index: 2, kind: input, shape index: {}]
  %s3 = inlined_call_operand.hbm [shape: f32[32,16,32], index: 3, kind: input, shape index: {}]
  %s4 = inlined_call_operand.hbm [shape: f32[32,64], index: 4, kind: output, shape index: {0}]
  %s5 = inlined_call_operand.vmem [shape: s32[32,8], index: 5, kind: output, shape index: {1}]
  %6 = xla_tuple %s4, %s5
  %s7 = sld [smem:[#allocation0]]
  $region65: #{tpu_custom_call.1} parent=0
    _
  %s9 = ssub.s32 1, %s7
  %s10 = scalar_select 0, %s9, %s7
  $region1: #{tpu_custom_call.1} parent=0
    #allocation2 [shape = 'u8[131072]{0}', space=vmem, size = 0x20000, scoped, tag = 'input window, operand 2']
    #allocation3 [shape = 's32[2]{0}', space=sflag, size = 0x8, scoped, tag = 'scoped memory for tpu_custom_call.1']
    #allocation4 [shape = 's32[2]{0}', space=sflag, size = 0x8, scoped, tag = 'scoped memory for tpu_custom_call.1']
    #allocation5 [shape = 'u8[131072]{0}', space=vmem, size = 0x20000, scoped, tag = 'input window, operand 3']
    #allocation6 [shape = 's32[2]{0}', space=sflag, size = 0x8, scoped, tag = 'scoped memory for tpu_custom_call.1']
    #allocation7 [shape = 'u8[8192]{0}', space=vmem, size = 0x2000, scoped, tag = 'output window, operand 0']
    %11 = vsyncpa [#allocation3], 0
    %s12 = scalar_lea.sflag [#allocation3], 1
    %13 = vsyncpa %s12, 0
    %14 = vsyncpa [#allocation6], 0
    %s15 = scalar_lea.sflag [#allocation6], 1
    %16 = vsyncpa %s15, 0
    %17 = vsyncpa [#allocation4], 0
    %s18 = scalar_lea.sflag [#allocation4], 1
    %19 = vsyncpa %s18, 0
    loop: start=0, step=1, limit=6
    $region2: #{tpu_custom_call.1} parent=1 // loop_pre_header
      _
    $region3: #{tpu_custom_call.1} parent=1 // loop_header
      %s21 = sphi 0, %s25
      %p22 = scmp.ge.s32.totalorder %s21, 6
      %s31 = sphi 0, %s33
      %s34 = sphi 0, %s31
      %s35 = sphi 0, %s34
      %s51 = sphi 0, %s35
      %s55 = sphi 0, %s55
      %s57 = sphi 0, %s55
      %s58 = sphi 0, %s57
      %s72 = sphi 0, %s58
      %s78 = sphi 0, %s80
      %s81 = sphi 0, %s78
      %s82 = sphi 0, %s81
      %s98 = sphi 0, %s82
      %s104 = sphi 0, %s106
      %s107 = sphi 0, %s104
      %s108 = sphi 0, %s107
      %s124 = sphi 0, %s108
      %s130 = sphi 0, %s132
      %s133 = sphi 0, %s130
      %s134 = sphi 0, %s133
      %s150 = sphi 0, %s134
      %s156 = sphi 0, %s158
      %s159 = sphi 0, %s156
      %s160 = sphi 0, %s159
      %s176 = sphi 0, %s160
    $region4: #{tpu_custom_call.1} parent=1 // loop_header_branch
      %24 = sbr.rel (%p22) target = $region8
    $region5: #{tpu_custom_call.1} parent=1 // loop_body
      %s26 = ssub.s32 %s21, 1
      %s27 = ssub.s32 %s21, 2
      %s28 = sadd.s32 %s21, 1
      %s29 = ssub.s32 %s21, %s28
      %p30 = scmp.eq.s32.totalorder %s29, 0
      %s32 = sadd.s32 %s31, 1
      %s33 = scalar_select %p30, %s31, %s32
      %p36 = pneg %p30
      %p37 = scmp.eq.s32.totalorder %s21, 3
      %p38 = por %p36, %p37
      %p39 = scmp.ne.s32.totalorder %s31, %s34
      %p40 = scmp.eq.s32.totalorder %s21, 0
      %p41 = por %p39, %p40
      %p42 = scmp.ne.s32.totalorder %s31, %s34
      %p43 = scmp.eq.s32.totalorder %s26, 3
      %p44 = por %p42, %p43
      %p45 = scmp.ne.s32.totalorder %s34, %s35
      %p46 = scmp.eq.s32.totalorder %s26, 0
      %p47 = por %p45, %p46
      %p48 = scmp.ne.s32.totalorder %s34, %s35
      %p49 = scmp.eq.s32.totalorder %s27, 3
      %p50 = por %p48, %p49
      %p52 = scmp.ne.s32.totalorder %s35, %s51
      %p53 = scmp.eq.s32.totalorder %s27, 0
      %p54 = por %p52, %p53
      %s56 = sadd.s32 %s55, 1
      %p59 = scmp.eq.s32.totalorder %s21, 3
      %p60 = scmp.ne.s32.totalorder %s55, %s57
      %p61 = scmp.eq.s32.totalorder %s21, 0
      %p62 = por %p60, %p61
      %p63 = scmp.ne.s32.totalorder %s55, %s57
      %p64 = scmp.eq.s32.totalorder %s26, 3
      %p65 = por %p63, %p64
      %p66 = scmp.ne.s32.totalorder %s57, %s58
      %p67 = scmp.eq.s32.totalorder %s26, 0
      %p68 = por %p66, %p67
      %p69 = scmp.ne.s32.totalorder %s57, %s58
      %p70 = scmp.eq.s32.totalorder %s27, 3
      %p71 = por %p69, %p70
      %p73 = scmp.ne.s32.totalorder %s58, %s72
      %p74 = scmp.eq.s32.totalorder %s27, 0
      %p75 = por %p73, %p74
      %s76 = ssub.s32 %s21, %s28
      %p77 = scmp.eq.s32.totalorder %s76, 0
      %s79 = sadd.s32 %s78, 1
      %s80 = scalar_select %p77, %s78, %s79
      %p83 = pneg %p77
      %p84 = scmp.eq.s32.totalorder %s21, 3
      %p85 = por %p83, %p84
      %p86 = scmp.ne.s32.totalorder %s78, %s81
      %p87 = scmp.eq.s32.totalorder %s21, 0
      %p88 = por %p86, %p87
      %p89 = scmp.ne.s32.totalorder %s78, %s81
      %p90 = scmp.eq.s32.totalorder %s26, 3
      %p91 = por %p89, %p90
      %p92 = scmp.ne.s32.totalorder %s81, %s82
      %p93 = scmp.eq.s32.totalorder %s26, 0
      %p94 = por %p92, %p93
      %p95 = scmp.ne.s32.totalorder %s81, %s82
      %p96 = scmp.eq.s32.totalorder %s27, 3
      %p97 = por %p95, %p96
      %p99 = scmp.ne.s32.totalorder %s82, %s98
      %p100 = scmp.eq.s32.totalorder %s27, 0
      %p101 = por %p99, %p100
      %s102 = ssub.s32 %s21, %s28
      %p103 = scmp.eq.s32.totalorder %s102, 0
      %s105 = sadd.s32 %s104, 1
      %s106 = scalar_select %p103, %s104, %s105
      %p109 = pneg %p103
      %p110 = scmp.eq.s32.totalorder %s21, 3
      %p111 = por %p109, %p110
      %p112 = scmp.ne.s32.totalorder %s104, %s107
      %p113 = scmp.eq.s32.totalorder %s21, 0
      %p114 = por %p112, %p113
      %p115 = scmp.ne.s32.totalorder %s104, %s107
      %p116 = scmp.eq.s32.totalorder %s26, 3
      %p117 = por %p115, %p116
      %p118 = scmp.ne.s32.totalorder %s107, %s108
      %p119 = scmp.eq.s32.totalorder %s26, 0
      %p120 = por %p118, %p119
      %p121 = scmp.ne.s32.totalorder %s107, %s108
      %p122 = scmp.eq.s32.totalorder %s27, 3
      %p123 = por %p121, %p122
      %p125 = scmp.ne.s32.totalorder %s108, %s124
      %p126 = scmp.eq.s32.totalorder %s27, 0
      %p127 = por %p125, %p126
      %s128 = ssub.s32 %s21, %s28
      %p129 = scmp.eq.s32.totalorder %s128, 0
      %s131 = sadd.s32 %s130, 1
      %s132 = scalar_select %p129, %s130, %s131
      %p135 = pneg %p129
      %p136 = scmp.eq.s32.totalorder %s21, 3
      %p137 = por %p135, %p136
      %p138 = scmp.ne.s32.totalorder %s130, %s133
      %p139 = scmp.eq.s32.totalorder %s21, 0
      %p140 = por %p138, %p139
      %p141 = scmp.ne.s32.totalorder %s130, %s133
      %p142 = scmp.eq.s32.totalorder %s26, 3
      %p143 = por %p141, %p142
      %p144 = scmp.ne.s32.totalorder %s133, %s134
      %p145 = scmp.eq.s32.totalorder %s26, 0
      %p146 = por %p144, %p145
      %p147 = scmp.ne.s32.totalorder %s133, %s134
      %p148 = scmp.eq.s32.totalorder %s27, 3
      %p149 = por %p147, %p148
      %p151 = scmp.ne.s32.totalorder %s134, %s150
      %p152 = scmp.eq.s32.totalorder %s27, 0
      %p153 = por %p151, %p152
      %s154 = ssub.s32 %s21, %s28
      %p155 = scmp.eq.s32.totalorder %s154, 0
      %s157 = sadd.s32 %s156, 1
      %s158 = scalar_select %p155, %s156, %s157
      %p161 = pneg %p155
      %p162 = scmp.eq.s32.totalorder %s21, 3
      %p163 = por %p161, %p162
      %p164 = scmp.ne.s32.totalorder %s156, %s159
      %p165 = scmp.eq.s32.totalorder %s21, 0
      %p166 = por %p164, %p165
      %p167 = scmp.ne.s32.totalorder %s156, %s159
      %p168 = scmp.eq.s32.totalorder %s26, 3
      %p169 = por %p167, %p168
      %p170 = scmp.ne.s32.totalorder %s159, %s160
      %p171 = scmp.eq.s32.totalorder %s26, 0
      %p172 = por %p170, %p171
      %p173 = scmp.ne.s32.totalorder %s159, %s160
      %p174 = scmp.eq.s32.totalorder %s27, 3
      %p175 = por %p173, %p174
      %p177 = scmp.ne.s32.totalorder %s160, %s176
      %p178 = scmp.eq.s32.totalorder %s27, 0
      %p179 = por %p177, %p178
      %p180 = scmp.le.s32.totalorder 1, %s21
      %p181 = scmp.lt.s32.totalorder %s21, 5
      %p182 = pnand %p180, %p181
      %p183 = pneg %p182
      // Predicated region
      $region9: #{tpu_custom_call.1} parent=5 // pred_check
        _
      $region10: #{tpu_custom_call.1} parent=5 // pred_check_branch
        %185 = sbr.rel (%p182) target = $region12
      $region11: #{tpu_custom_call.1} parent=5 // pred_region
        %s186 = ssub.s32 %s21, 1
        // Predicated region
        $region13: #{tpu_custom_call.1} parent=11 // pred_check
          %p187 = pneg %p68
        $region14: #{tpu_custom_call.1} parent=11 // pred_check_branch
          %189 = sbr.rel (%p187) target = $region16
        $region15: #{tpu_custom_call.1} parent=11 // pred_region
          _
        $region16: #{tpu_custom_call.1} parent=11 // pred_fallthru
          _
      $region12: #{tpu_custom_call.1} parent=5 // pred_fallthru
        _
      %p190 = scmp.lt.s32.totalorder %s21, 4
      // Predicated region
      $region17: #{tpu_custom_call.1} parent=5 // pred_check
        %p191 = pneg %p190
      $region18: #{tpu_custom_call.1} parent=5 // pred_check_branch
        %193 = sbr.rel (%p191) target = $region20
      $region19: #{tpu_custom_call.1} parent=5 // pred_region
        // Predicated region
        $region21: #{tpu_custom_call.1} parent=19 // pred_check
          %p194 = pneg %p41
        $region22: #{tpu_custom_call.1} parent=19 // pred_check_branch
          %196 = sbr.rel (%p194) target = $region24
        $region23: #{tpu_custom_call.1} parent=19 // pred_region
          %p197 = scmp.lt.s32.totalorder %s21, 3
          %s198 = scalar_select %p197, %s21, 3
          %s199 = smul.addr %s198, 8
          %s200 = scalar_lea.vmem %s0, %s199
        $region24: #{tpu_custom_call.1} parent=19 // pred_fallthru
          _
        // Predicated region
        $region25: #{tpu_custom_call.1} parent=19 // pred_check
          %p201 = pneg %p88
        $region26: #{tpu_custom_call.1} parent=19 // pred_check_branch
          %203 = sbr.rel (%p201) target = $region28
        $region27: #{tpu_custom_call.1} parent=19 // pred_region
          %s204 = sand.u32 %s78, 1
          %s205 = scalar_lea.sflag [#allocation3], %s204
          %s206 = sand.u32 %s78, 1
          %s207 = smul.addr %s206, 128
          %s208 = scalar_lea.vmem [#allocation2], %s207
          %s209 = smul.u32 8, %s21
          %211 = vsyncadd %s205, 0
          %s212 = smul.addr %s209, 2
          %s213 = smul.addr %s212, 8
          %s214 = scalar_lea.hbm %s2, %s213
          %s215 = sshll.u32 %s214, 4
          %s216 = int_to_ptr.hbm [resolvable:$true] %s215
          %s217 = sshll.u32 %s208, 4
          %s218 = int_to_ptr.vmem [resolvable:$true] %s217
          %223 = dma.hbm_to_vmem [thread:$0]  %s216, 2048, %s218, %s205, 128, 128, 8
        $region28: #{tpu_custom_call.1} parent=19 // pred_fallthru
          _
        // Predicated region
        $region29: #{tpu_custom_call.1} parent=19 // pred_check
          %p224 = pneg %p114
        $region30: #{tpu_custom_call.1} parent=19 // pred_check_branch
          %226 = sbr.rel (%p224) target = $region32
        $region31: #{tpu_custom_call.1} parent=19 // pred_region
          %s227 = sand.u32 %s104, 1
          %s228 = scalar_lea.sflag [#allocation6], %s227
          %s229 = sand.u32 %s104, 1
          %s230 = smul.addr %s229, 128
          %s231 = scalar_lea.vmem [#allocation5], %s230
          %s232 = smul.u32 8, %s21
          %234 = vsyncadd %s228, 0
          %s235 = smul.addr %s232, 2
          %s236 = smul.addr %s235, 8
          %s237 = scalar_lea.hbm %s3, %s236
          %s238 = sshll.u32 %s237, 4
          %s239 = int_to_ptr.hbm [resolvable:$true] %s238
          %s240 = sshll.u32 %s231, 4
          %s241 = int_to_ptr.vmem [resolvable:$true] %s240
          %246 = dma.hbm_to_vmem [thread:$0]  %s239, 2048, %s241, %s228, 128, 128, 8
        $region32: #{tpu_custom_call.1} parent=19 // pred_fallthru
          _
      $region20: #{tpu_custom_call.1} parent=5 // pred_fallthru
        _
      %p247 = scmp.le.s32.totalorder 1, %s21
      %p248 = scmp.lt.s32.totalorder %s21, 5
      %p249 = pnand %p247, %p248
      %p250 = pneg %p249
      // Predicated region
      $region33: #{tpu_custom_call.1} parent=5 // pred_check
        _
      $region34: #{tpu_custom_call.1} parent=5 // pred_check_branch
        %252 = sbr.rel (%p249) target = $region36
      $region35: #{tpu_custom_call.1} parent=5 // pred_region
        %s253 = ssub.s32 %s21, 1
        %s254 = sand.u32 %s81, 1
        %s255 = scalar_lea.sflag [#allocation3], %s254
        %s256 = sand.u32 %s81, 1
        %s257 = smul.addr %s256, 128
        %s258 = scalar_lea.vmem [#allocation2], %s257
        // Predicated region
        $region37: #{tpu_custom_call.1} parent=35 // pred_check
          %p259 = pneg %p94
        $region38: #{tpu_custom_call.1} parent=35 // pred_check_branch
          %261 = sbr.rel (%p259) target = $region40
        $region39: #{tpu_custom_call.1} parent=35 // pred_region
          %263 = dma.done %s255, 2048
        $region40: #{tpu_custom_call.1} parent=35 // pred_fallthru
          _
        %s264 = sand.u32 %s107, 1
        %s265 = scalar_lea.sflag [#allocation6], %s264
        %s266 = sand.u32 %s107, 1
        %s267 = smul.addr %s266, 128
        %s268 = scalar_lea.vmem [#allocation5], %s267
        // Predicated region
        $region41: #{tpu_custom_call.1} parent=35 // pred_check
          %p269 = pneg %p120
        $region42: #{tpu_custom_call.1} parent=35 // pred_check_branch
          %271 = sbr.rel (%p269) target = $region44
        $region43: #{tpu_custom_call.1} parent=35 // pred_region
          %273 = dma.done %s265, 2048
        $region44: #{tpu_custom_call.1} parent=35 // pred_fallthru
          _
        %p274 = scmp.lt.s32.totalorder %s26, 3
        %s275 = scalar_select %p274, %s26, 3
        %s276 = smul.addr %s275, 8
        %s277 = scalar_lea.vmem %s0, %s276
        %p278 = pneg %p47
        %p279 = pneg %p44
        %p280 = pneg %p68
        %p281 = pneg %p65
        %s282 = sand.u32 %s81, 1
        %s283 = scalar_lea.sflag [#allocation3], %s282
        %s284 = sand.u32 %s81, 1
        %s285 = smul.addr %s284, 128
        %s286 = scalar_lea.vmem [#allocation2], %s285
        %p287 = pneg %p94
        %p288 = pneg %p91
        %s289 = sand.u32 %s107, 1
        %s290 = scalar_lea.sflag [#allocation6], %s289
        %s291 = sand.u32 %s107, 1
        %s292 = smul.addr %s291, 128
        %s293 = scalar_lea.vmem [#allocation5], %s292
        %p294 = pneg %p120
        %p295 = pneg %p117
        %p296 = pneg %p146
        %p297 = pneg %p143
        %s298 = sand.u32 %s133, 1
        %s299 = scalar_lea.sflag [#allocation4], %s298
        %s300 = sand.u32 %s133, 1
        %s301 = smul.addr %s300, 8
        %s302 = scalar_lea.vmem [#allocation7], %s301
        %p303 = pneg %p172
        %p304 = pneg %p169
        %p305 = scmp.lt.s32.totalorder %s26, 3
        %s306 = scalar_select %p305, %s26, 3
        %s307 = smul.addr %s306, 8
        %s308 = scalar_lea.vmem %s5, %s307
        %p309 = scmp.lt.s32.totalorder %s26, 3
        %s310 = scalar_select %p309, %s26, 3
        %s311 = smul.addr %s310, 8
        %s312 = scalar_lea.vmem %s0, %s311
        %s313 = smul.u32 8, %s26
        %s314 = smul.u32 8, %s26
        %p315 = scmp.lt.s32.totalorder %s26, 3
        %s316 = scalar_select %p315, %s26, 3
        %s317 = smul.addr %s316, 8
        %s318 = scalar_lea.vmem %s5, %s317
        %v319 = vld [vmem:[%s312] sm:$0xff]
        %v320 = vld [vmem:[%s1] sm:$0xff]
        %v321 = vld [vmem:[%s258] sm:$0xff]
        %v322 = vld [vmem:[%s258 + $0x8] sm:$0xff]
        %v323 = vld [vmem:[%s258 + $0x10] sm:$0xff]
        %v324 = vld [vmem:[%s258 + $0x18] sm:$0xff]
        %v325 = vld [vmem:[%s258 + $0x20] sm:$0xff]
        %v326 = vld [vmem:[%s258 + $0x28] sm:$0xff]
        %v327 = vld [vmem:[%s258 + $0x30] sm:$0xff]
        %v328 = vld [vmem:[%s258 + $0x38] sm:$0xff]
        %v329 = vld [vmem:[%s258 + $0x40] sm:$0xff]
        %v330 = vld [vmem:[%s258 + $0x48] sm:$0xff]
        %v331 = vld [vmem:[%s258 + $0x50] sm:$0xff]
        %v332 = vld [vmem:[%s258 + $0x58] sm:$0xff]
        %v333 = vld [vmem:[%s258 + $0x60] sm:$0xff]
        %v334 = vld [vmem:[%s258 + $0x68] sm:$0xff]
        %v335 = vld [vmem:[%s258 + $0x70] sm:$0xff]
        %v336 = vld [vmem:[%s258 + $0x78] sm:$0xff]
        %v337 = vld [vmem:[%s268] sm:$0xff]
        %v338 = vld [vmem:[%s268 + $0x8] sm:$0xff]
        %v339 = vld [vmem:[%s268 + $0x10] sm:$0xff]
        %v340 = vld [vmem:[%s268 + $0x18] sm:$0xff]
        %v341 = vld [vmem:[%s268 + $0x20] sm:$0xff]
        %v342 = vld [vmem:[%s268 + $0x28] sm:$0xff]
        %v343 = vld [vmem:[%s268 + $0x30] sm:$0xff]
        %v344 = vld [vmem:[%s268 + $0x38] sm:$0xff]
        %v345 = vld [vmem:[%s268 + $0x40] sm:$0xff]
        %v346 = vld [vmem:[%s268 + $0x48] sm:$0xff]
        %v347 = vld [vmem:[%s268 + $0x50] sm:$0xff]
        %v348 = vld [vmem:[%s268 + $0x58] sm:$0xff]
        %v349 = vld [vmem:[%s268 + $0x60] sm:$0xff]
        %v350 = vld [vmem:[%s268 + $0x68] sm:$0xff]
        %v351 = vld [vmem:[%s268 + $0x70] sm:$0xff]
        %v352 = vld [vmem:[%s268 + $0x78] sm:$0xff]
        %vm353 = vcmask 64512
        %v354 = vsel %vm353, %v319, -inf
        %355 = vmax.xlane.f32.xlu0 %v354
        %v356 = vpop.xlane.xlu0 %355
        %v357 = vlaneseq
        %v358 = vand.u32 %v357, 127
        %vm359 = vcmp.eq.f32.partialorder %v319, %v356
        %v360 = vsel %vm359, %v358, 2147483647
        %v361 = vsel %vm353, %v360, 2147483647
        %v362 = vand.u32 %v361, 65535
        %v363 = vshra.s32 %v361, 16
        %v364 = vcvt.s32.f32 %v362
        %v365 = vcvt.s32.f32 %v363
        %366 = vmin.xlane.f32.xlu0 %v365
        %v367 = vpop.xlane.xlu0 %366
        %vm368 = vcmp.eq.f32.partialorder %v365, %v367
        %v369 = vsel %vm368, %v364, inf
        %370 = vmin.xlane.f32.xlu0 %v369
        %v371 = vpop.xlane.xlu0 %370
        %v372 = vcvt.f32.s32 %v371
        %v373 = vcvt.f32.s32 %v367
        %v374 = vshll.u32 %v373, 16
        %v375 = vadd.s32 %v374, %v372
        %vm376 = vcmp.eq.s32.totalorder %v358, %v375
        %v377 = vsel %vm376, 1, 0
        %v378 = vcvt.s32.f32 %v377
        %v380 = vsel %vm353, %v378, 0
        %382 = vmatpush.msra.mxu0 0.0
        %383 = vmatpush.msra.mxu0 0.0
        %384 = vmatpush.msra.mxu0 0.0
        %385 = vmatpush.msra.mxu0 0.0
        %386 = vmatpush.msra.mxu0 0.0
        %387 = vmatpush.msra.mxu0 0.0
        %388 = vmatpush.msra.mxu0 0.0
        %389 = vmatpush.msra.mxu0 0.0
        %390 = vmatpush.msra.mxu0 0.0
        %391 = vmatpush.msra.mxu0 0.0
        %392 = vmatpush.msra.mxu0 0.0
        %393 = vmatpush.msra.mxu0 0.0
        %394 = vmatpush.msra.mxu0 0.0
        %395 = vmatpush.msra.mxu0 0.0
        %396 = vmatpush.msra.mxu0 0.0
        %v397 = vand.u32 %v320, 4294901760
        %398 = vmatpush.msra.mxu0 %v397
        %v399 = vand.u32 %v380, 4294901760
        %v400 = vsub.f32 %v380, %v399
        %v401 = vand.u32 %v400, 4294901760
        %v402 = vsub.f32 %v400, %v401
        %v403 = vand.u32 %v402, 4294901760
        %404 = vmatmul.f32.gmra.mxu0 %v403
        %v405 = vpop.f32.mrf.mxu0
        %v406 = vadd.f32 0.0, %v405
        %407 = vdwg.mxu0
        %408 = vmatpush.msra.mxu0 0.0
        %409 = vmatpush.msra.mxu0 0.0
        %410 = vmatpush.msra.mxu0 0.0
        %411 = vmatpush.msra.mxu0 0.0
        %412 = vmatpush.msra.mxu0 0.0
        %413 = vmatpush.msra.mxu0 0.0
        %414 = vmatpush.msra.mxu0 0.0
        %415 = vmatpush.msra.mxu0 0.0
        %416 = vmatpush.msra.mxu0 0.0
        %417 = vmatpush.msra.mxu0 0.0
        %418 = vmatpush.msra.mxu0 0.0
        %419 = vmatpush.msra.mxu0 0.0
        %420 = vmatpush.msra.mxu0 0.0
        %421 = vmatpush.msra.mxu0 0.0
        %422 = vmatpush.msra.mxu0 0.0
        %v423 = vand.u32 %v320, 4294901760
        %v424 = vsub.f32 %v320, %v423
        %v425 = vand.u32 %v424, 4294901760
        %v426 = vsub.f32 %v424, %v425
        %v427 = vand.u32 %v426, 4294901760
        %428 = vmatpush.msra.mxu0 %v427
        %v429 = vand.u32 %v380, 4294901760
        %430 = vmatmul.f32.gmra.mxu0 %v429
        %v431 = vpop.f32.mrf.mxu0
        %v432 = vadd.f32 %v406, %v431
        %433 = vdwg.mxu0
        %434 = vmatpush.msra.mxu0 0.0
        %435 = vmatpush.msra.mxu0 0.0
        %436 = vmatpush.msra.mxu0 0.0
        %437 = vmatpush.msra.mxu0 0.0
        %438 = vmatpush.msra.mxu0 0.0
        %439 = vmatpush.msra.mxu0 0.0
        %440 = vmatpush.msra.mxu0 0.0
        %441 = vmatpush.msra.mxu0 0.0
        %442 = vmatpush.msra.mxu0 0.0
        %443 = vmatpush.msra.mxu0 0.0
        %444 = vmatpush.msra.mxu0 0.0
        %445 = vmatpush.msra.mxu0 0.0
        %446 = vmatpush.msra.mxu0 0.0
        %447 = vmatpush.msra.mxu0 0.0
        %448 = vmatpush.msra.mxu0 0.0
        %v449 = vand.u32 %v320, 4294901760
        %v450 = vsub.f32 %v320, %v449
        %451 = vmatpush.msra.mxu0 %v450
        %v452 = vand.u32 %v380, 4294901760
        %v453 = vsub.f32 %v380, %v452
        %454 = vmatmul.f32.gmra.mxu0 %v453
        %v455 = vpop.f32.mrf.mxu0
        %v456 = vadd.f32 %v432, %v455
        %457 = vdwg.mxu0
        %458 = vmatpush.msra.mxu0 0.0
        %459 = vmatpush.msra.mxu0 0.0
        %460 = vmatpush.msra.mxu0 0.0
        %461 = vmatpush.msra.mxu0 0.0
        %462 = vmatpush.msra.mxu0 0.0
        %463 = vmatpush.msra.mxu0 0.0
        %464 = vmatpush.msra.mxu0 0.0
        %465 = vmatpush.msra.mxu0 0.0
        %466 = vmatpush.msra.mxu0 0.0
        %467 = vmatpush.msra.mxu0 0.0
        %468 = vmatpush.msra.mxu0 0.0
        %469 = vmatpush.msra.mxu0 0.0
        %470 = vmatpush.msra.mxu0 0.0
        %471 = vmatpush.msra.mxu0 0.0
        %472 = vmatpush.msra.mxu0 0.0
        %v473 = vand.u32 %v320, 4294901760
        %474 = vmatpush.msra.mxu0 %v473
        %v475 = vand.u32 %v380, 4294901760
        %v476 = vsub.f32 %v380, %v475
        %v477 = vand.u32 %v476, 4294901760
        %478 = vmatmul.f32.gmra.mxu0 %v477
        %v479 = vpop.f32.mrf.mxu0
        %v480 = vadd.f32 %v456, %v479
        %481 = vdwg.mxu0
        %482 = vmatpush.msra.mxu0 0.0
        %483 = vmatpush.msra.mxu0 0.0
        %484 = vmatpush.msra.mxu0 0.0
        %485 = vmatpush.msra.mxu0 0.0
        %486 = vmatpush.msra.mxu0 0.0
        %487 = vmatpush.msra.mxu0 0.0
        %488 = vmatpush.msra.mxu0 0.0
        %489 = vmatpush.msra.mxu0 0.0
        %490 = vmatpush.msra.mxu0 0.0
        %491 = vmatpush.msra.mxu0 0.0
        %492 = vmatpush.msra.mxu0 0.0
        %493 = vmatpush.msra.mxu0 0.0
        %494 = vmatpush.msra.mxu0 0.0
        %495 = vmatpush.msra.mxu0 0.0
        %496 = vmatpush.msra.mxu0 0.0
        %v497 = vand.u32 %v320, 4294901760
        %v498 = vsub.f32 %v320, %v497
        %v499 = vand.u32 %v498, 4294901760
        %500 = vmatpush.msra.mxu0 %v499
        %v501 = vand.u32 %v380, 4294901760
        %502 = vmatmul.f32.gmra.mxu0 %v501
        %v503 = vpop.f32.mrf.mxu0
        %v504 = vadd.f32 %v480, %v503
        %505 = vdwg.mxu0
        %506 = vmatpush.msra.mxu0 0.0
        %507 = vmatpush.msra.mxu0 0.0
        %508 = vmatpush.msra.mxu0 0.0
        %509 = vmatpush.msra.mxu0 0.0
        %510 = vmatpush.msra.mxu0 0.0
        %511 = vmatpush.msra.mxu0 0.0
        %512 = vmatpush.msra.mxu0 0.0
        %513 = vmatpush.msra.mxu0 0.0
        %514 = vmatpush.msra.mxu0 0.0
        %515 = vmatpush.msra.mxu0 0.0
        %516 = vmatpush.msra.mxu0 0.0
        %517 = vmatpush.msra.mxu0 0.0
        %518 = vmatpush.msra.mxu0 0.0
        %519 = vmatpush.msra.mxu0 0.0
        %520 = vmatpush.msra.mxu0 0.0
        %v521 = vand.u32 %v320, 4294901760
        %522 = vmatpush.msra.mxu0 %v521
        %v523 = vand.u32 %v380, 4294901760
        %524 = vmatmul.f32.gmra.mxu0 %v523
        %v525 = vpop.f32.mrf.mxu0
        %v526 = vadd.f32 %v504, %v525
        %527 = vdwg.mxu0
        %vm528 = vcmask 261120
        %v530 = vsel %vm528, %v321, 0
        %v533 = vsel %vm528, %v322, 0
        %v536 = vsel %vm528, %v323, 0
        %v539 = vsel %vm528, %v324, 0
        %v542 = vsel %vm528, %v325, 0
        %v545 = vsel %vm528, %v326, 0
        %v548 = vsel %vm528, %v327, 0
        %v551 = vsel %vm528, %v328, 0
        %v554 = vsel %vm528, %v329, 0
        %v557 = vsel %vm528, %v330, 0
        %v560 = vsel %vm528, %v331, 0
        %v563 = vsel %vm528, %v332, 0
        %v566 = vsel %vm528, %v333, 0
        %v569 = vsel %vm528, %v334, 0
        %v572 = vsel %vm528, %v335, 0
        %v575 = vsel %vm528, %v336, 0
        %v578 = vsel %vm528, %v320, 0
        %580 = vmatpush.xpose.msra.mxu0 0.0
        %581 = vmatpush.xpose.msra.mxu0 0.0
        %582 = vmatpush.xpose.msra.mxu0 0.0
        %583 = vmatpush.xpose.msra.mxu0 0.0
        %584 = vmatpush.xpose.msra.mxu0 0.0
        %585 = vmatpush.xpose.msra.mxu0 0.0
        %586 = vmatpush.xpose.msra.mxu0 0.0
        %587 = vmatpush.xpose.msra.mxu0 0.0
        %588 = vmatpush.xpose.msra.mxu0 0.0
        %589 = vmatpush.xpose.msra.mxu0 0.0
        %590 = vmatpush.xpose.msra.mxu0 0.0
        %591 = vmatpush.xpose.msra.mxu0 0.0
        %592 = vmatpush.xpose.msra.mxu0 0.0
        %593 = vmatpush.xpose.msra.mxu0 0.0
        %594 = vmatpush.xpose.msra.mxu0 0.0
        %v595 = vand.u32 %v578, 4294901760
        %596 = vmatpush.xpose.msra.mxu0 %v595
        %v597 = vand.u32 %v530, 4294901760
        %v598 = vsub.f32 %v530, %v597
        %v599 = vand.u32 %v598, 4294901760
        %v600 = vsub.f32 %v598, %v599
        %v601 = vand.u32 %v600, 4294901760
        %602 = vmatmul.f32.gmra.mxu0 %v601
        %v603 = vpop.f32.mrf.mxu0
        %v604 = vadd.f32 0.0, %v603
        %v605 = vand.u32 %v533, 4294901760
        %v606 = vsub.f32 %v533, %v605
        %v607 = vand.u32 %v606, 4294901760
        %v608 = vsub.f32 %v606, %v607
        %v609 = vand.u32 %v608, 4294901760
        %610 = vmatmul.f32.gmra.mxu0 %v609
        %v611 = vpop.f32.mrf.mxu0
        %v612 = vadd.f32 0.0, %v611
        %v613 = vand.u32 %v536, 4294901760
        %v614 = vsub.f32 %v536, %v613
        %v615 = vand.u32 %v614, 4294901760
        %v616 = vsub.f32 %v614, %v615
        %v617 = vand.u32 %v616, 4294901760
        %618 = vmatmul.f32.gmra.mxu0 %v617
        %v619 = vpop.f32.mrf.mxu0
        %v620 = vadd.f32 0.0, %v619
        %v621 = vand.u32 %v539, 4294901760
        %v622 = vsub.f32 %v539, %v621
        %v623 = vand.u32 %v622, 4294901760
        %v624 = vsub.f32 %v622, %v623
        %v625 = vand.u32 %v624, 4294901760
        %626 = vmatmul.f32.gmra.mxu0 %v625
        %v627 = vpop.f32.mrf.mxu0
        %v628 = vadd.f32 0.0, %v627
        %v629 = vand.u32 %v542, 4294901760
        %v630 = vsub.f32 %v542, %v629
        %v631 = vand.u32 %v630, 4294901760
        %v632 = vsub.f32 %v630, %v631
        %v633 = vand.u32 %v632, 4294901760
        %634 = vmatmul.f32.gmra.mxu0 %v633
        %v635 = vpop.f32.mrf.mxu0
        %v636 = vadd.f32 0.0, %v635
        %v637 = vand.u32 %v545, 4294901760
        %v638 = vsub.f32 %v545, %v637
        %v639 = vand.u32 %v638, 4294901760
        %v640 = vsub.f32 %v638, %v639
        %v641 = vand.u32 %v640, 4294901760
        %642 = vmatmul.f32.gmra.mxu0 %v641
        %v643 = vpop.f32.mrf.mxu0
        %v644 = vadd.f32 0.0, %v643
        %v645 = vand.u32 %v548, 4294901760
        %v646 = vsub.f32 %v548, %v645
        %v647 = vand.u32 %v646, 4294901760
        %v648 = vsub.f32 %v646, %v647
        %v649 = vand.u32 %v648, 4294901760
        %650 = vmatmul.f32.gmra.mxu0 %v649
        %v651 = vpop.f32.mrf.mxu0
        %v652 = vadd.f32 0.0, %v651
        %v653 = vand.u32 %v551, 4294901760
        %v654 = vsub.f32 %v551, %v653
        %v655 = vand.u32 %v654, 4294901760
        %v656 = vsub.f32 %v654, %v655
        %v657 = vand.u32 %v656, 4294901760
        %658 = vmatmul.f32.gmra.mxu0 %v657
        %v659 = vpop.f32.mrf.mxu0
        %v660 = vadd.f32 0.0, %v659
        %v661 = vand.u32 %v554, 4294901760
        %v662 = vsub.f32 %v554, %v661
        %v663 = vand.u32 %v662, 4294901760
        %v664 = vsub.f32 %v662, %v663
        %v665 = vand.u32 %v664, 4294901760
        %666 = vmatmul.f32.gmra.mxu0 %v665
        %v667 = vpop.f32.mrf.mxu0
        %v668 = vadd.f32 0.0, %v667
        %v669 = vand.u32 %v557, 4294901760
        %v670 = vsub.f32 %v557, %v669
        %v671 = vand.u32 %v670, 4294901760
        %v672 = vsub.f32 %v670, %v671
        %v673 = vand.u32 %v672, 4294901760
        %674 = vmatmul.f32.gmra.mxu0 %v673
        %v675 = vpop.f32.mrf.mxu0
        %v676 = vadd.f32 0.0, %v675
        %v677 = vand.u32 %v560, 4294901760
        %v678 = vsub.f32 %v560, %v677
        %v679 = vand.u32 %v678, 4294901760
        %v680 = vsub.f32 %v678, %v679
        %v681 = vand.u32 %v680, 4294901760
        %682 = vmatmul.f32.gmra.mxu0 %v681
        %v683 = vpop.f32.mrf.mxu0
        %v684 = vadd.f32 0.0, %v683
        %v685 = vand.u32 %v563, 4294901760
        %v686 = vsub.f32 %v563, %v685
        %v687 = vand.u32 %v686, 4294901760
        %v688 = vsub.f32 %v686, %v687
        %v689 = vand.u32 %v688, 4294901760
        %690 = vmatmul.f32.gmra.mxu0 %v689
        %v691 = vpop.f32.mrf.mxu0
        %v692 = vadd.f32 0.0, %v691
        %v693 = vand.u32 %v566, 4294901760
        %v694 = vsub.f32 %v566, %v693
        %v695 = vand.u32 %v694, 4294901760
        %v696 = vsub.f32 %v694, %v695
        %v697 = vand.u32 %v696, 4294901760
        %698 = vmatmul.f32.gmra.mxu0 %v697
        %v699 = vpop.f32.mrf.mxu0
        %v700 = vadd.f32 0.0, %v699
        %v701 = vand.u32 %v569, 4294901760
        %v702 = vsub.f32 %v569, %v701
        %v703 = vand.u32 %v702, 4294901760
        %v704 = vsub.f32 %v702, %v703
        %v705 = vand.u32 %v704, 4294901760
        %706 = vmatmul.f32.gmra.mxu0 %v705
        %v707 = vpop.f32.mrf.mxu0
        %v708 = vadd.f32 0.0, %v707
        %v709 = vand.u32 %v572, 4294901760
        %v710 = vsub.f32 %v572, %v709
        %v711 = vand.u32 %v710, 4294901760
        %v712 = vsub.f32 %v710, %v711
        %v713 = vand.u32 %v712, 4294901760
        %714 = vmatmul.f32.gmra.mxu0 %v713
        %v715 = vpop.f32.mrf.mxu0
        %v716 = vadd.f32 0.0, %v715
        %v717 = vand.u32 %v575, 4294901760
        %v718 = vsub.f32 %v575, %v717
        %v719 = vand.u32 %v718, 4294901760
        %v720 = vsub.f32 %v718, %v719
        %v721 = vand.u32 %v720, 4294901760
        %722 = vmatmul.f32.gmra.mxu0 %v721
        %v723 = vpop.f32.mrf.mxu0
        %v724 = vadd.f32 0.0, %v723
        %725 = vdwg.mxu0
        %726 = vmatpush.xpose.msra.mxu0 0.0
        %727 = vmatpush.xpose.msra.mxu0 0.0
        %728 = vmatpush.xpose.msra.mxu0 0.0
        %729 = vmatpush.xpose.msra.mxu0 0.0
        %730 = vmatpush.xpose.msra.mxu0 0.0
        %731 = vmatpush.xpose.msra.mxu0 0.0
        %732 = vmatpush.xpose.msra.mxu0 0.0
        %733 = vmatpush.xpose.msra.mxu0 0.0
        %734 = vmatpush.xpose.msra.mxu0 0.0
        %735 = vmatpush.xpose.msra.mxu0 0.0
        %736 = vmatpush.xpose.msra.mxu0 0.0
        %737 = vmatpush.xpose.msra.mxu0 0.0
        %738 = vmatpush.xpose.msra.mxu0 0.0
        %739 = vmatpush.xpose.msra.mxu0 0.0
        %740 = vmatpush.xpose.msra.mxu0 0.0
        %v741 = vand.u32 %v578, 4294901760
        %v742 = vsub.f32 %v578, %v741
        %v743 = vand.u32 %v742, 4294901760
        %v744 = vsub.f32 %v742, %v743
        %v745 = vand.u32 %v744, 4294901760
        %746 = vmatpush.xpose.msra.mxu0 %v745
        %v747 = vand.u32 %v530, 4294901760
        %748 = vmatmul.f32.gmra.mxu0 %v747
        %v749 = vpop.f32.mrf.mxu0
        %v750 = vadd.f32 %v604, %v749
        %v751 = vand.u32 %v533, 4294901760
        %752 = vmatmul.f32.gmra.mxu0 %v751
        %v753 = vpop.f32.mrf.mxu0
        %v754 = vadd.f32 %v612, %v753
        %v755 = vand.u32 %v536, 4294901760
        %756 = vmatmul.f32.gmra.mxu0 %v755
        %v757 = vpop.f32.mrf.mxu0
        %v758 = vadd.f32 %v620, %v757
        %v759 = vand.u32 %v539, 4294901760
        %760 = vmatmul.f32.gmra.mxu0 %v759
        %v761 = vpop.f32.mrf.mxu0
        %v762 = vadd.f32 %v628, %v761
        %v763 = vand.u32 %v542, 4294901760
        %764 = vmatmul.f32.gmra.mxu0 %v763
        %v765 = vpop.f32.mrf.mxu0
        %v766 = vadd.f32 %v636, %v765
        %v767 = vand.u32 %v545, 4294901760
        %768 = vmatmul.f32.gmra.mxu0 %v767
        %v769 = vpop.f32.mrf.mxu0
        %v770 = vadd.f32 %v644, %v769
        %v771 = vand.u32 %v548, 4294901760
        %772 = vmatmul.f32.gmra.mxu0 %v771
        %v773 = vpop.f32.mrf.mxu0
        %v774 = vadd.f32 %v652, %v773
        %v775 = vand.u32 %v551, 4294901760
        %776 = vmatmul.f32.gmra.mxu0 %v775
        %v777 = vpop.f32.mrf.mxu0
        %v778 = vadd.f32 %v660, %v777
        %v779 = vand.u32 %v554, 4294901760
        %780 = vmatmul.f32.gmra.mxu0 %v779
        %v781 = vpop.f32.mrf.mxu0
        %v782 = vadd.f32 %v668, %v781
        %v783 = vand.u32 %v557, 4294901760
        %784 = vmatmul.f32.gmra.mxu0 %v783
        %v785 = vpop.f32.mrf.mxu0
        %v786 = vadd.f32 %v676, %v785
        %v787 = vand.u32 %v560, 4294901760
        %788 = vmatmul.f32.gmra.mxu0 %v787
        %v789 = vpop.f32.mrf.mxu0
        %v790 = vadd.f32 %v684, %v789
        %v791 = vand.u32 %v563, 4294901760
        %792 = vmatmul.f32.gmra.mxu0 %v791
        %v793 = vpop.f32.mrf.mxu0
        %v794 = vadd.f32 %v692, %v793
        %v795 = vand.u32 %v566, 4294901760
        %796 = vmatmul.f32.gmra.mxu0 %v795
        %v797 = vpop.f32.mrf.mxu0
        %v798 = vadd.f32 %v700, %v797
        %v799 = vand.u32 %v569, 4294901760
        %800 = vmatmul.f32.gmra.mxu0 %v799
        %v801 = vpop.f32.mrf.mxu0
        %v802 = vadd.f32 %v708, %v801
        %v803 = vand.u32 %v572, 4294901760
        %804 = vmatmul.f32.gmra.mxu0 %v803
        %v805 = vpop.f32.mrf.mxu0
        %v806 = vadd.f32 %v716, %v805
        %v807 = vand.u32 %v575, 4294901760
        %808 = vmatmul.f32.gmra.mxu0 %v807
        %v809 = vpop.f32.mrf.mxu0
        %v810 = vadd.f32 %v724, %v809
        %811 = vdwg.mxu0
        %812 = vmatpush.xpose.msra.mxu0 0.0
        %813 = vmatpush.xpose.msra.mxu0 0.0
        %814 = vmatpush.xpose.msra.mxu0 0.0
        %815 = vmatpush.xpose.msra.mxu0 0.0
        %816 = vmatpush.xpose.msra.mxu0 0.0
        %817 = vmatpush.xpose.msra.mxu0 0.0
        %818 = vmatpush.xpose.msra.mxu0 0.0
        %819 = vmatpush.xpose.msra.mxu0 0.0
        %820 = vmatpush.xpose.msra.mxu0 0.0
        %821 = vmatpush.xpose.msra.mxu0 0.0
        %822 = vmatpush.xpose.msra.mxu0 0.0
        %823 = vmatpush.xpose.msra.mxu0 0.0
        %824 = vmatpush.xpose.msra.mxu0 0.0
        %825 = vmatpush.xpose.msra.mxu0 0.0
        %826 = vmatpush.xpose.msra.mxu0 0.0
        %v827 = vand.u32 %v578, 4294901760
        %v828 = vsub.f32 %v578, %v827
        %829 = vmatpush.xpose.msra.mxu0 %v828
        %v830 = vand.u32 %v530, 4294901760
        %v831 = vsub.f32 %v530, %v830
        %832 = vmatmul.f32.gmra.mxu0 %v831
        %v833 = vpop.f32.mrf.mxu0
        %v834 = vadd.f32 %v750, %v833
        %v835 = vand.u32 %v533, 4294901760
        %v836 = vsub.f32 %v533, %v835
        %837 = vmatmul.f32.gmra.mxu0 %v836
        %v838 = vpop.f32.mrf.mxu0
        %v839 = vadd.f32 %v754, %v838
        %v840 = vand.u32 %v536, 4294901760
        %v841 = vsub.f32 %v536, %v840
        %842 = vmatmul.f32.gmra.mxu0 %v841
        %v843 = vpop.f32.mrf.mxu0
        %v844 = vadd.f32 %v758, %v843
        %v845 = vand.u32 %v539, 4294901760
        %v846 = vsub.f32 %v539, %v845
        %847 = vmatmul.f32.gmra.mxu0 %v846
        %v848 = vpop.f32.mrf.mxu0
        %v849 = vadd.f32 %v762, %v848
        %v850 = vand.u32 %v542, 4294901760
        %v851 = vsub.f32 %v542, %v850
        %852 = vmatmul.f32.gmra.mxu0 %v851
        %v853 = vpop.f32.mrf.mxu0
        %v854 = vadd.f32 %v766, %v853
        %v855 = vand.u32 %v545, 4294901760
        %v856 = vsub.f32 %v545, %v855
        %857 = vmatmul.f32.gmra.mxu0 %v856
        %v858 = vpop.f32.mrf.mxu0
        %v859 = vadd.f32 %v770, %v858
        %v860 = vand.u32 %v548, 4294901760
        %v861 = vsub.f32 %v548, %v860
        %862 = vmatmul.f32.gmra.mxu0 %v861
        %v863 = vpop.f32.mrf.mxu0
        %v864 = vadd.f32 %v774, %v863
        %v865 = vand.u32 %v551, 4294901760
        %v866 = vsub.f32 %v551, %v865
        %867 = vmatmul.f32.gmra.mxu0 %v866
        %v868 = vpop.f32.mrf.mxu0
        %v869 = vadd.f32 %v778, %v868
        %v870 = vand.u32 %v554, 4294901760
        %v871 = vsub.f32 %v554, %v870
        %872 = vmatmul.f32.gmra.mxu0 %v871
        %v873 = vpop.f32.mrf.mxu0
        %v874 = vadd.f32 %v782, %v873
        %v875 = vand.u32 %v557, 4294901760
        %v876 = vsub.f32 %v557, %v875
        %877 = vmatmul.f32.gmra.mxu0 %v876
        %v878 = vpop.f32.mrf.mxu0
        %v879 = vadd.f32 %v786, %v878
        %v880 = vand.u32 %v560, 4294901760
        %v881 = vsub.f32 %v560, %v880
        %882 = vmatmul.f32.gmra.mxu0 %v881
        %v883 = vpop.f32.mrf.mxu0
        %v884 = vadd.f32 %v790, %v883
        %v885 = vand.u32 %v563, 4294901760
        %v886 = vsub.f32 %v563, %v885
        %887 = vmatmul.f32.gmra.mxu0 %v886
        %v888 = vpop.f32.mrf.mxu0
        %v889 = vadd.f32 %v794, %v888
        %v890 = vand.u32 %v566, 4294901760
        %v891 = vsub.f32 %v566, %v890
        %892 = vmatmul.f32.gmra.mxu0 %v891
        %v893 = vpop.f32.mrf.mxu0
        %v894 = vadd.f32 %v798, %v893
        %v895 = vand.u32 %v569, 4294901760
        %v896 = vsub.f32 %v569, %v895
        %897 = vmatmul.f32.gmra.mxu0 %v896
        %v898 = vpop.f32.mrf.mxu0
        %v899 = vadd.f32 %v802, %v898
        %v900 = vand.u32 %v572, 4294901760
        %v901 = vsub.f32 %v572, %v900
        %902 = vmatmul.f32.gmra.mxu0 %v901
        %v903 = vpop.f32.mrf.mxu0
        %v904 = vadd.f32 %v806, %v903
        %v905 = vand.u32 %v575, 4294901760
        %v906 = vsub.f32 %v575, %v905
        %907 = vmatmul.f32.gmra.mxu0 %v906
        %v908 = vpop.f32.mrf.mxu0
        %v909 = vadd.f32 %v810, %v908
        %910 = vdwg.mxu0
        %911 = vmatpush.xpose.msra.mxu0 0.0
        %912 = vmatpush.xpose.msra.mxu0 0.0
        %913 = vmatpush.xpose.msra.mxu0 0.0
        %914 = vmatpush.xpose.msra.mxu0 0.0
        %915 = vmatpush.xpose.msra.mxu0 0.0
        %916 = vmatpush.xpose.msra.mxu0 0.0
        %917 = vmatpush.xpose.msra.mxu0 0.0
        %918 = vmatpush.xpose.msra.mxu0 0.0
        %919 = vmatpush.xpose.msra.mxu0 0.0
        %920 = vmatpush.xpose.msra.mxu0 0.0
        %921 = vmatpush.xpose.msra.mxu0 0.0
        %922 = vmatpush.xpose.msra.mxu0 0.0
        %923 = vmatpush.xpose.msra.mxu0 0.0
        %924 = vmatpush.xpose.msra.mxu0 0.0
        %925 = vmatpush.xpose.msra.mxu0 0.0
        %v926 = vand.u32 %v578, 4294901760
        %927 = vmatpush.xpose.msra.mxu0 %v926
        %v928 = vand.u32 %v530, 4294901760
        %v929 = vsub.f32 %v530, %v928
        %v930 = vand.u32 %v929, 4294901760
        %931 = vmatmul.f32.gmra.mxu0 %v930
        %v932 = vpop.f32.mrf.mxu0
        %v933 = vadd.f32 %v834, %v932
        %v934 = vand.u32 %v533, 4294901760
        %v935 = vsub.f32 %v533, %v934
        %v936 = vand.u32 %v935, 4294901760
        %937 = vmatmul.f32.gmra.mxu0 %v936
        %v938 = vpop.f32.mrf.mxu0
        %v939 = vadd.f32 %v839, %v938
        %v940 = vand.u32 %v536, 4294901760
        %v941 = vsub.f32 %v536, %v940
        %v942 = vand.u32 %v941, 4294901760
        %943 = vmatmul.f32.gmra.mxu0 %v942
        %v944 = vpop.f32.mrf.mxu0
        %v945 = vadd.f32 %v844, %v944
        %v946 = vand.u32 %v539, 4294901760
        %v947 = vsub.f32 %v539, %v946
        %v948 = vand.u32 %v947, 4294901760
        %949 = vmatmul.f32.gmra.mxu0 %v948
        %v950 = vpop.f32.mrf.mxu0
        %v951 = vadd.f32 %v849, %v950
        %v952 = vand.u32 %v542, 4294901760
        %v953 = vsub.f32 %v542, %v952
        %v954 = vand.u32 %v953, 4294901760
        %955 = vmatmul.f32.gmra.mxu0 %v954
        %v956 = vpop.f32.mrf.mxu0
        %v957 = vadd.f32 %v854, %v956
        %v958 = vand.u32 %v545, 4294901760
        %v959 = vsub.f32 %v545, %v958
        %v960 = vand.u32 %v959, 4294901760
        %961 = vmatmul.f32.gmra.mxu0 %v960
        %v962 = vpop.f32.mrf.mxu0
        %v963 = vadd.f32 %v859, %v962
        %v964 = vand.u32 %v548, 4294901760
        %v965 = vsub.f32 %v548, %v964
        %v966 = vand.u32 %v965, 4294901760
        %967 = vmatmul.f32.gmra.mxu0 %v966
        %v968 = vpop.f32.mrf.mxu0
        %v969 = vadd.f32 %v864, %v968
        %v970 = vand.u32 %v551, 4294901760
        %v971 = vsub.f32 %v551, %v970
        %v972 = vand.u32 %v971, 4294901760
        %973 = vmatmul.f32.gmra.mxu0 %v972
        %v974 = vpop.f32.mrf.mxu0
        %v975 = vadd.f32 %v869, %v974
        %v976 = vand.u32 %v554, 4294901760
        %v977 = vsub.f32 %v554, %v976
        %v978 = vand.u32 %v977, 4294901760
        %979 = vmatmul.f32.gmra.mxu0 %v978
        %v980 = vpop.f32.mrf.mxu0
        %v981 = vadd.f32 %v874, %v980
        %v982 = vand.u32 %v557, 4294901760
        %v983 = vsub.f32 %v557, %v982
        %v984 = vand.u32 %v983, 4294901760
        %985 = vmatmul.f32.gmra.mxu0 %v984
        %v986 = vpop.f32.mrf.mxu0
        %v987 = vadd.f32 %v879, %v986
        %v988 = vand.u32 %v560, 4294901760
        %v989 = vsub.f32 %v560, %v988
        %v990 = vand.u32 %v989, 4294901760
        %991 = vmatmul.f32.gmra.mxu0 %v990
        %v992 = vpop.f32.mrf.mxu0
        %v993 = vadd.f32 %v884, %v992
        %v994 = vand.u32 %v563, 4294901760
        %v995 = vsub.f32 %v563, %v994
        %v996 = vand.u32 %v995, 4294901760
        %997 = vmatmul.f32.gmra.mxu0 %v996
        %v998 = vpop.f32.mrf.mxu0
        %v999 = vadd.f32 %v889, %v998
        %v1000 = vand.u32 %v566, 4294901760
        %v1001 = vsub.f32 %v566, %v1000
        %v1002 = vand.u32 %v1001, 4294901760
        %1003 = vmatmul.f32.gmra.mxu0 %v1002
        %v1004 = vpop.f32.mrf.mxu0
        %v1005 = vadd.f32 %v894, %v1004
        %v1006 = vand.u32 %v569, 4294901760
        %v1007 = vsub.f32 %v569, %v1006
        %v1008 = vand.u32 %v1007, 4294901760
        %1009 = vmatmul.f32.gmra.mxu0 %v1008
        %v1010 = vpop.f32.mrf.mxu0
        %v1011 = vadd.f32 %v899, %v1010
        %v1012 = vand.u32 %v572, 4294901760
        %v1013 = vsub.f32 %v572, %v1012
        %v1014 = vand.u32 %v1013, 4294901760
        %1015 = vmatmul.f32.gmra.mxu0 %v1014
        %v1016 = vpop.f32.mrf.mxu0
        %v1017 = vadd.f32 %v904, %v1016
        %v1018 = vand.u32 %v575, 4294901760
        %v1019 = vsub.f32 %v575, %v1018
        %v1020 = vand.u32 %v1019, 4294901760
        %1021 = vmatmul.f32.gmra.mxu0 %v1020
        %v1022 = vpop.f32.mrf.mxu0
        %v1023 = vadd.f32 %v909, %v1022
        %1024 = vdwg.mxu0
        %1025 = vmatpush.xpose.msra.mxu0 0.0
        %1026 = vmatpush.xpose.msra.mxu0 0.0
        %1027 = vmatpush.xpose.msra.mxu0 0.0
        %1028 = vmatpush.xpose.msra.mxu0 0.0
        %1029 = vmatpush.xpose.msra.mxu0 0.0
        %1030 = vmatpush.xpose.msra.mxu0 0.0
        %1031 = vmatpush.xpose.msra.mxu0 0.0
        %1032 = vmatpush.xpose.msra.mxu0 0.0
        %1033 = vmatpush.xpose.msra.mxu0 0.0
        %1034 = vmatpush.xpose.msra.mxu0 0.0
        %1035 = vmatpush.xpose.msra.mxu0 0.0
        %1036 = vmatpush.xpose.msra.mxu0 0.0
        %1037 = vmatpush.xpose.msra.mxu0 0.0
        %1038 = vmatpush.xpose.msra.mxu0 0.0
        %1039 = vmatpush.xpose.msra.mxu0 0.0
        %v1040 = vand.u32 %v578, 4294901760
        %v1041 = vsub.f32 %v578, %v1040
        %v1042 = vand.u32 %v1041, 4294901760
        %1043 = vmatpush.xpose.msra.mxu0 %v1042
        %v1044 = vand.u32 %v530, 4294901760
        %1045 = vmatmul.f32.gmra.mxu0 %v1044
        %v1046 = vpop.f32.mrf.mxu0
        %v1047 = vadd.f32 %v933, %v1046
        %v1048 = vand.u32 %v533, 4294901760
        %1049 = vmatmul.f32.gmra.mxu0 %v1048
        %v1050 = vpop.f32.mrf.mxu0
        %v1051 = vadd.f32 %v939, %v1050
        %v1052 = vand.u32 %v536, 4294901760
        %1053 = vmatmul.f32.gmra.mxu0 %v1052
        %v1054 = vpop.f32.mrf.mxu0
        %v1055 = vadd.f32 %v945, %v1054
        %v1056 = vand.u32 %v539, 4294901760
        %1057 = vmatmul.f32.gmra.mxu0 %v1056
        %v1058 = vpop.f32.mrf.mxu0
        %v1059 = vadd.f32 %v951, %v1058
        %v1060 = vand.u32 %v542, 4294901760
        %1061 = vmatmul.f32.gmra.mxu0 %v1060
        %v1062 = vpop.f32.mrf.mxu0
        %v1063 = vadd.f32 %v957, %v1062
        %v1064 = vand.u32 %v545, 4294901760
        %1065 = vmatmul.f32.gmra.mxu0 %v1064
        %v1066 = vpop.f32.mrf.mxu0
        %v1067 = vadd.f32 %v963, %v1066
        %v1068 = vand.u32 %v548, 4294901760
        %1069 = vmatmul.f32.gmra.mxu0 %v1068
        %v1070 = vpop.f32.mrf.mxu0
        %v1071 = vadd.f32 %v969, %v1070
        %v1072 = vand.u32 %v551, 4294901760
        %1073 = vmatmul.f32.gmra.mxu0 %v1072
        %v1074 = vpop.f32.mrf.mxu0
        %v1075 = vadd.f32 %v975, %v1074
        %v1076 = vand.u32 %v554, 4294901760
        %1077 = vmatmul.f32.gmra.mxu0 %v1076
        %v1078 = vpop.f32.mrf.mxu0
        %v1079 = vadd.f32 %v981, %v1078
        %v1080 = vand.u32 %v557, 4294901760
        %1081 = vmatmul.f32.gmra.mxu0 %v1080
        %v1082 = vpop.f32.mrf.mxu0
        %v1083 = vadd.f32 %v987, %v1082
        %v1084 = vand.u32 %v560, 4294901760
        %1085 = vmatmul.f32.gmra.mxu0 %v1084
        %v1086 = vpop.f32.mrf.mxu0
        %v1087 = vadd.f32 %v993, %v1086
        %v1088 = vand.u32 %v563, 4294901760
        %1089 = vmatmul.f32.gmra.mxu0 %v1088
        %v1090 = vpop.f32.mrf.mxu0
        %v1091 = vadd.f32 %v999, %v1090
        %v1092 = vand.u32 %v566, 4294901760
        %1093 = vmatmul.f32.gmra.mxu0 %v1092
        %v1094 = vpop.f32.mrf.mxu0
        %v1095 = vadd.f32 %v1005, %v1094
        %v1096 = vand.u32 %v569, 4294901760
        %1097 = vmatmul.f32.gmra.mxu0 %v1096
        %v1098 = vpop.f32.mrf.mxu0
        %v1099 = vadd.f32 %v1011, %v1098
        %v1100 = vand.u32 %v572, 4294901760
        %1101 = vmatmul.f32.gmra.mxu0 %v1100
        %v1102 = vpop.f32.mrf.mxu0
        %v1103 = vadd.f32 %v1017, %v1102
        %v1104 = vand.u32 %v575, 4294901760
        %1105 = vmatmul.f32.gmra.mxu0 %v1104
        %v1106 = vpop.f32.mrf.mxu0
        %v1107 = vadd.f32 %v1023, %v1106
        %1108 = vdwg.mxu0
        %1109 = vmatpush.xpose.msra.mxu0 0.0
        %1110 = vmatpush.xpose.msra.mxu0 0.0
        %1111 = vmatpush.xpose.msra.mxu0 0.0
        %1112 = vmatpush.xpose.msra.mxu0 0.0
        %1113 = vmatpush.xpose.msra.mxu0 0.0
        %1114 = vmatpush.xpose.msra.mxu0 0.0
        %1115 = vmatpush.xpose.msra.mxu0 0.0
        %1116 = vmatpush.xpose.msra.mxu0 0.0
        %1117 = vmatpush.xpose.msra.mxu0 0.0
        %1118 = vmatpush.xpose.msra.mxu0 0.0
        %1119 = vmatpush.xpose.msra.mxu0 0.0
        %1120 = vmatpush.xpose.msra.mxu0 0.0
        %1121 = vmatpush.xpose.msra.mxu0 0.0
        %1122 = vmatpush.xpose.msra.mxu0 0.0
        %1123 = vmatpush.xpose.msra.mxu0 0.0
        %v1124 = vand.u32 %v578, 4294901760
        %1125 = vmatpush.xpose.msra.mxu0 %v1124
        %v1126 = vand.u32 %v530, 4294901760
        %1127 = vmatmul.f32.gmra.mxu0 %v1126
        %v1128 = vpop.f32.mrf.mxu0
        %v1129 = vadd.f32 %v1047, %v1128
        %v1130 = vand.u32 %v533, 4294901760
        %1131 = vmatmul.f32.gmra.mxu0 %v1130
        %v1132 = vpop.f32.mrf.mxu0
        %v1133 = vadd.f32 %v1051, %v1132
        %v1134 = vand.u32 %v536, 4294901760
        %1135 = vmatmul.f32.gmra.mxu0 %v1134
        %v1136 = vpop.f32.mrf.mxu0
        %v1137 = vadd.f32 %v1055, %v1136
        %v1138 = vand.u32 %v539, 4294901760
        %1139 = vmatmul.f32.gmra.mxu0 %v1138
        %v1140 = vpop.f32.mrf.mxu0
        %v1141 = vadd.f32 %v1059, %v1140
        %v1142 = vand.u32 %v542, 4294901760
        %1143 = vmatmul.f32.gmra.mxu0 %v1142
        %v1144 = vpop.f32.mrf.mxu0
        %v1145 = vadd.f32 %v1063, %v1144
        %v1146 = vand.u32 %v545, 4294901760
        %1147 = vmatmul.f32.gmra.mxu0 %v1146
        %v1148 = vpop.f32.mrf.mxu0
        %v1149 = vadd.f32 %v1067, %v1148
        %v1150 = vand.u32 %v548, 4294901760
        %1151 = vmatmul.f32.gmra.mxu0 %v1150
        %v1152 = vpop.f32.mrf.mxu0
        %v1153 = vadd.f32 %v1071, %v1152
        %v1154 = vand.u32 %v551, 4294901760
        %1155 = vmatmul.f32.gmra.mxu0 %v1154
        %v1156 = vpop.f32.mrf.mxu0
        %v1157 = vadd.f32 %v1075, %v1156
        %v1158 = vand.u32 %v554, 4294901760
        %1159 = vmatmul.f32.gmra.mxu0 %v1158
        %v1160 = vpop.f32.mrf.mxu0
        %v1161 = vadd.f32 %v1079, %v1160
        %v1162 = vand.u32 %v557, 4294901760
        %1163 = vmatmul.f32.gmra.mxu0 %v1162
        %v1164 = vpop.f32.mrf.mxu0
        %v1165 = vadd.f32 %v1083, %v1164
        %v1166 = vand.u32 %v560, 4294901760
        %1167 = vmatmul.f32.gmra.mxu0 %v1166
        %v1168 = vpop.f32.mrf.mxu0
        %v1169 = vadd.f32 %v1087, %v1168
        %v1170 = vand.u32 %v563, 4294901760
        %1171 = vmatmul.f32.gmra.mxu0 %v1170
        %v1172 = vpop.f32.mrf.mxu0
        %v1173 = vadd.f32 %v1091, %v1172
        %v1174 = vand.u32 %v566, 4294901760
        %1175 = vmatmul.f32.gmra.mxu0 %v1174
        %v1176 = vpop.f32.mrf.mxu0
        %v1177 = vadd.f32 %v1095, %v1176
        %v1178 = vand.u32 %v569, 4294901760
        %1179 = vmatmul.f32.gmra.mxu0 %v1178
        %v1180 = vpop.f32.mrf.mxu0
        %v1181 = vadd.f32 %v1099, %v1180
        %v1182 = vand.u32 %v572, 4294901760
        %1183 = vmatmul.f32.gmra.mxu0 %v1182
        %v1184 = vpop.f32.mrf.mxu0
        %v1185 = vadd.f32 %v1103, %v1184
        %v1186 = vand.u32 %v575, 4294901760
        %1187 = vmatmul.f32.gmra.mxu0 %v1186
        %v1188 = vpop.f32.mrf.mxu0
        %v1189 = vadd.f32 %v1107, %v1188
        %1190 = vdwg.mxu0
        %v1191 = vrot.slane %v377, 1
        %v1192 = vrot.slane %v377, 2
        %v1193 = vrot.slane %v377, 3
        %v1194 = vrot.slane %v377, 4
        %v1195 = vrot.slane %v377, 5
        %v1196 = vrot.slane %v377, 6
        %v1197 = vrot.slane %v377, 7
        %vm1198 = vcmp.ne.s32.totalorder %v1191, 0
        %vm1199 = vcmp.ne.s32.totalorder %v1192, 0
        %vm1200 = vcmp.ne.s32.totalorder %v1193, 0
        %vm1201 = vcmp.ne.s32.totalorder %v1194, 0
        %vm1202 = vcmp.ne.s32.totalorder %v1195, 0
        %vm1203 = vcmp.ne.s32.totalorder %v1196, 0
        %vm1204 = vcmp.ne.s32.totalorder %v1197, 0
        %v1205 = vsel %vm1198, 1, 0
        %v1206 = vsel %vm1199, 1, 0
        %v1207 = vsel %vm1200, 1, 0
        %v1208 = vsel %vm1201, 1, 0
        %v1209 = vsel %vm1202, 1, 0
        %v1210 = vsel %vm1203, 1, 0
        %v1211 = vsel %vm1204, 1, 0
        %v1212 = vperm.slane %v377, 0
        %v1213 = vperm.slane %v1205, 0
        %v1214 = vperm.slane %v1206, 0
        %v1215 = vperm.slane %v1207, 0
        %v1216 = vperm.slane %v1208, 0
        %v1217 = vperm.slane %v1209, 0
        %v1218 = vperm.slane %v1210, 0
        %v1219 = vperm.slane %v1211, 0
        %vm1220 = vcmp.eq.s32.totalorder %v1212, 1
        %vm1221 = vcmp.eq.s32.totalorder %v1213, 1
        %vm1222 = vcmp.eq.s32.totalorder %v1214, 1
        %vm1223 = vcmp.eq.s32.totalorder %v1215, 1
        %vm1224 = vcmp.eq.s32.totalorder %v1216, 1
        %vm1225 = vcmp.eq.s32.totalorder %v1217, 1
        %vm1226 = vcmp.eq.s32.totalorder %v1218, 1
        %vm1227 = vcmp.eq.s32.totalorder %v1219, 1
        %v1228 = vsel %vm1220, %v1129, 0.0
        %v1229 = vsel %vm1220, %v1133, 0.0
        %v1230 = vsel %vm1221, %v1137, 0.0
        %v1231 = vsel %vm1221, %v1141, 0.0
        %v1232 = vsel %vm1222, %v1145, 0.0
        %v1233 = vsel %vm1222, %v1149, 0.0
        %v1234 = vsel %vm1223, %v1153, 0.0
        %v1235 = vsel %vm1223, %v1157, 0.0
        %v1236 = vsel %vm1224, %v1161, 0.0
        %v1237 = vsel %vm1224, %v1165, 0.0
        %v1238 = vsel %vm1225, %v1169, 0.0
        %v1239 = vsel %vm1225, %v1173, 0.0
        %v1240 = vsel %vm1226, %v1177, 0.0
        %v1241 = vsel %vm1226, %v1181, 0.0
        %v1242 = vsel %vm1227, %v1185, 0.0
        %v1243 = vsel %vm1227, %v1189, 0.0
        %v1244 = vsel %vm353, %v1228, 0.0
        %1245 = vadd.xlane.f32.xlu0 %v1244
        %v1246 = vpop.xlane.xlu0 %1245
        %v1247 = vsel %vm353, %v1229, 0.0
        %1248 = vadd.xlane.f32.xlu0 %v1247
        %v1249 = vpop.xlane.xlu0 %1248
        %v1250 = vsel %vm353, %v1230, 0.0
        %1251 = vadd.xlane.f32.xlu0 %v1250
        %v1252 = vpop.xlane.xlu0 %1251
        %v1253 = vsel %vm353, %v1231, 0.0
        %1254 = vadd.xlane.f32.xlu0 %v1253
        %v1255 = vpop.xlane.xlu0 %1254
        %v1256 = vsel %vm353, %v1232, 0.0
        %1257 = vadd.xlane.f32.xlu0 %v1256
        %v1258 = vpop.xlane.xlu0 %1257
        %v1259 = vsel %vm353, %v1233, 0.0
        %1260 = vadd.xlane.f32.xlu0 %v1259
        %v1261 = vpop.xlane.xlu0 %1260
        %v1262 = vsel %vm353, %v1234, 0.0
        %1263 = vadd.xlane.f32.xlu0 %v1262
        %v1264 = vpop.xlane.xlu0 %1263
        %v1265 = vsel %vm353, %v1235, 0.0
        %1266 = vadd.xlane.f32.xlu0 %v1265
        %v1267 = vpop.xlane.xlu0 %1266
        %v1268 = vsel %vm353, %v1236, 0.0
        %1269 = vadd.xlane.f32.xlu0 %v1268
        %v1270 = vpop.xlane.xlu0 %1269
        %v1271 = vsel %vm353, %v1237, 0.0
        %1272 = vadd.xlane.f32.xlu0 %v1271
        %v1273 = vpop.xlane.xlu0 %1272
        %v1274 = vsel %vm353, %v1238, 0.0
        %1275 = vadd.xlane.f32.xlu0 %v1274
        %v1276 = vpop.xlane.xlu0 %1275
        %v1277 = vsel %vm353, %v1239, 0.0
        %1278 = vadd.xlane.f32.xlu0 %v1277
        %v1279 = vpop.xlane.xlu0 %1278
        %v1280 = vsel %vm353, %v1240, 0.0
        %1281 = vadd.xlane.f32.xlu0 %v1280
        %v1282 = vpop.xlane.xlu0 %1281
        %v1283 = vsel %vm353, %v1241, 0.0
        %1284 = vadd.xlane.f32.xlu0 %v1283
        %v1285 = vpop.xlane.xlu0 %1284
        %v1286 = vsel %vm353, %v1242, 0.0
        %1287 = vadd.xlane.f32.xlu0 %v1286
        %v1288 = vpop.xlane.xlu0 %1287
        %v1289 = vsel %vm353, %v1243, 0.0
        %1290 = vadd.xlane.f32.xlu0 %v1289
        %v1291 = vpop.xlane.xlu0 %1290
        %v1293 = vsel %vm528, %v337, 0
        %v1296 = vsel %vm528, %v338, 0
        %v1299 = vsel %vm528, %v339, 0
        %v1302 = vsel %vm528, %v340, 0
        %v1305 = vsel %vm528, %v341, 0
        %v1308 = vsel %vm528, %v342, 0
        %v1311 = vsel %vm528, %v343, 0
        %v1314 = vsel %vm528, %v344, 0
        %v1317 = vsel %vm528, %v345, 0
        %v1320 = vsel %vm528, %v346, 0
        %v1323 = vsel %vm528, %v347, 0
        %v1326 = vsel %vm528, %v348, 0
        %v1329 = vsel %vm528, %v349, 0
        %v1332 = vsel %vm528, %v350, 0
        %v1335 = vsel %vm528, %v351, 0
        %v1338 = vsel %vm528, %v352, 0
        %1340 = vmatpush.xpose.msra.mxu0 0.0
        %1341 = vmatpush.xpose.msra.mxu0 0.0
        %1342 = vmatpush.xpose.msra.mxu0 0.0
        %1343 = vmatpush.xpose.msra.mxu0 0.0
        %1344 = vmatpush.xpose.msra.mxu0 0.0
        %1345 = vmatpush.xpose.msra.mxu0 0.0
        %1346 = vmatpush.xpose.msra.mxu0 0.0
        %1347 = vmatpush.xpose.msra.mxu0 0.0
        %1348 = vmatpush.xpose.msra.mxu0 0.0
        %1349 = vmatpush.xpose.msra.mxu0 0.0
        %1350 = vmatpush.xpose.msra.mxu0 0.0
        %1351 = vmatpush.xpose.msra.mxu0 0.0
        %1352 = vmatpush.xpose.msra.mxu0 0.0
        %1353 = vmatpush.xpose.msra.mxu0 0.0
        %1354 = vmatpush.xpose.msra.mxu0 0.0
        %v1355 = vand.u32 %v578, 4294901760
        %1356 = vmatpush.xpose.msra.mxu0 %v1355
        %v1357 = vand.u32 %v1293, 4294901760
        %v1358 = vsub.f32 %v1293, %v1357
        %v1359 = vand.u32 %v1358, 4294901760
        %v1360 = vsub.f32 %v1358, %v1359
        %v1361 = vand.u32 %v1360, 4294901760
        %1362 = vmatmul.f32.gmra.mxu0 %v1361
        %v1363 = vpop.f32.mrf.mxu0
        %v1364 = vadd.f32 0.0, %v1363
        %v1365 = vand.u32 %v1296, 4294901760
        %v1366 = vsub.f32 %v1296, %v1365
        %v1367 = vand.u32 %v1366, 4294901760
        %v1368 = vsub.f32 %v1366, %v1367
        %v1369 = vand.u32 %v1368, 4294901760
        %1370 = vmatmul.f32.gmra.mxu0 %v1369
        %v1371 = vpop.f32.mrf.mxu0
        %v1372 = vadd.f32 0.0, %v1371
        %v1373 = vand.u32 %v1299, 4294901760
        %v1374 = vsub.f32 %v1299, %v1373
        %v1375 = vand.u32 %v1374, 4294901760
        %v1376 = vsub.f32 %v1374, %v1375
        %v1377 = vand.u32 %v1376, 4294901760
        %1378 = vmatmul.f32.gmra.mxu0 %v1377
        %v1379 = vpop.f32.mrf.mxu0
        %v1380 = vadd.f32 0.0, %v1379
        %v1381 = vand.u32 %v1302, 4294901760
        %v1382 = vsub.f32 %v1302, %v1381
        %v1383 = vand.u32 %v1382, 4294901760
        %v1384 = vsub.f32 %v1382, %v1383
        %v1385 = vand.u32 %v1384, 4294901760
        %1386 = vmatmul.f32.gmra.mxu0 %v1385
        %v1387 = vpop.f32.mrf.mxu0
        %v1388 = vadd.f32 0.0, %v1387
        %v1389 = vand.u32 %v1305, 4294901760
        %v1390 = vsub.f32 %v1305, %v1389
        %v1391 = vand.u32 %v1390, 4294901760
        %v1392 = vsub.f32 %v1390, %v1391
        %v1393 = vand.u32 %v1392, 4294901760
        %1394 = vmatmul.f32.gmra.mxu0 %v1393
        %v1395 = vpop.f32.mrf.mxu0
        %v1396 = vadd.f32 0.0, %v1395
        %v1397 = vand.u32 %v1308, 4294901760
        %v1398 = vsub.f32 %v1308, %v1397
        %v1399 = vand.u32 %v1398, 4294901760
        %v1400 = vsub.f32 %v1398, %v1399
        %v1401 = vand.u32 %v1400, 4294901760
        %1402 = vmatmul.f32.gmra.mxu0 %v1401
        %v1403 = vpop.f32.mrf.mxu0
        %v1404 = vadd.f32 0.0, %v1403
        %v1405 = vand.u32 %v1311, 4294901760
        %v1406 = vsub.f32 %v1311, %v1405
        %v1407 = vand.u32 %v1406, 4294901760
        %v1408 = vsub.f32 %v1406, %v1407
        %v1409 = vand.u32 %v1408, 4294901760
        %1410 = vmatmul.f32.gmra.mxu0 %v1409
        %v1411 = vpop.f32.mrf.mxu0
        %v1412 = vadd.f32 0.0, %v1411
        %v1413 = vand.u32 %v1314, 4294901760
        %v1414 = vsub.f32 %v1314, %v1413
        %v1415 = vand.u32 %v1414, 4294901760
        %v1416 = vsub.f32 %v1414, %v1415
        %v1417 = vand.u32 %v1416, 4294901760
        %1418 = vmatmul.f32.gmra.mxu0 %v1417
        %v1419 = vpop.f32.mrf.mxu0
        %v1420 = vadd.f32 0.0, %v1419
        %v1421 = vand.u32 %v1317, 4294901760
        %v1422 = vsub.f32 %v1317, %v1421
        %v1423 = vand.u32 %v1422, 4294901760
        %v1424 = vsub.f32 %v1422, %v1423
        %v1425 = vand.u32 %v1424, 4294901760
        %1426 = vmatmul.f32.gmra.mxu0 %v1425
        %v1427 = vpop.f32.mrf.mxu0
        %v1428 = vadd.f32 0.0, %v1427
        %v1429 = vand.u32 %v1320, 4294901760
        %v1430 = vsub.f32 %v1320, %v1429
        %v1431 = vand.u32 %v1430, 4294901760
        %v1432 = vsub.f32 %v1430, %v1431
        %v1433 = vand.u32 %v1432, 4294901760
        %1434 = vmatmul.f32.gmra.mxu0 %v1433
        %v1435 = vpop.f32.mrf.mxu0
        %v1436 = vadd.f32 0.0, %v1435
        %v1437 = vand.u32 %v1323, 4294901760
        %v1438 = vsub.f32 %v1323, %v1437
        %v1439 = vand.u32 %v1438, 4294901760
        %v1440 = vsub.f32 %v1438, %v1439
        %v1441 = vand.u32 %v1440, 4294901760
        %1442 = vmatmul.f32.gmra.mxu0 %v1441
        %v1443 = vpop.f32.mrf.mxu0
        %v1444 = vadd.f32 0.0, %v1443
        %v1445 = vand.u32 %v1326, 4294901760
        %v1446 = vsub.f32 %v1326, %v1445
        %v1447 = vand.u32 %v1446, 4294901760
        %v1448 = vsub.f32 %v1446, %v1447
        %v1449 = vand.u32 %v1448, 4294901760
        %1450 = vmatmul.f32.gmra.mxu0 %v1449
        %v1451 = vpop.f32.mrf.mxu0
        %v1452 = vadd.f32 0.0, %v1451
        %v1453 = vand.u32 %v1329, 4294901760
        %v1454 = vsub.f32 %v1329, %v1453
        %v1455 = vand.u32 %v1454, 4294901760
        %v1456 = vsub.f32 %v1454, %v1455
        %v1457 = vand.u32 %v1456, 4294901760
        %1458 = vmatmul.f32.gmra.mxu0 %v1457
        %v1459 = vpop.f32.mrf.mxu0
        %v1460 = vadd.f32 0.0, %v1459
        %v1461 = vand.u32 %v1332, 4294901760
        %v1462 = vsub.f32 %v1332, %v1461
        %v1463 = vand.u32 %v1462, 4294901760
        %v1464 = vsub.f32 %v1462, %v1463
        %v1465 = vand.u32 %v1464, 4294901760
        %1466 = vmatmul.f32.gmra.mxu0 %v1465
        %v1467 = vpop.f32.mrf.mxu0
        %v1468 = vadd.f32 0.0, %v1467
        %v1469 = vand.u32 %v1335, 4294901760
        %v1470 = vsub.f32 %v1335, %v1469
        %v1471 = vand.u32 %v1470, 4294901760
        %v1472 = vsub.f32 %v1470, %v1471
        %v1473 = vand.u32 %v1472, 4294901760
        %1474 = vmatmul.f32.gmra.mxu0 %v1473
        %v1475 = vpop.f32.mrf.mxu0
        %v1476 = vadd.f32 0.0, %v1475
        %v1477 = vand.u32 %v1338, 4294901760
        %v1478 = vsub.f32 %v1338, %v1477
        %v1479 = vand.u32 %v1478, 4294901760
        %v1480 = vsub.f32 %v1478, %v1479
        %v1481 = vand.u32 %v1480, 4294901760
        %1482 = vmatmul.f32.gmra.mxu0 %v1481
        %v1483 = vpop.f32.mrf.mxu0
        %v1484 = vadd.f32 0.0, %v1483
        %1485 = vdwg.mxu0
        %1486 = vmatpush.xpose.msra.mxu0 0.0
        %1487 = vmatpush.xpose.msra.mxu0 0.0
        %1488 = vmatpush.xpose.msra.mxu0 0.0
        %1489 = vmatpush.xpose.msra.mxu0 0.0
        %1490 = vmatpush.xpose.msra.mxu0 0.0
        %1491 = vmatpush.xpose.msra.mxu0 0.0
        %1492 = vmatpush.xpose.msra.mxu0 0.0
        %1493 = vmatpush.xpose.msra.mxu0 0.0
        %1494 = vmatpush.xpose.msra.mxu0 0.0
        %1495 = vmatpush.xpose.msra.mxu0 0.0
        %1496 = vmatpush.xpose.msra.mxu0 0.0
        %1497 = vmatpush.xpose.msra.mxu0 0.0
        %1498 = vmatpush.xpose.msra.mxu0 0.0
        %1499 = vmatpush.xpose.msra.mxu0 0.0
        %1500 = vmatpush.xpose.msra.mxu0 0.0
        %v1501 = vand.u32 %v578, 4294901760
        %v1502 = vsub.f32 %v578, %v1501
        %v1503 = vand.u32 %v1502, 4294901760
        %v1504 = vsub.f32 %v1502, %v1503
        %v1505 = vand.u32 %v1504, 4294901760
        %1506 = vmatpush.xpose.msra.mxu0 %v1505
        %v1507 = vand.u32 %v1293, 4294901760
        %1508 = vmatmul.f32.gmra.mxu0 %v1507
        %v1509 = vpop.f32.mrf.mxu0
        %v1510 = vadd.f32 %v1364, %v1509
        %v1511 = vand.u32 %v1296, 4294901760
        %1512 = vmatmul.f32.gmra.mxu0 %v1511
        %v1513 = vpop.f32.mrf.mxu0
        %v1514 = vadd.f32 %v1372, %v1513
        %v1515 = vand.u32 %v1299, 4294901760
        %1516 = vmatmul.f32.gmra.mxu0 %v1515
        %v1517 = vpop.f32.mrf.mxu0
        %v1518 = vadd.f32 %v1380, %v1517
        %v1519 = vand.u32 %v1302, 4294901760
        %1520 = vmatmul.f32.gmra.mxu0 %v1519
        %v1521 = vpop.f32.mrf.mxu0
        %v1522 = vadd.f32 %v1388, %v1521
        %v1523 = vand.u32 %v1305, 4294901760
        %1524 = vmatmul.f32.gmra.mxu0 %v1523
        %v1525 = vpop.f32.mrf.mxu0
        %v1526 = vadd.f32 %v1396, %v1525
        %v1527 = vand.u32 %v1308, 4294901760
        %1528 = vmatmul.f32.gmra.mxu0 %v1527
        %v1529 = vpop.f32.mrf.mxu0
        %v1530 = vadd.f32 %v1404, %v1529
        %v1531 = vand.u32 %v1311, 4294901760
        %1532 = vmatmul.f32.gmra.mxu0 %v1531
        %v1533 = vpop.f32.mrf.mxu0
        %v1534 = vadd.f32 %v1412, %v1533
        %v1535 = vand.u32 %v1314, 4294901760
        %1536 = vmatmul.f32.gmra.mxu0 %v1535
        %v1537 = vpop.f32.mrf.mxu0
        %v1538 = vadd.f32 %v1420, %v1537
        %v1539 = vand.u32 %v1317, 4294901760
        %1540 = vmatmul.f32.gmra.mxu0 %v1539
        %v1541 = vpop.f32.mrf.mxu0
        %v1542 = vadd.f32 %v1428, %v1541
        %v1543 = vand.u32 %v1320, 4294901760
        %1544 = vmatmul.f32.gmra.mxu0 %v1543
        %v1545 = vpop.f32.mrf.mxu0
        %v1546 = vadd.f32 %v1436, %v1545
        %v1547 = vand.u32 %v1323, 4294901760
        %1548 = vmatmul.f32.gmra.mxu0 %v1547
        %v1549 = vpop.f32.mrf.mxu0
        %v1550 = vadd.f32 %v1444, %v1549
        %v1551 = vand.u32 %v1326, 4294901760
        %1552 = vmatmul.f32.gmra.mxu0 %v1551
        %v1553 = vpop.f32.mrf.mxu0
        %v1554 = vadd.f32 %v1452, %v1553
        %v1555 = vand.u32 %v1329, 4294901760
        %1556 = vmatmul.f32.gmra.mxu0 %v1555
        %v1557 = vpop.f32.mrf.mxu0
        %v1558 = vadd.f32 %v1460, %v1557
        %v1559 = vand.u32 %v1332, 4294901760
        %1560 = vmatmul.f32.gmra.mxu0 %v1559
        %v1561 = vpop.f32.mrf.mxu0
        %v1562 = vadd.f32 %v1468, %v1561
        %v1563 = vand.u32 %v1335, 4294901760
        %1564 = vmatmul.f32.gmra.mxu0 %v1563
        %v1565 = vpop.f32.mrf.mxu0
        %v1566 = vadd.f32 %v1476, %v1565
        %v1567 = vand.u32 %v1338, 4294901760
        %1568 = vmatmul.f32.gmra.mxu0 %v1567
        %v1569 = vpop.f32.mrf.mxu0
        %v1570 = vadd.f32 %v1484, %v1569
        %1571 = vdwg.mxu0
        %1572 = vmatpush.xpose.msra.mxu0 0.0
        %1573 = vmatpush.xpose.msra.mxu0 0.0
        %1574 = vmatpush.xpose.msra.mxu0 0.0
        %1575 = vmatpush.xpose.msra.mxu0 0.0
        %1576 = vmatpush.xpose.msra.mxu0 0.0
        %1577 = vmatpush.xpose.msra.mxu0 0.0
        %1578 = vmatpush.xpose.msra.mxu0 0.0
        %1579 = vmatpush.xpose.msra.mxu0 0.0
        %1580 = vmatpush.xpose.msra.mxu0 0.0
        %1581 = vmatpush.xpose.msra.mxu0 0.0
        %1582 = vmatpush.xpose.msra.mxu0 0.0
        %1583 = vmatpush.xpose.msra.mxu0 0.0
        %1584 = vmatpush.xpose.msra.mxu0 0.0
        %1585 = vmatpush.xpose.msra.mxu0 0.0
        %1586 = vmatpush.xpose.msra.mxu0 0.0
        %v1587 = vand.u32 %v578, 4294901760
        %v1588 = vsub.f32 %v578, %v1587
        %1589 = vmatpush.xpose.msra.mxu0 %v1588
        %v1590 = vand.u32 %v1293, 4294901760
        %v1591 = vsub.f32 %v1293, %v1590
        %1592 = vmatmul.f32.gmra.mxu0 %v1591
        %v1593 = vpop.f32.mrf.mxu0
        %v1594 = vadd.f32 %v1510, %v1593
        %v1595 = vand.u32 %v1296, 4294901760
        %v1596 = vsub.f32 %v1296, %v1595
        %1597 = vmatmul.f32.gmra.mxu0 %v1596
        %v1598 = vpop.f32.mrf.mxu0
        %v1599 = vadd.f32 %v1514, %v1598
        %v1600 = vand.u32 %v1299, 4294901760
        %v1601 = vsub.f32 %v1299, %v1600
        %1602 = vmatmul.f32.gmra.mxu0 %v1601
        %v1603 = vpop.f32.mrf.mxu0
        %v1604 = vadd.f32 %v1518, %v1603
        %v1605 = vand.u32 %v1302, 4294901760
        %v1606 = vsub.f32 %v1302, %v1605
        %1607 = vmatmul.f32.gmra.mxu0 %v1606
        %v1608 = vpop.f32.mrf.mxu0
        %v1609 = vadd.f32 %v1522, %v1608
        %v1610 = vand.u32 %v1305, 4294901760
        %v1611 = vsub.f32 %v1305, %v1610
        %1612 = vmatmul.f32.gmra.mxu0 %v1611
        %v1613 = vpop.f32.mrf.mxu0
        %v1614 = vadd.f32 %v1526, %v1613
        %v1615 = vand.u32 %v1308, 4294901760
        %v1616 = vsub.f32 %v1308, %v1615
        %1617 = vmatmul.f32.gmra.mxu0 %v1616
        %v1618 = vpop.f32.mrf.mxu0
        %v1619 = vadd.f32 %v1530, %v1618
        %v1620 = vand.u32 %v1311, 4294901760
        %v1621 = vsub.f32 %v1311, %v1620
        %1622 = vmatmul.f32.gmra.mxu0 %v1621
        %v1623 = vpop.f32.mrf.mxu0
        %v1624 = vadd.f32 %v1534, %v1623
        %v1625 = vand.u32 %v1314, 4294901760
        %v1626 = vsub.f32 %v1314, %v1625
        %1627 = vmatmul.f32.gmra.mxu0 %v1626
        %v1628 = vpop.f32.mrf.mxu0
        %v1629 = vadd.f32 %v1538, %v1628
        %v1630 = vand.u32 %v1317, 4294901760
        %v1631 = vsub.f32 %v1317, %v1630
        %1632 = vmatmul.f32.gmra.mxu0 %v1631
        %v1633 = vpop.f32.mrf.mxu0
        %v1634 = vadd.f32 %v1542, %v1633
        %v1635 = vand.u32 %v1320, 4294901760
        %v1636 = vsub.f32 %v1320, %v1635
        %1637 = vmatmul.f32.gmra.mxu0 %v1636
        %v1638 = vpop.f32.mrf.mxu0
        %v1639 = vadd.f32 %v1546, %v1638
        %v1640 = vand.u32 %v1323, 4294901760
        %v1641 = vsub.f32 %v1323, %v1640
        %1642 = vmatmul.f32.gmra.mxu0 %v1641
        %v1643 = vpop.f32.mrf.mxu0
        %v1644 = vadd.f32 %v1550, %v1643
        %v1645 = vand.u32 %v1326, 4294901760
        %v1646 = vsub.f32 %v1326, %v1645
        %1647 = vmatmul.f32.gmra.mxu0 %v1646
        %v1648 = vpop.f32.mrf.mxu0
        %v1649 = vadd.f32 %v1554, %v1648
        %v1650 = vand.u32 %v1329, 4294901760
        %v1651 = vsub.f32 %v1329, %v1650
        %1652 = vmatmul.f32.gmra.mxu0 %v1651
        %v1653 = vpop.f32.mrf.mxu0
        %v1654 = vadd.f32 %v1558, %v1653
        %v1655 = vand.u32 %v1332, 4294901760
        %v1656 = vsub.f32 %v1332, %v1655
        %1657 = vmatmul.f32.gmra.mxu0 %v1656
        %v1658 = vpop.f32.mrf.mxu0
        %v1659 = vadd.f32 %v1562, %v1658
        %v1660 = vand.u32 %v1335, 4294901760
        %v1661 = vsub.f32 %v1335, %v1660
        %1662 = vmatmul.f32.gmra.mxu0 %v1661
        %v1663 = vpop.f32.mrf.mxu0
        %v1664 = vadd.f32 %v1566, %v1663
        %v1665 = vand.u32 %v1338, 4294901760
        %v1666 = vsub.f32 %v1338, %v1665
        %1667 = vmatmul.f32.gmra.mxu0 %v1666
        %v1668 = vpop.f32.mrf.mxu0
        %v1669 = vadd.f32 %v1570, %v1668
        %1670 = vdwg.mxu0
        %1671 = vmatpush.xpose.msra.mxu0 0.0
        %1672 = vmatpush.xpose.msra.mxu0 0.0
        %1673 = vmatpush.xpose.msra.mxu0 0.0
        %1674 = vmatpush.xpose.msra.mxu0 0.0
        %1675 = vmatpush.xpose.msra.mxu0 0.0
        %1676 = vmatpush.xpose.msra.mxu0 0.0
        %1677 = vmatpush.xpose.msra.mxu0 0.0
        %1678 = vmatpush.xpose.msra.mxu0 0.0
        %1679 = vmatpush.xpose.msra.mxu0 0.0
        %1680 = vmatpush.xpose.msra.mxu0 0.0
        %1681 = vmatpush.xpose.msra.mxu0 0.0
        %1682 = vmatpush.xpose.msra.mxu0 0.0
        %1683 = vmatpush.xpose.msra.mxu0 0.0
        %1684 = vmatpush.xpose.msra.mxu0 0.0
        %1685 = vmatpush.xpose.msra.mxu0 0.0
        %v1686 = vand.u32 %v578, 4294901760
        %1687 = vmatpush.xpose.msra.mxu0 %v1686
        %v1688 = vand.u32 %v1293, 4294901760
        %v1689 = vsub.f32 %v1293, %v1688
        %v1690 = vand.u32 %v1689, 4294901760
        %1691 = vmatmul.f32.gmra.mxu0 %v1690
        %v1692 = vpop.f32.mrf.mxu0
        %v1693 = vadd.f32 %v1594, %v1692
        %v1694 = vand.u32 %v1296, 4294901760
        %v1695 = vsub.f32 %v1296, %v1694
        %v1696 = vand.u32 %v1695, 4294901760
        %1697 = vmatmul.f32.gmra.mxu0 %v1696
        %v1698 = vpop.f32.mrf.mxu0
        %v1699 = vadd.f32 %v1599, %v1698
        %v1700 = vand.u32 %v1299, 4294901760
        %v1701 = vsub.f32 %v1299, %v1700
        %v1702 = vand.u32 %v1701, 4294901760
        %1703 = vmatmul.f32.gmra.mxu0 %v1702
        %v1704 = vpop.f32.mrf.mxu0
        %v1705 = vadd.f32 %v1604, %v1704
        %v1706 = vand.u32 %v1302, 4294901760
        %v1707 = vsub.f32 %v1302, %v1706
        %v1708 = vand.u32 %v1707, 4294901760
        %1709 = vmatmul.f32.gmra.mxu0 %v1708
        %v1710 = vpop.f32.mrf.mxu0
        %v1711 = vadd.f32 %v1609, %v1710
        %v1712 = vand.u32 %v1305, 4294901760
        %v1713 = vsub.f32 %v1305, %v1712
        %v1714 = vand.u32 %v1713, 4294901760
        %1715 = vmatmul.f32.gmra.mxu0 %v1714
        %v1716 = vpop.f32.mrf.mxu0
        %v1717 = vadd.f32 %v1614, %v1716
        %v1718 = vand.u32 %v1308, 4294901760
        %v1719 = vsub.f32 %v1308, %v1718
        %v1720 = vand.u32 %v1719, 4294901760
        %1721 = vmatmul.f32.gmra.mxu0 %v1720
        %v1722 = vpop.f32.mrf.mxu0
        %v1723 = vadd.f32 %v1619, %v1722
        %v1724 = vand.u32 %v1311, 4294901760
        %v1725 = vsub.f32 %v1311, %v1724
        %v1726 = vand.u32 %v1725, 4294901760
        %1727 = vmatmul.f32.gmra.mxu0 %v1726
        %v1728 = vpop.f32.mrf.mxu0
        %v1729 = vadd.f32 %v1624, %v1728
        %v1730 = vand.u32 %v1314, 4294901760
        %v1731 = vsub.f32 %v1314, %v1730
        %v1732 = vand.u32 %v1731, 4294901760
        %1733 = vmatmul.f32.gmra.mxu0 %v1732
        %v1734 = vpop.f32.mrf.mxu0
        %v1735 = vadd.f32 %v1629, %v1734
        %v1736 = vand.u32 %v1317, 4294901760
        %v1737 = vsub.f32 %v1317, %v1736
        %v1738 = vand.u32 %v1737, 4294901760
        %1739 = vmatmul.f32.gmra.mxu0 %v1738
        %v1740 = vpop.f32.mrf.mxu0
        %v1741 = vadd.f32 %v1634, %v1740
        %v1742 = vand.u32 %v1320, 4294901760
        %v1743 = vsub.f32 %v1320, %v1742
        %v1744 = vand.u32 %v1743, 4294901760
        %1745 = vmatmul.f32.gmra.mxu0 %v1744
        %v1746 = vpop.f32.mrf.mxu0
        %v1747 = vadd.f32 %v1639, %v1746
        %v1748 = vand.u32 %v1323, 4294901760
        %v1749 = vsub.f32 %v1323, %v1748
        %v1750 = vand.u32 %v1749, 4294901760
        %1751 = vmatmul.f32.gmra.mxu0 %v1750
        %v1752 = vpop.f32.mrf.mxu0
        %v1753 = vadd.f32 %v1644, %v1752
        %v1754 = vand.u32 %v1326, 4294901760
        %v1755 = vsub.f32 %v1326, %v1754
        %v1756 = vand.u32 %v1755, 4294901760
        %1757 = vmatmul.f32.gmra.mxu0 %v1756
        %v1758 = vpop.f32.mrf.mxu0
        %v1759 = vadd.f32 %v1649, %v1758
        %v1760 = vand.u32 %v1329, 4294901760
        %v1761 = vsub.f32 %v1329, %v1760
        %v1762 = vand.u32 %v1761, 4294901760
        %1763 = vmatmul.f32.gmra.mxu0 %v1762
        %v1764 = vpop.f32.mrf.mxu0
        %v1765 = vadd.f32 %v1654, %v1764
        %v1766 = vand.u32 %v1332, 4294901760
        %v1767 = vsub.f32 %v1332, %v1766
        %v1768 = vand.u32 %v1767, 4294901760
        %1769 = vmatmul.f32.gmra.mxu0 %v1768
        %v1770 = vpop.f32.mrf.mxu0
        %v1771 = vadd.f32 %v1659, %v1770
        %v1772 = vand.u32 %v1335, 4294901760
        %v1773 = vsub.f32 %v1335, %v1772
        %v1774 = vand.u32 %v1773, 4294901760
        %1775 = vmatmul.f32.gmra.mxu0 %v1774
        %v1776 = vpop.f32.mrf.mxu0
        %v1777 = vadd.f32 %v1664, %v1776
        %v1778 = vand.u32 %v1338, 4294901760
        %v1779 = vsub.f32 %v1338, %v1778
        %v1780 = vand.u32 %v1779, 4294901760
        %1781 = vmatmul.f32.gmra.mxu0 %v1780
        %v1782 = vpop.f32.mrf.mxu0
        %v1783 = vadd.f32 %v1669, %v1782
        %1784 = vdwg.mxu0
        %1785 = vmatpush.xpose.msra.mxu0 0.0
        %1786 = vmatpush.xpose.msra.mxu0 0.0
        %1787 = vmatpush.xpose.msra.mxu0 0.0
        %1788 = vmatpush.xpose.msra.mxu0 0.0
        %1789 = vmatpush.xpose.msra.mxu0 0.0
        %1790 = vmatpush.xpose.msra.mxu0 0.0
        %1791 = vmatpush.xpose.msra.mxu0 0.0
        %1792 = vmatpush.xpose.msra.mxu0 0.0
        %1793 = vmatpush.xpose.msra.mxu0 0.0
        %1794 = vmatpush.xpose.msra.mxu0 0.0
        %1795 = vmatpush.xpose.msra.mxu0 0.0
        %1796 = vmatpush.xpose.msra.mxu0 0.0
        %1797 = vmatpush.xpose.msra.mxu0 0.0
        %1798 = vmatpush.xpose.msra.mxu0 0.0
        %1799 = vmatpush.xpose.msra.mxu0 0.0
        %v1800 = vand.u32 %v578, 4294901760
        %v1801 = vsub.f32 %v578, %v1800
        %v1802 = vand.u32 %v1801, 4294901760
        %1803 = vmatpush.xpose.msra.mxu0 %v1802
        %v1804 = vand.u32 %v1293, 4294901760
        %1805 = vmatmul.f32.gmra.mxu0 %v1804
        %v1806 = vpop.f32.mrf.mxu0
        %v1807 = vadd.f32 %v1693, %v1806
        %v1808 = vand.u32 %v1296, 4294901760
        %1809 = vmatmul.f32.gmra.mxu0 %v1808
        %v1810 = vpop.f32.mrf.mxu0
        %v1811 = vadd.f32 %v1699, %v1810
        %v1812 = vand.u32 %v1299, 4294901760
        %1813 = vmatmul.f32.gmra.mxu0 %v1812
        %v1814 = vpop.f32.mrf.mxu0
        %v1815 = vadd.f32 %v1705, %v1814
        %v1816 = vand.u32 %v1302, 4294901760
        %1817 = vmatmul.f32.gmra.mxu0 %v1816
        %v1818 = vpop.f32.mrf.mxu0
        %v1819 = vadd.f32 %v1711, %v1818
        %v1820 = vand.u32 %v1305, 4294901760
        %1821 = vmatmul.f32.gmra.mxu0 %v1820
        %v1822 = vpop.f32.mrf.mxu0
        %v1823 = vadd.f32 %v1717, %v1822
        %v1824 = vand.u32 %v1308, 4294901760
        %1825 = vmatmul.f32.gmra.mxu0 %v1824
        %v1826 = vpop.f32.mrf.mxu0
        %v1827 = vadd.f32 %v1723, %v1826
        %v1828 = vand.u32 %v1311, 4294901760
        %1829 = vmatmul.f32.gmra.mxu0 %v1828
        %v1830 = vpop.f32.mrf.mxu0
        %v1831 = vadd.f32 %v1729, %v1830
        %v1832 = vand.u32 %v1314, 4294901760
        %1833 = vmatmul.f32.gmra.mxu0 %v1832
        %v1834 = vpop.f32.mrf.mxu0
        %v1835 = vadd.f32 %v1735, %v1834
        %v1836 = vand.u32 %v1317, 4294901760
        %1837 = vmatmul.f32.gmra.mxu0 %v1836
        %v1838 = vpop.f32.mrf.mxu0
        %v1839 = vadd.f32 %v1741, %v1838
        %v1840 = vand.u32 %v1320, 4294901760
        %1841 = vmatmul.f32.gmra.mxu0 %v1840
        %v1842 = vpop.f32.mrf.mxu0
        %v1843 = vadd.f32 %v1747, %v1842
        %v1844 = vand.u32 %v1323, 4294901760
        %1845 = vmatmul.f32.gmra.mxu0 %v1844
        %v1846 = vpop.f32.mrf.mxu0
        %v1847 = vadd.f32 %v1753, %v1846
        %v1848 = vand.u32 %v1326, 4294901760
        %1849 = vmatmul.f32.gmra.mxu0 %v1848
        %v1850 = vpop.f32.mrf.mxu0
        %v1851 = vadd.f32 %v1759, %v1850
        %v1852 = vand.u32 %v1329, 4294901760
        %1853 = vmatmul.f32.gmra.mxu0 %v1852
        %v1854 = vpop.f32.mrf.mxu0
        %v1855 = vadd.f32 %v1765, %v1854
        %v1856 = vand.u32 %v1332, 4294901760
        %1857 = vmatmul.f32.gmra.mxu0 %v1856
        %v1858 = vpop.f32.mrf.mxu0
        %v1859 = vadd.f32 %v1771, %v1858
        %v1860 = vand.u32 %v1335, 4294901760
        %1861 = vmatmul.f32.gmra.mxu0 %v1860
        %v1862 = vpop.f32.mrf.mxu0
        %v1863 = vadd.f32 %v1777, %v1862
        %v1864 = vand.u32 %v1338, 4294901760
        %1865 = vmatmul.f32.gmra.mxu0 %v1864
        %v1866 = vpop.f32.mrf.mxu0
        %v1867 = vadd.f32 %v1783, %v1866
        %1868 = vdwg.mxu0
        %1869 = vmatpush.xpose.msra.mxu0 0.0
        %1870 = vmatpush.xpose.msra.mxu0 0.0
        %1871 = vmatpush.xpose.msra.mxu0 0.0
        %1872 = vmatpush.xpose.msra.mxu0 0.0
        %1873 = vmatpush.xpose.msra.mxu0 0.0
        %1874 = vmatpush.xpose.msra.mxu0 0.0
        %1875 = vmatpush.xpose.msra.mxu0 0.0
        %1876 = vmatpush.xpose.msra.mxu0 0.0
        %1877 = vmatpush.xpose.msra.mxu0 0.0
        %1878 = vmatpush.xpose.msra.mxu0 0.0
        %1879 = vmatpush.xpose.msra.mxu0 0.0
        %1880 = vmatpush.xpose.msra.mxu0 0.0
        %1881 = vmatpush.xpose.msra.mxu0 0.0
        %1882 = vmatpush.xpose.msra.mxu0 0.0
        %1883 = vmatpush.xpose.msra.mxu0 0.0
        %v1884 = vand.u32 %v578, 4294901760
        %1885 = vmatpush.xpose.msra.mxu0 %v1884
        %v1886 = vand.u32 %v1293, 4294901760
        %1887 = vmatmul.f32.gmra.mxu0 %v1886
        %v1888 = vpop.f32.mrf.mxu0
        %v1889 = vadd.f32 %v1807, %v1888
        %v1890 = vand.u32 %v1296, 4294901760
        %1891 = vmatmul.f32.gmra.mxu0 %v1890
        %v1892 = vpop.f32.mrf.mxu0
        %v1893 = vadd.f32 %v1811, %v1892
        %v1894 = vand.u32 %v1299, 4294901760
        %1895 = vmatmul.f32.gmra.mxu0 %v1894
        %v1896 = vpop.f32.mrf.mxu0
        %v1897 = vadd.f32 %v1815, %v1896
        %v1898 = vand.u32 %v1302, 4294901760
        %1899 = vmatmul.f32.gmra.mxu0 %v1898
        %v1900 = vpop.f32.mrf.mxu0
        %v1901 = vadd.f32 %v1819, %v1900
        %v1902 = vand.u32 %v1305, 4294901760
        %1903 = vmatmul.f32.gmra.mxu0 %v1902
        %v1904 = vpop.f32.mrf.mxu0
        %v1905 = vadd.f32 %v1823, %v1904
        %v1906 = vand.u32 %v1308, 4294901760
        %1907 = vmatmul.f32.gmra.mxu0 %v1906
        %v1908 = vpop.f32.mrf.mxu0
        %v1909 = vadd.f32 %v1827, %v1908
        %v1910 = vand.u32 %v1311, 4294901760
        %1911 = vmatmul.f32.gmra.mxu0 %v1910
        %v1912 = vpop.f32.mrf.mxu0
        %v1913 = vadd.f32 %v1831, %v1912
        %v1914 = vand.u32 %v1314, 4294901760
        %1915 = vmatmul.f32.gmra.mxu0 %v1914
        %v1916 = vpop.f32.mrf.mxu0
        %v1917 = vadd.f32 %v1835, %v1916
        %v1918 = vand.u32 %v1317, 4294901760
        %1919 = vmatmul.f32.gmra.mxu0 %v1918
        %v1920 = vpop.f32.mrf.mxu0
        %v1921 = vadd.f32 %v1839, %v1920
        %v1922 = vand.u32 %v1320, 4294901760
        %1923 = vmatmul.f32.gmra.mxu0 %v1922
        %v1924 = vpop.f32.mrf.mxu0
        %v1925 = vadd.f32 %v1843, %v1924
        %v1926 = vand.u32 %v1323, 4294901760
        %1927 = vmatmul.f32.gmra.mxu0 %v1926
        %v1928 = vpop.f32.mrf.mxu0
        %v1929 = vadd.f32 %v1847, %v1928
        %v1930 = vand.u32 %v1326, 4294901760
        %1931 = vmatmul.f32.gmra.mxu0 %v1930
        %v1932 = vpop.f32.mrf.mxu0
        %v1933 = vadd.f32 %v1851, %v1932
        %v1934 = vand.u32 %v1329, 4294901760
        %1935 = vmatmul.f32.gmra.mxu0 %v1934
        %v1936 = vpop.f32.mrf.mxu0
        %v1937 = vadd.f32 %v1855, %v1936
        %v1938 = vand.u32 %v1332, 4294901760
        %1939 = vmatmul.f32.gmra.mxu0 %v1938
        %v1940 = vpop.f32.mrf.mxu0
        %v1941 = vadd.f32 %v1859, %v1940
        %v1942 = vand.u32 %v1335, 4294901760
        %1943 = vmatmul.f32.gmra.mxu0 %v1942
        %v1944 = vpop.f32.mrf.mxu0
        %v1945 = vadd.f32 %v1863, %v1944
        %v1946 = vand.u32 %v1338, 4294901760
        %1947 = vmatmul.f32.gmra.mxu0 %v1946
        %v1948 = vpop.f32.mrf.mxu0
        %v1949 = vadd.f32 %v1867, %v1948
        %1950 = vdwg.mxu0
        %v1951 = vsel %vm1220, %v1889, 0.0
        %v1952 = vsel %vm1220, %v1893, 0.0
        %v1953 = vsel %vm1221, %v1897, 0.0
        %v1954 = vsel %vm1221, %v1901, 0.0
        %v1955 = vsel %vm1222, %v1905, 0.0
        %v1956 = vsel %vm1222, %v1909, 0.0
        %v1957 = vsel %vm1223, %v1913, 0.0
        %v1958 = vsel %vm1223, %v1917, 0.0
        %v1959 = vsel %vm1224, %v1921, 0.0
        %v1960 = vsel %vm1224, %v1925, 0.0
        %v1961 = vsel %vm1225, %v1929, 0.0
        %v1962 = vsel %vm1225, %v1933, 0.0
        %v1963 = vsel %vm1226, %v1937, 0.0
        %v1964 = vsel %vm1226, %v1941, 0.0
        %v1965 = vsel %vm1227, %v1945, 0.0
        %v1966 = vsel %vm1227, %v1949, 0.0
        %v1967 = vsel %vm353, %v1951, 0.0
        %1968 = vadd.xlane.f32.xlu0 %v1967
        %v1969 = vpop.xlane.xlu0 %1968
        %v1970 = vsel %vm353, %v1952, 0.0
        %1971 = vadd.xlane.f32.xlu0 %v1970
        %v1972 = vpop.xlane.xlu0 %1971
        %v1973 = vsel %vm353, %v1953, 0.0
        %1974 = vadd.xlane.f32.xlu0 %v1973
        %v1975 = vpop.xlane.xlu0 %1974
        %v1976 = vsel %vm353, %v1954, 0.0
        %1977 = vadd.xlane.f32.xlu0 %v1976
        %v1978 = vpop.xlane.xlu0 %1977
        %v1979 = vsel %vm353, %v1955, 0.0
        %1980 = vadd.xlane.f32.xlu0 %v1979
        %v1981 = vpop.xlane.xlu0 %1980
        %v1982 = vsel %vm353, %v1956, 0.0
        %1983 = vadd.xlane.f32.xlu0 %v1982
        %v1984 = vpop.xlane.xlu0 %1983
        %v1985 = vsel %vm353, %v1957, 0.0
        %1986 = vadd.xlane.f32.xlu0 %v1985
        %v1987 = vpop.xlane.xlu0 %1986
        %v1988 = vsel %vm353, %v1958, 0.0
        %1989 = vadd.xlane.f32.xlu0 %v1988
        %v1990 = vpop.xlane.xlu0 %1989
        %v1991 = vsel %vm353, %v1959, 0.0
        %1992 = vadd.xlane.f32.xlu0 %v1991
        %v1993 = vpop.xlane.xlu0 %1992
        %v1994 = vsel %vm353, %v1960, 0.0
        %1995 = vadd.xlane.f32.xlu0 %v1994
        %v1996 = vpop.xlane.xlu0 %1995
        %v1997 = vsel %vm353, %v1961, 0.0
        %1998 = vadd.xlane.f32.xlu0 %v1997
        %v1999 = vpop.xlane.xlu0 %1998
        %v2000 = vsel %vm353, %v1962, 0.0
        %2001 = vadd.xlane.f32.xlu0 %v2000
        %v2002 = vpop.xlane.xlu0 %2001
        %v2003 = vsel %vm353, %v1963, 0.0
        %2004 = vadd.xlane.f32.xlu0 %v2003
        %v2005 = vpop.xlane.xlu0 %2004
        %v2006 = vsel %vm353, %v1964, 0.0
        %2007 = vadd.xlane.f32.xlu0 %v2006
        %v2008 = vpop.xlane.xlu0 %2007
        %v2009 = vsel %vm353, %v1965, 0.0
        %2010 = vadd.xlane.f32.xlu0 %v2009
        %v2011 = vpop.xlane.xlu0 %2010
        %v2012 = vsel %vm353, %v1966, 0.0
        %2013 = vadd.xlane.f32.xlu0 %v2012
        %v2014 = vpop.xlane.xlu0 %2013
        %v2031 = vperm.slane %v1246, %v358
        %v2032 = vadd.s32 %v358, 4294967288
        %v2033 = vperm.slane %v1249, %v2032
        %vm2034 = vcmask 130112
        %v2035 = vsel %vm2034, %v2033, %v2031
        %v2036 = vperm.slane %v1252, %v358
        %v2037 = vperm.slane %v1255, %v2032
        %v2038 = vsel %vm2034, %v2037, %v2036
        %v2039 = vperm.slane %v1258, %v358
        %v2040 = vperm.slane %v1261, %v2032
        %v2041 = vsel %vm2034, %v2040, %v2039
        %v2042 = vperm.slane %v1264, %v358
        %v2043 = vperm.slane %v1267, %v2032
        %v2044 = vsel %vm2034, %v2043, %v2042
        %v2045 = vperm.slane %v1270, %v358
        %v2046 = vperm.slane %v1273, %v2032
        %v2047 = vsel %vm2034, %v2046, %v2045
        %v2048 = vperm.slane %v1276, %v358
        %v2049 = vperm.slane %v1279, %v2032
        %v2050 = vsel %vm2034, %v2049, %v2048
        %v2051 = vperm.slane %v1282, %v358
        %v2052 = vperm.slane %v1285, %v2032
        %v2053 = vsel %vm2034, %v2052, %v2051
        %v2054 = vperm.slane %v1288, %v358
        %v2055 = vperm.slane %v1291, %v2032
        %v2056 = vsel %vm2034, %v2055, %v2054
        %vm2057 = vcmask 1041409
        %v2058 = vsel %vm2057, %v2038, %v2035
        %vm2059 = vcmask 1042434
        %v2060 = vsel %vm2059, %v2041, %v2058
        %vm2061 = vcmask 1043459
        %v2062 = vsel %vm2061, %v2044, %v2060
        %vm2063 = vcmask 1044484
        %v2064 = vsel %vm2063, %v2047, %v2062
        %vm2065 = vcmask 1045509
        %v2066 = vsel %vm2065, %v2050, %v2064
        %vm2067 = vcmask 1046534
        %v2068 = vsel %vm2067, %v2053, %v2066
        %vm2069 = vcmask 1047559
        %v2070 = vsel %vm2069, %v2056, %v2068
        %vm2072 = vcmask 130048
        %v2073 = vsel %vm2072, %v2070, -inf
        %2074 = vmax.xlane.f32.xlu0 %v2073
        %v2075 = vpop.xlane.xlu0 %2074
        %v2077 = vperm.slane %v2075, 0
        %v2078 = vperm.slane %v2075, 1
        %v2079 = vperm.slane %v2075, 2
        %v2080 = vperm.slane %v2075, 3
        %v2081 = vperm.slane %v2075, 4
        %v2082 = vperm.slane %v2075, 5
        %v2083 = vperm.slane %v2075, 6
        %v2084 = vperm.slane %v2075, 7
        %vm2093 = vcmp.eq.f32.partialorder %v1246, %v2077
        %vm2094 = vcmp.eq.f32.partialorder %v1249, %v2077
        %vm2095 = vcmp.eq.f32.partialorder %v1252, %v2078
        %vm2096 = vcmp.eq.f32.partialorder %v1255, %v2078
        %vm2097 = vcmp.eq.f32.partialorder %v1258, %v2079
        %vm2098 = vcmp.eq.f32.partialorder %v1261, %v2079
        %vm2099 = vcmp.eq.f32.partialorder %v1264, %v2080
        %vm2100 = vcmp.eq.f32.partialorder %v1267, %v2080
        %vm2101 = vcmp.eq.f32.partialorder %v1270, %v2081
        %vm2102 = vcmp.eq.f32.partialorder %v1273, %v2081
        %vm2103 = vcmp.eq.f32.partialorder %v1276, %v2082
        %vm2104 = vcmp.eq.f32.partialorder %v1279, %v2082
        %vm2105 = vcmp.eq.f32.partialorder %v1282, %v2083
        %vm2106 = vcmp.eq.f32.partialorder %v1285, %v2083
        %vm2107 = vcmp.eq.f32.partialorder %v1288, %v2084
        %vm2108 = vcmp.eq.f32.partialorder %v1291, %v2084
        %v2109 = vlaneseq
        %v2110 = vshrl.u32 %v2109, 7
        %2112 = vset.pattern.permute.xlu0 %v2110
        %2113 = vperm.xlu0 %2112, %v358
        %v2114 = vpop.permute.xlu0 %2113
        %v2115 = vlaneseq
        %v2116 = vshrl.u32 %v2115, 7
        %v2117 = vadd.s32 %v2116, 8
        %2118 = vset.pattern.permute.xlu0 %v2117
        %2119 = vperm.xlu0 %2118, %v358
        %v2120 = vpop.permute.xlu0 %2119
        %v2121 = vsel %vm2093, %v2114, 2147483647
        %v2122 = vsel %vm2094, %v2120, 2147483647
        %v2123 = vsel %vm2095, %v2114, 2147483647
        %v2124 = vsel %vm2096, %v2120, 2147483647
        %v2125 = vsel %vm2097, %v2114, 2147483647
        %v2126 = vsel %vm2098, %v2120, 2147483647
        %v2127 = vsel %vm2099, %v2114, 2147483647
        %v2128 = vsel %vm2100, %v2120, 2147483647
        %v2129 = vsel %vm2101, %v2114, 2147483647
        %v2130 = vsel %vm2102, %v2120, 2147483647
        %v2131 = vsel %vm2103, %v2114, 2147483647
        %v2132 = vsel %vm2104, %v2120, 2147483647
        %v2133 = vsel %vm2105, %v2114, 2147483647
        %v2134 = vsel %vm2106, %v2120, 2147483647
        %v2135 = vsel %vm2107, %v2114, 2147483647
        %v2136 = vsel %vm2108, %v2120, 2147483647
        %2137 = vset.pattern.permute.xlu0 0
        %2138 = vperm.xlu0 %2137, %v2121
        %v2139 = vpop.permute.xlu0 %2138
        %2140 = vset.pattern.permute.xlu0 0
        %2141 = vperm.xlu0 %2140, %v2122
        %v2142 = vpop.permute.xlu0 %2141
        %2143 = vset.pattern.permute.xlu0 0
        %2144 = vperm.xlu0 %2143, %v2123
        %v2145 = vpop.permute.xlu0 %2144
        %2146 = vset.pattern.permute.xlu0 0
        %2147 = vperm.xlu0 %2146, %v2124
        %v2148 = vpop.permute.xlu0 %2147
        %2149 = vset.pattern.permute.xlu0 0
        %2150 = vperm.xlu0 %2149, %v2125
        %v2151 = vpop.permute.xlu0 %2150
        %2152 = vset.pattern.permute.xlu0 0
        %2153 = vperm.xlu0 %2152, %v2126
        %v2154 = vpop.permute.xlu0 %2153
        %2155 = vset.pattern.permute.xlu0 0
        %2156 = vperm.xlu0 %2155, %v2127
        %v2157 = vpop.permute.xlu0 %2156
        %2158 = vset.pattern.permute.xlu0 0
        %2159 = vperm.xlu0 %2158, %v2128
        %v2160 = vpop.permute.xlu0 %2159
        %2161 = vset.pattern.permute.xlu0 0
        %2162 = vperm.xlu0 %2161, %v2129
        %v2163 = vpop.permute.xlu0 %2162
        %2164 = vset.pattern.permute.xlu0 0
        %2165 = vperm.xlu0 %2164, %v2130
        %v2166 = vpop.permute.xlu0 %2165
        %2167 = vset.pattern.permute.xlu0 0
        %2168 = vperm.xlu0 %2167, %v2131
        %v2169 = vpop.permute.xlu0 %2168
        %2170 = vset.pattern.permute.xlu0 0
        %2171 = vperm.xlu0 %2170, %v2132
        %v2172 = vpop.permute.xlu0 %2171
        %2173 = vset.pattern.permute.xlu0 0
        %2174 = vperm.xlu0 %2173, %v2133
        %v2175 = vpop.permute.xlu0 %2174
        %2176 = vset.pattern.permute.xlu0 0
        %2177 = vperm.xlu0 %2176, %v2134
        %v2178 = vpop.permute.xlu0 %2177
        %2179 = vset.pattern.permute.xlu0 0
        %2180 = vperm.xlu0 %2179, %v2135
        %v2181 = vpop.permute.xlu0 %2180
        %2182 = vset.pattern.permute.xlu0 0
        %2183 = vperm.xlu0 %2182, %v2136
        %v2184 = vpop.permute.xlu0 %2183
        %v2185 = vperm.slane %v2139, %v358
        %v2186 = vperm.slane %v2142, %v2032
        %v2187 = vsel %vm2034, %v2186, %v2185
        %v2188 = vperm.slane %v2145, %v358
        %v2189 = vperm.slane %v2148, %v2032
        %v2190 = vsel %vm2034, %v2189, %v2188
        %v2191 = vperm.slane %v2151, %v358
        %v2192 = vperm.slane %v2154, %v2032
        %v2193 = vsel %vm2034, %v2192, %v2191
        %v2194 = vperm.slane %v2157, %v358
        %v2195 = vperm.slane %v2160, %v2032
        %v2196 = vsel %vm2034, %v2195, %v2194
        %v2197 = vperm.slane %v2163, %v358
        %v2198 = vperm.slane %v2166, %v2032
        %v2199 = vsel %vm2034, %v2198, %v2197
        %v2200 = vperm.slane %v2169, %v358
        %v2201 = vperm.slane %v2172, %v2032
        %v2202 = vsel %vm2034, %v2201, %v2200
        %v2203 = vperm.slane %v2175, %v358
        %v2204 = vperm.slane %v2178, %v2032
        %v2205 = vsel %vm2034, %v2204, %v2203
        %v2206 = vperm.slane %v2181, %v358
        %v2207 = vperm.slane %v2184, %v2032
        %v2208 = vsel %vm2034, %v2207, %v2206
        %v2209 = vsel %vm2057, %v2190, %v2187
        %v2210 = vsel %vm2059, %v2193, %v2209
        %v2211 = vsel %vm2061, %v2196, %v2210
        %v2212 = vsel %vm2063, %v2199, %v2211
        %v2213 = vsel %vm2065, %v2202, %v2212
        %v2214 = vsel %vm2067, %v2205, %v2213
        %v2215 = vsel %vm2069, %v2208, %v2214
        %v2216 = vsel %vm2072, %v2215, 2147483647
        %v2217 = vand.u32 %v2216, 65535
        %v2218 = vshra.s32 %v2216, 16
        %v2219 = vcvt.s32.f32 %v2217
        %v2220 = vcvt.s32.f32 %v2218
        %2221 = vmin.xlane.f32.xlu0 %v2220
        %v2222 = vpop.xlane.xlu0 %2221
        %vm2223 = vcmp.eq.f32.partialorder %v2220, %v2222
        %v2224 = vsel %vm2223, %v2219, inf
        %2225 = vmin.xlane.f32.xlu0 %v2224
        %v2226 = vpop.xlane.xlu0 %2225
        %v2227 = vcvt.f32.s32 %v2226
        %v2228 = vcvt.f32.s32 %v2222
        %v2229 = vshll.u32 %v2228, 16
        %v2230 = vadd.s32 %v2229, %v2227
        %v2247 = vperm.slane %v1969, %v358
        %v2248 = vperm.slane %v1972, %v2032
        %v2249 = vsel %vm2034, %v2248, %v2247
        %v2250 = vperm.slane %v1975, %v358
        %v2251 = vperm.slane %v1978, %v2032
        %v2252 = vsel %vm2034, %v2251, %v2250
        %v2253 = vperm.slane %v1981, %v358
        %v2254 = vperm.slane %v1984, %v2032
        %v2255 = vsel %vm2034, %v2254, %v2253
        %v2256 = vperm.slane %v1987, %v358
        %v2257 = vperm.slane %v1990, %v2032
        %v2258 = vsel %vm2034, %v2257, %v2256
        %v2259 = vperm.slane %v1993, %v358
        %v2260 = vperm.slane %v1996, %v2032
        %v2261 = vsel %vm2034, %v2260, %v2259
        %v2262 = vperm.slane %v1999, %v358
        %v2263 = vperm.slane %v2002, %v2032
        %v2264 = vsel %vm2034, %v2263, %v2262
        %v2265 = vperm.slane %v2005, %v358
        %v2266 = vperm.slane %v2008, %v2032
        %v2267 = vsel %vm2034, %v2266, %v2265
        %v2268 = vperm.slane %v2011, %v358
        %v2269 = vperm.slane %v2014, %v2032
        %v2270 = vsel %vm2034, %v2269, %v2268
        %v2271 = vsel %vm2057, %v2252, %v2249
        %v2272 = vsel %vm2059, %v2255, %v2271
        %v2273 = vsel %vm2061, %v2258, %v2272
        %v2274 = vsel %vm2063, %v2261, %v2273
        %v2275 = vsel %vm2065, %v2264, %v2274
        %v2276 = vsel %vm2067, %v2267, %v2275
        %v2277 = vsel %vm2069, %v2270, %v2276
        %v2279 = vsel %vm2072, %v2277, -inf
        %2280 = vmax.xlane.f32.xlu0 %v2279
        %v2281 = vpop.xlane.xlu0 %2280
        %v2283 = vperm.slane %v2281, 0
        %v2284 = vperm.slane %v2281, 1
        %v2285 = vperm.slane %v2281, 2
        %v2286 = vperm.slane %v2281, 3
        %v2287 = vperm.slane %v2281, 4
        %v2288 = vperm.slane %v2281, 5
        %v2289 = vperm.slane %v2281, 6
        %v2290 = vperm.slane %v2281, 7
        %vm2299 = vcmp.eq.f32.partialorder %v1969, %v2283
        %vm2300 = vcmp.eq.f32.partialorder %v1972, %v2283
        %vm2301 = vcmp.eq.f32.partialorder %v1975, %v2284
        %vm2302 = vcmp.eq.f32.partialorder %v1978, %v2284
        %vm2303 = vcmp.eq.f32.partialorder %v1981, %v2285
        %vm2304 = vcmp.eq.f32.partialorder %v1984, %v2285
        %vm2305 = vcmp.eq.f32.partialorder %v1987, %v2286
        %vm2306 = vcmp.eq.f32.partialorder %v1990, %v2286
        %vm2307 = vcmp.eq.f32.partialorder %v1993, %v2287
        %vm2308 = vcmp.eq.f32.partialorder %v1996, %v2287
        %vm2309 = vcmp.eq.f32.partialorder %v1999, %v2288
        %vm2310 = vcmp.eq.f32.partialorder %v2002, %v2288
        %vm2311 = vcmp.eq.f32.partialorder %v2005, %v2289
        %vm2312 = vcmp.eq.f32.partialorder %v2008, %v2289
        %vm2313 = vcmp.eq.f32.partialorder %v2011, %v2290
        %vm2314 = vcmp.eq.f32.partialorder %v2014, %v2290
        %v2315 = vsel %vm2299, %v2114, 2147483647
        %v2316 = vsel %vm2300, %v2120, 2147483647
        %v2317 = vsel %vm2301, %v2114, 2147483647
        %v2318 = vsel %vm2302, %v2120, 2147483647
        %v2319 = vsel %vm2303, %v2114, 2147483647
        %v2320 = vsel %vm2304, %v2120, 2147483647
        %v2321 = vsel %vm2305, %v2114, 2147483647
        %v2322 = vsel %vm2306, %v2120, 2147483647
        %v2323 = vsel %vm2307, %v2114, 2147483647
        %v2324 = vsel %vm2308, %v2120, 2147483647
        %v2325 = vsel %vm2309, %v2114, 2147483647
        %v2326 = vsel %vm2310, %v2120, 2147483647
        %v2327 = vsel %vm2311, %v2114, 2147483647
        %v2328 = vsel %vm2312, %v2120, 2147483647
        %v2329 = vsel %vm2313, %v2114, 2147483647
        %v2330 = vsel %vm2314, %v2120, 2147483647
        %2331 = vset.pattern.permute.xlu0 0
        %2332 = vperm.xlu0 %2331, %v2315
        %v2333 = vpop.permute.xlu0 %2332
        %2334 = vset.pattern.permute.xlu0 0
        %2335 = vperm.xlu0 %2334, %v2316
        %v2336 = vpop.permute.xlu0 %2335
        %2337 = vset.pattern.permute.xlu0 0
        %2338 = vperm.xlu0 %2337, %v2317
        %v2339 = vpop.permute.xlu0 %2338
        %2340 = vset.pattern.permute.xlu0 0
        %2341 = vperm.xlu0 %2340, %v2318
        %v2342 = vpop.permute.xlu0 %2341
        %2343 = vset.pattern.permute.xlu0 0
        %2344 = vperm.xlu0 %2343, %v2319
        %v2345 = vpop.permute.xlu0 %2344
        %2346 = vset.pattern.permute.xlu0 0
        %2347 = vperm.xlu0 %2346, %v2320
        %v2348 = vpop.permute.xlu0 %2347
        %2349 = vset.pattern.permute.xlu0 0
        %2350 = vperm.xlu0 %2349, %v2321
        %v2351 = vpop.permute.xlu0 %2350
        %2352 = vset.pattern.permute.xlu0 0
        %2353 = vperm.xlu0 %2352, %v2322
        %v2354 = vpop.permute.xlu0 %2353
        %2355 = vset.pattern.permute.xlu0 0
        %2356 = vperm.xlu0 %2355, %v2323
        %v2357 = vpop.permute.xlu0 %2356
        %2358 = vset.pattern.permute.xlu0 0
        %2359 = vperm.xlu0 %2358, %v2324
        %v2360 = vpop.permute.xlu0 %2359
        %2361 = vset.pattern.permute.xlu0 0
        %2362 = vperm.xlu0 %2361, %v2325
        %v2363 = vpop.permute.xlu0 %2362
        %2364 = vset.pattern.permute.xlu0 0
        %2365 = vperm.xlu0 %2364, %v2326
        %v2366 = vpop.permute.xlu0 %2365
        %2367 = vset.pattern.permute.xlu0 0
        %2368 = vperm.xlu0 %2367, %v2327
        %v2369 = vpop.permute.xlu0 %2368
        %2370 = vset.pattern.permute.xlu0 0
        %2371 = vperm.xlu0 %2370, %v2328
        %v2372 = vpop.permute.xlu0 %2371
        %2373 = vset.pattern.permute.xlu0 0
        %2374 = vperm.xlu0 %2373, %v2329
        %v2375 = vpop.permute.xlu0 %2374
        %2376 = vset.pattern.permute.xlu0 0
        %2377 = vperm.xlu0 %2376, %v2330
        %v2378 = vpop.permute.xlu0 %2377
        %v2379 = vperm.slane %v2333, %v358
        %v2380 = vperm.slane %v2336, %v2032
        %v2381 = vsel %vm2034, %v2380, %v2379
        %v2382 = vperm.slane %v2339, %v358
        %v2383 = vperm.slane %v2342, %v2032
        %v2384 = vsel %vm2034, %v2383, %v2382
        %v2385 = vperm.slane %v2345, %v358
        %v2386 = vperm.slane %v2348, %v2032
        %v2387 = vsel %vm2034, %v2386, %v2385
        %v2388 = vperm.slane %v2351, %v358
        %v2389 = vperm.slane %v2354, %v2032
        %v2390 = vsel %vm2034, %v2389, %v2388
        %v2391 = vperm.slane %v2357, %v358
        %v2392 = vperm.slane %v2360, %v2032
        %v2393 = vsel %vm2034, %v2392, %v2391
        %v2394 = vperm.slane %v2363, %v358
        %v2395 = vperm.slane %v2366, %v2032
        %v2396 = vsel %vm2034, %v2395, %v2394
        %v2397 = vperm.slane %v2369, %v358
        %v2398 = vperm.slane %v2372, %v2032
        %v2399 = vsel %vm2034, %v2398, %v2397
        %v2400 = vperm.slane %v2375, %v358
        %v2401 = vperm.slane %v2378, %v2032
        %v2402 = vsel %vm2034, %v2401, %v2400
        %v2403 = vsel %vm2057, %v2384, %v2381
        %v2404 = vsel %vm2059, %v2387, %v2403
        %v2405 = vsel %vm2061, %v2390, %v2404
        %v2406 = vsel %vm2063, %v2393, %v2405
        %v2407 = vsel %vm2065, %v2396, %v2406
        %v2408 = vsel %vm2067, %v2399, %v2407
        %v2409 = vsel %vm2069, %v2402, %v2408
        %v2410 = vsel %vm2072, %v2409, 2147483647
        %v2411 = vand.u32 %v2410, 65535
        %v2412 = vshra.s32 %v2410, 16
        %v2413 = vcvt.s32.f32 %v2411
        %v2414 = vcvt.s32.f32 %v2412
        %2415 = vmin.xlane.f32.xlu0 %v2414
        %v2416 = vpop.xlane.xlu0 %2415
        %vm2417 = vcmp.eq.f32.partialorder %v2414, %v2416
        %v2418 = vsel %vm2417, %v2413, inf
        %2419 = vmin.xlane.f32.xlu0 %v2418
        %v2420 = vpop.xlane.xlu0 %2419
        %v2421 = vcvt.f32.s32 %v2420
        %v2422 = vcvt.f32.s32 %v2416
        %v2423 = vshll.u32 %v2422, 16
        %v2424 = vadd.s32 %v2423, %v2421
        %v2425 = vsub.f32 %v1246, %v2077
        %v2426 = vsub.f32 %v1249, %v2077
        %v2427 = vsub.f32 %v1252, %v2078
        %v2428 = vsub.f32 %v1255, %v2078
        %v2429 = vsub.f32 %v1258, %v2079
        %v2430 = vsub.f32 %v1261, %v2079
        %v2431 = vsub.f32 %v1264, %v2080
        %v2432 = vsub.f32 %v1267, %v2080
        %v2433 = vsub.f32 %v1270, %v2081
        %v2434 = vsub.f32 %v1273, %v2081
        %v2435 = vsub.f32 %v1276, %v2082
        %v2436 = vsub.f32 %v1279, %v2082
        %v2437 = vsub.f32 %v1282, %v2083
        %v2438 = vsub.f32 %v1285, %v2083
        %v2439 = vsub.f32 %v1288, %v2084
        %v2440 = vsub.f32 %v1291, %v2084
        %v2441 = vmul.f32 %v2425, 1.442695
        %v2442 = vpow.pop %v2441
        %v2443 = vmul.f32 %v2426, 1.442695
        %v2444 = vpow.pop %v2443
        %v2445 = vmul.f32 %v2427, 1.442695
        %v2446 = vpow.pop %v2445
        %v2447 = vmul.f32 %v2428, 1.442695
        %v2448 = vpow.pop %v2447
        %v2449 = vmul.f32 %v2429, 1.442695
        %v2450 = vpow.pop %v2449
        %v2451 = vmul.f32 %v2430, 1.442695
        %v2452 = vpow.pop %v2451
        %v2453 = vmul.f32 %v2431, 1.442695
        %v2454 = vpow.pop %v2453
        %v2455 = vmul.f32 %v2432, 1.442695
        %v2456 = vpow.pop %v2455
        %v2457 = vmul.f32 %v2433, 1.442695
        %v2458 = vpow.pop %v2457
        %v2459 = vmul.f32 %v2434, 1.442695
        %v2460 = vpow.pop %v2459
        %v2461 = vmul.f32 %v2435, 1.442695
        %v2462 = vpow.pop %v2461
        %v2463 = vmul.f32 %v2436, 1.442695
        %v2464 = vpow.pop %v2463
        %v2465 = vmul.f32 %v2437, 1.442695
        %v2466 = vpow.pop %v2465
        %v2467 = vmul.f32 %v2438, 1.442695
        %v2468 = vpow.pop %v2467
        %v2469 = vmul.f32 %v2439, 1.442695
        %v2470 = vpow.pop %v2469
        %v2471 = vmul.f32 %v2440, 1.442695
        %v2472 = vpow.pop %v2471
        %2489 = vset.pattern.permute.xlu0 0
        %2490 = vperm.xlu0 %2489, %v2442
        %v2491 = vpop.permute.xlu0 %2490
        %2492 = vset.pattern.permute.xlu0 0
        %2493 = vperm.xlu0 %2492, %v2444
        %v2494 = vpop.permute.xlu0 %2493
        %2495 = vset.pattern.permute.xlu0 0
        %2496 = vperm.xlu0 %2495, %v2446
        %v2497 = vpop.permute.xlu0 %2496
        %2498 = vset.pattern.permute.xlu0 0
        %2499 = vperm.xlu0 %2498, %v2448
        %v2500 = vpop.permute.xlu0 %2499
        %2501 = vset.pattern.permute.xlu0 0
        %2502 = vperm.xlu0 %2501, %v2450
        %v2503 = vpop.permute.xlu0 %2502
        %2504 = vset.pattern.permute.xlu0 0
        %2505 = vperm.xlu0 %2504, %v2452
        %v2506 = vpop.permute.xlu0 %2505
        %2507 = vset.pattern.permute.xlu0 0
        %2508 = vperm.xlu0 %2507, %v2454
        %v2509 = vpop.permute.xlu0 %2508
        %2510 = vset.pattern.permute.xlu0 0
        %2511 = vperm.xlu0 %2510, %v2456
        %v2512 = vpop.permute.xlu0 %2511
        %2513 = vset.pattern.permute.xlu0 0
        %2514 = vperm.xlu0 %2513, %v2458
        %v2515 = vpop.permute.xlu0 %2514
        %2516 = vset.pattern.permute.xlu0 0
        %2517 = vperm.xlu0 %2516, %v2460
        %v2518 = vpop.permute.xlu0 %2517
        %2519 = vset.pattern.permute.xlu0 0
        %2520 = vperm.xlu0 %2519, %v2462
        %v2521 = vpop.permute.xlu0 %2520
        %2522 = vset.pattern.permute.xlu0 0
        %2523 = vperm.xlu0 %2522, %v2464
        %v2524 = vpop.permute.xlu0 %2523
        %2525 = vset.pattern.permute.xlu0 0
        %2526 = vperm.xlu0 %2525, %v2466
        %v2527 = vpop.permute.xlu0 %2526
        %2528 = vset.pattern.permute.xlu0 0
        %2529 = vperm.xlu0 %2528, %v2468
        %v2530 = vpop.permute.xlu0 %2529
        %2531 = vset.pattern.permute.xlu0 0
        %2532 = vperm.xlu0 %2531, %v2470
        %v2533 = vpop.permute.xlu0 %2532
        %2534 = vset.pattern.permute.xlu0 0
        %2535 = vperm.xlu0 %2534, %v2472
        %v2536 = vpop.permute.xlu0 %2535
        %v2537 = vperm.slane %v2491, %v358
        %v2538 = vperm.slane %v2494, %v2032
        %v2539 = vsel %vm2034, %v2538, %v2537
        %v2540 = vperm.slane %v2497, %v358
        %v2541 = vperm.slane %v2500, %v2032
        %v2542 = vsel %vm2034, %v2541, %v2540
        %v2543 = vperm.slane %v2503, %v358
        %v2544 = vperm.slane %v2506, %v2032
        %v2545 = vsel %vm2034, %v2544, %v2543
        %v2546 = vperm.slane %v2509, %v358
        %v2547 = vperm.slane %v2512, %v2032
        %v2548 = vsel %vm2034, %v2547, %v2546
        %v2549 = vperm.slane %v2515, %v358
        %v2550 = vperm.slane %v2518, %v2032
        %v2551 = vsel %vm2034, %v2550, %v2549
        %v2552 = vperm.slane %v2521, %v358
        %v2553 = vperm.slane %v2524, %v2032
        %v2554 = vsel %vm2034, %v2553, %v2552
        %v2555 = vperm.slane %v2527, %v358
        %v2556 = vperm.slane %v2530, %v2032
        %v2557 = vsel %vm2034, %v2556, %v2555
        %v2558 = vperm.slane %v2533, %v358
        %v2559 = vperm.slane %v2536, %v2032
        %v2560 = vsel %vm2034, %v2559, %v2558
        %v2561 = vsel %vm2057, %v2542, %v2539
        %v2562 = vsel %vm2059, %v2545, %v2561
        %v2563 = vsel %vm2061, %v2548, %v2562
        %v2564 = vsel %vm2063, %v2551, %v2563
        %v2565 = vsel %vm2065, %v2554, %v2564
        %v2566 = vsel %vm2067, %v2557, %v2565
        %v2567 = vsel %vm2069, %v2560, %v2566
        %v2569 = vsel %vm2072, %v2567, 0.0
        %2570 = vadd.xlane.f32.xlu0 %v2569
        %v2571 = vpop.xlane.xlu0 %2570
        %v2573 = vperm.slane %v2571, 0
        %v2574 = vperm.slane %v2571, 1
        %v2575 = vperm.slane %v2571, 2
        %v2576 = vperm.slane %v2571, 3
        %v2577 = vperm.slane %v2571, 4
        %v2578 = vperm.slane %v2571, 5
        %v2579 = vperm.slane %v2571, 6
        %v2580 = vperm.slane %v2571, 7
        %v2589 = vrcp.pop %v2573
        %v2590 = vmul.f32 %v2573, %v2589
        %v2591 = vsub.f32 1.0, %v2590
        %v2592 = vmul.f32 %v2589, %v2591
        %v2593 = vadd.f32 %v2589, %v2592
        %vm2594 = vweird.f32 %v2573
        %vm2595 = vweird.f32 %v2589
        %vm2596 = vmor %vm2594, %vm2595
        %v2597 = vsel %vm2596, %v2589, %v2593
        %v2598 = vand.u32 2147483647, %v2573
        %vm2599 = vcmp.eq.f32.partialorder %v2598, 8.507059e+37
        %v2600 = vand.u32 %v2573, 2147483648
        %v2601 = vor.u32 1.1754944e-38, %v2600
        %v2602 = vsel %vm2599, %v2601, %v2597
        %v2603 = vmul.f32 %v2442, %v2602
        %v2604 = vmul.f32 %v2444, %v2602
        %v2605 = vrcp.pop %v2574
        %v2606 = vmul.f32 %v2574, %v2605
        %v2607 = vsub.f32 1.0, %v2606
        %v2608 = vmul.f32 %v2605, %v2607
        %v2609 = vadd.f32 %v2605, %v2608
        %vm2610 = vweird.f32 %v2574
        %vm2611 = vweird.f32 %v2605
        %vm2612 = vmor %vm2610, %vm2611
        %v2613 = vsel %vm2612, %v2605, %v2609
        %v2614 = vand.u32 2147483647, %v2574
        %vm2615 = vcmp.eq.f32.partialorder %v2614, 8.507059e+37
        %v2616 = vand.u32 %v2574, 2147483648
        %v2617 = vor.u32 1.1754944e-38, %v2616
        %v2618 = vsel %vm2615, %v2617, %v2613
        %v2619 = vmul.f32 %v2446, %v2618
        %v2620 = vmul.f32 %v2448, %v2618
        %v2621 = vrcp.pop %v2575
        %v2622 = vmul.f32 %v2575, %v2621
        %v2623 = vsub.f32 1.0, %v2622
        %v2624 = vmul.f32 %v2621, %v2623
        %v2625 = vadd.f32 %v2621, %v2624
        %vm2626 = vweird.f32 %v2575
        %vm2627 = vweird.f32 %v2621
        %vm2628 = vmor %vm2626, %vm2627
        %v2629 = vsel %vm2628, %v2621, %v2625
        %v2630 = vand.u32 2147483647, %v2575
        %vm2631 = vcmp.eq.f32.partialorder %v2630, 8.507059e+37
        %v2632 = vand.u32 %v2575, 2147483648
        %v2633 = vor.u32 1.1754944e-38, %v2632
        %v2634 = vsel %vm2631, %v2633, %v2629
        %v2635 = vmul.f32 %v2450, %v2634
        %v2636 = vmul.f32 %v2452, %v2634
        %v2637 = vrcp.pop %v2576
        %v2638 = vmul.f32 %v2576, %v2637
        %v2639 = vsub.f32 1.0, %v2638
        %v2640 = vmul.f32 %v2637, %v2639
        %v2641 = vadd.f32 %v2637, %v2640
        %vm2642 = vweird.f32 %v2576
        %vm2643 = vweird.f32 %v2637
        %vm2644 = vmor %vm2642, %vm2643
        %v2645 = vsel %vm2644, %v2637, %v2641
        %v2646 = vand.u32 2147483647, %v2576
        %vm2647 = vcmp.eq.f32.partialorder %v2646, 8.507059e+37
        %v2648 = vand.u32 %v2576, 2147483648
        %v2649 = vor.u32 1.1754944e-38, %v2648
        %v2650 = vsel %vm2647, %v2649, %v2645
        %v2651 = vmul.f32 %v2454, %v2650
        %v2652 = vmul.f32 %v2456, %v2650
        %v2653 = vrcp.pop %v2577
        %v2654 = vmul.f32 %v2577, %v2653
        %v2655 = vsub.f32 1.0, %v2654
        %v2656 = vmul.f32 %v2653, %v2655
        %v2657 = vadd.f32 %v2653, %v2656
        %vm2658 = vweird.f32 %v2577
        %vm2659 = vweird.f32 %v2653
        %vm2660 = vmor %vm2658, %vm2659
        %v2661 = vsel %vm2660, %v2653, %v2657
        %v2662 = vand.u32 2147483647, %v2577
        %vm2663 = vcmp.eq.f32.partialorder %v2662, 8.507059e+37
        %v2664 = vand.u32 %v2577, 2147483648
        %v2665 = vor.u32 1.1754944e-38, %v2664
        %v2666 = vsel %vm2663, %v2665, %v2661
        %v2667 = vmul.f32 %v2458, %v2666
        %v2668 = vmul.f32 %v2460, %v2666
        %v2669 = vrcp.pop %v2578
        %v2670 = vmul.f32 %v2578, %v2669
        %v2671 = vsub.f32 1.0, %v2670
        %v2672 = vmul.f32 %v2669, %v2671
        %v2673 = vadd.f32 %v2669, %v2672
        %vm2674 = vweird.f32 %v2578
        %vm2675 = vweird.f32 %v2669
        %vm2676 = vmor %vm2674, %vm2675
        %v2677 = vsel %vm2676, %v2669, %v2673
        %v2678 = vand.u32 2147483647, %v2578
        %vm2679 = vcmp.eq.f32.partialorder %v2678, 8.507059e+37
        %v2680 = vand.u32 %v2578, 2147483648
        %v2681 = vor.u32 1.1754944e-38, %v2680
        %v2682 = vsel %vm2679, %v2681, %v2677
        %v2683 = vmul.f32 %v2462, %v2682
        %v2684 = vmul.f32 %v2464, %v2682
        %v2685 = vrcp.pop %v2579
        %v2686 = vmul.f32 %v2579, %v2685
        %v2687 = vsub.f32 1.0, %v2686
        %v2688 = vmul.f32 %v2685, %v2687
        %v2689 = vadd.f32 %v2685, %v2688
        %vm2690 = vweird.f32 %v2579
        %vm2691 = vweird.f32 %v2685
        %vm2692 = vmor %vm2690, %vm2691
        %v2693 = vsel %vm2692, %v2685, %v2689
        %v2694 = vand.u32 2147483647, %v2579
        %vm2695 = vcmp.eq.f32.partialorder %v2694, 8.507059e+37
        %v2696 = vand.u32 %v2579, 2147483648
        %v2697 = vor.u32 1.1754944e-38, %v2696
        %v2698 = vsel %vm2695, %v2697, %v2693
        %v2699 = vmul.f32 %v2466, %v2698
        %v2700 = vmul.f32 %v2468, %v2698
        %v2701 = vrcp.pop %v2580
        %v2702 = vmul.f32 %v2580, %v2701
        %v2703 = vsub.f32 1.0, %v2702
        %v2704 = vmul.f32 %v2701, %v2703
        %v2705 = vadd.f32 %v2701, %v2704
        %vm2706 = vweird.f32 %v2580
        %vm2707 = vweird.f32 %v2701
        %vm2708 = vmor %vm2706, %vm2707
        %v2709 = vsel %vm2708, %v2701, %v2705
        %v2710 = vand.u32 2147483647, %v2580
        %vm2711 = vcmp.eq.f32.partialorder %v2710, 8.507059e+37
        %v2712 = vand.u32 %v2580, 2147483648
        %v2713 = vor.u32 1.1754944e-38, %v2712
        %v2714 = vsel %vm2711, %v2713, %v2709
        %v2715 = vmul.f32 %v2470, %v2714
        %v2716 = vmul.f32 %v2472, %v2714
        %v2717 = vsub.f32 %v1969, %v2283
        %v2718 = vsub.f32 %v1972, %v2283
        %v2719 = vsub.f32 %v1975, %v2284
        %v2720 = vsub.f32 %v1978, %v2284
        %v2721 = vsub.f32 %v1981, %v2285
        %v2722 = vsub.f32 %v1984, %v2285
        %v2723 = vsub.f32 %v1987, %v2286
        %v2724 = vsub.f32 %v1990, %v2286
        %v2725 = vsub.f32 %v1993, %v2287
        %v2726 = vsub.f32 %v1996, %v2287
        %v2727 = vsub.f32 %v1999, %v2288
        %v2728 = vsub.f32 %v2002, %v2288
        %v2729 = vsub.f32 %v2005, %v2289
        %v2730 = vsub.f32 %v2008, %v2289
        %v2731 = vsub.f32 %v2011, %v2290
        %v2732 = vsub.f32 %v2014, %v2290
        %v2733 = vmul.f32 %v2717, 1.442695
        %v2734 = vpow.pop %v2733
        %v2735 = vmul.f32 %v2718, 1.442695
        %v2736 = vpow.pop %v2735
        %v2737 = vmul.f32 %v2719, 1.442695
        %v2738 = vpow.pop %v2737
        %v2739 = vmul.f32 %v2720, 1.442695
        %v2740 = vpow.pop %v2739
        %v2741 = vmul.f32 %v2721, 1.442695
        %v2742 = vpow.pop %v2741
        %v2743 = vmul.f32 %v2722, 1.442695
        %v2744 = vpow.pop %v2743
        %v2745 = vmul.f32 %v2723, 1.442695
        %v2746 = vpow.pop %v2745
        %v2747 = vmul.f32 %v2724, 1.442695
        %v2748 = vpow.pop %v2747
        %v2749 = vmul.f32 %v2725, 1.442695
        %v2750 = vpow.pop %v2749
        %v2751 = vmul.f32 %v2726, 1.442695
        %v2752 = vpow.pop %v2751
        %v2753 = vmul.f32 %v2727, 1.442695
        %v2754 = vpow.pop %v2753
        %v2755 = vmul.f32 %v2728, 1.442695
        %v2756 = vpow.pop %v2755
        %v2757 = vmul.f32 %v2729, 1.442695
        %v2758 = vpow.pop %v2757
        %v2759 = vmul.f32 %v2730, 1.442695
        %v2760 = vpow.pop %v2759
        %v2761 = vmul.f32 %v2731, 1.442695
        %v2762 = vpow.pop %v2761
        %v2763 = vmul.f32 %v2732, 1.442695
        %v2764 = vpow.pop %v2763
        %2781 = vset.pattern.permute.xlu0 0
        %2782 = vperm.xlu0 %2781, %v2734
        %v2783 = vpop.permute.xlu0 %2782
        %2784 = vset.pattern.permute.xlu0 0
        %2785 = vperm.xlu0 %2784, %v2736
        %v2786 = vpop.permute.xlu0 %2785
        %2787 = vset.pattern.permute.xlu0 0
        %2788 = vperm.xlu0 %2787, %v2738
        %v2789 = vpop.permute.xlu0 %2788
        %2790 = vset.pattern.permute.xlu0 0
        %2791 = vperm.xlu0 %2790, %v2740
        %v2792 = vpop.permute.xlu0 %2791
        %2793 = vset.pattern.permute.xlu0 0
        %2794 = vperm.xlu0 %2793, %v2742
        %v2795 = vpop.permute.xlu0 %2794
        %2796 = vset.pattern.permute.xlu0 0
        %2797 = vperm.xlu0 %2796, %v2744
        %v2798 = vpop.permute.xlu0 %2797
        %2799 = vset.pattern.permute.xlu0 0
        %2800 = vperm.xlu0 %2799, %v2746
        %v2801 = vpop.permute.xlu0 %2800
        %2802 = vset.pattern.permute.xlu0 0
        %2803 = vperm.xlu0 %2802, %v2748
        %v2804 = vpop.permute.xlu0 %2803
        %2805 = vset.pattern.permute.xlu0 0
        %2806 = vperm.xlu0 %2805, %v2750
        %v2807 = vpop.permute.xlu0 %2806
        %2808 = vset.pattern.permute.xlu0 0
        %2809 = vperm.xlu0 %2808, %v2752
        %v2810 = vpop.permute.xlu0 %2809
        %2811 = vset.pattern.permute.xlu0 0
        %2812 = vperm.xlu0 %2811, %v2754
        %v2813 = vpop.permute.xlu0 %2812
        %2814 = vset.pattern.permute.xlu0 0
        %2815 = vperm.xlu0 %2814, %v2756
        %v2816 = vpop.permute.xlu0 %2815
        %2817 = vset.pattern.permute.xlu0 0
        %2818 = vperm.xlu0 %2817, %v2758
        %v2819 = vpop.permute.xlu0 %2818
        %2820 = vset.pattern.permute.xlu0 0
        %2821 = vperm.xlu0 %2820, %v2760
        %v2822 = vpop.permute.xlu0 %2821
        %2823 = vset.pattern.permute.xlu0 0
        %2824 = vperm.xlu0 %2823, %v2762
        %v2825 = vpop.permute.xlu0 %2824
        %2826 = vset.pattern.permute.xlu0 0
        %2827 = vperm.xlu0 %2826, %v2764
        %v2828 = vpop.permute.xlu0 %2827
        %v2829 = vperm.slane %v2783, %v358
        %v2830 = vperm.slane %v2786, %v2032
        %v2831 = vsel %vm2034, %v2830, %v2829
        %v2832 = vperm.slane %v2789, %v358
        %v2833 = vperm.slane %v2792, %v2032
        %v2834 = vsel %vm2034, %v2833, %v2832
        %v2835 = vperm.slane %v2795, %v358
        %v2836 = vperm.slane %v2798, %v2032
        %v2837 = vsel %vm2034, %v2836, %v2835
        %v2838 = vperm.slane %v2801, %v358
        %v2839 = vperm.slane %v2804, %v2032
        %v2840 = vsel %vm2034, %v2839, %v2838
        %v2841 = vperm.slane %v2807, %v358
        %v2842 = vperm.slane %v2810, %v2032
        %v2843 = vsel %vm2034, %v2842, %v2841
        %v2844 = vperm.slane %v2813, %v358
        %v2845 = vperm.slane %v2816, %v2032
        %v2846 = vsel %vm2034, %v2845, %v2844
        %v2847 = vperm.slane %v2819, %v358
        %v2848 = vperm.slane %v2822, %v2032
        %v2849 = vsel %vm2034, %v2848, %v2847
        %v2850 = vperm.slane %v2825, %v358
        %v2851 = vperm.slane %v2828, %v2032
        %v2852 = vsel %vm2034, %v2851, %v2850
        %v2853 = vsel %vm2057, %v2834, %v2831
        %v2854 = vsel %vm2059, %v2837, %v2853
        %v2855 = vsel %vm2061, %v2840, %v2854
        %v2856 = vsel %vm2063, %v2843, %v2855
        %v2857 = vsel %vm2065, %v2846, %v2856
        %v2858 = vsel %vm2067, %v2849, %v2857
        %v2859 = vsel %vm2069, %v2852, %v2858
        %v2861 = vsel %vm2072, %v2859, 0.0
        %2862 = vadd.xlane.f32.xlu0 %v2861
        %v2863 = vpop.xlane.xlu0 %2862
        %v2865 = vperm.slane %v2863, 0
        %v2866 = vperm.slane %v2863, 1
        %v2867 = vperm.slane %v2863, 2
        %v2868 = vperm.slane %v2863, 3
        %v2869 = vperm.slane %v2863, 4
        %v2870 = vperm.slane %v2863, 5
        %v2871 = vperm.slane %v2863, 6
        %v2872 = vperm.slane %v2863, 7
        %v2881 = vrcp.pop %v2865
        %v2882 = vmul.f32 %v2865, %v2881
        %v2883 = vsub.f32 1.0, %v2882
        %v2884 = vmul.f32 %v2881, %v2883
        %v2885 = vadd.f32 %v2881, %v2884
        %vm2886 = vweird.f32 %v2865
        %vm2887 = vweird.f32 %v2881
        %vm2888 = vmor %vm2886, %vm2887
        %v2889 = vsel %vm2888, %v2881, %v2885
        %v2890 = vand.u32 2147483647, %v2865
        %vm2891 = vcmp.eq.f32.partialorder %v2890, 8.507059e+37
        %v2892 = vand.u32 %v2865, 2147483648
        %v2893 = vor.u32 1.1754944e-38, %v2892
        %v2894 = vsel %vm2891, %v2893, %v2889
        %v2895 = vmul.f32 %v2734, %v2894
        %v2896 = vmul.f32 %v2736, %v2894
        %v2897 = vrcp.pop %v2866
        %v2898 = vmul.f32 %v2866, %v2897
        %v2899 = vsub.f32 1.0, %v2898
        %v2900 = vmul.f32 %v2897, %v2899
        %v2901 = vadd.f32 %v2897, %v2900
        %vm2902 = vweird.f32 %v2866
        %vm2903 = vweird.f32 %v2897
        %vm2904 = vmor %vm2902, %vm2903
        %v2905 = vsel %vm2904, %v2897, %v2901
        %v2906 = vand.u32 2147483647, %v2866
        %vm2907 = vcmp.eq.f32.partialorder %v2906, 8.507059e+37
        %v2908 = vand.u32 %v2866, 2147483648
        %v2909 = vor.u32 1.1754944e-38, %v2908
        %v2910 = vsel %vm2907, %v2909, %v2905
        %v2911 = vmul.f32 %v2738, %v2910
        %v2912 = vmul.f32 %v2740, %v2910
        %v2913 = vrcp.pop %v2867
        %v2914 = vmul.f32 %v2867, %v2913
        %v2915 = vsub.f32 1.0, %v2914
        %v2916 = vmul.f32 %v2913, %v2915
        %v2917 = vadd.f32 %v2913, %v2916
        %vm2918 = vweird.f32 %v2867
        %vm2919 = vweird.f32 %v2913
        %vm2920 = vmor %vm2918, %vm2919
        %v2921 = vsel %vm2920, %v2913, %v2917
        %v2922 = vand.u32 2147483647, %v2867
        %vm2923 = vcmp.eq.f32.partialorder %v2922, 8.507059e+37
        %v2924 = vand.u32 %v2867, 2147483648
        %v2925 = vor.u32 1.1754944e-38, %v2924
        %v2926 = vsel %vm2923, %v2925, %v2921
        %v2927 = vmul.f32 %v2742, %v2926
        %v2928 = vmul.f32 %v2744, %v2926
        %v2929 = vrcp.pop %v2868
        %v2930 = vmul.f32 %v2868, %v2929
        %v2931 = vsub.f32 1.0, %v2930
        %v2932 = vmul.f32 %v2929, %v2931
        %v2933 = vadd.f32 %v2929, %v2932
        %vm2934 = vweird.f32 %v2868
        %vm2935 = vweird.f32 %v2929
        %vm2936 = vmor %vm2934, %vm2935
        %v2937 = vsel %vm2936, %v2929, %v2933
        %v2938 = vand.u32 2147483647, %v2868
        %vm2939 = vcmp.eq.f32.partialorder %v2938, 8.507059e+37
        %v2940 = vand.u32 %v2868, 2147483648
        %v2941 = vor.u32 1.1754944e-38, %v2940
        %v2942 = vsel %vm2939, %v2941, %v2937
        %v2943 = vmul.f32 %v2746, %v2942
        %v2944 = vmul.f32 %v2748, %v2942
        %v2945 = vrcp.pop %v2869
        %v2946 = vmul.f32 %v2869, %v2945
        %v2947 = vsub.f32 1.0, %v2946
        %v2948 = vmul.f32 %v2945, %v2947
        %v2949 = vadd.f32 %v2945, %v2948
        %vm2950 = vweird.f32 %v2869
        %vm2951 = vweird.f32 %v2945
        %vm2952 = vmor %vm2950, %vm2951
        %v2953 = vsel %vm2952, %v2945, %v2949
        %v2954 = vand.u32 2147483647, %v2869
        %vm2955 = vcmp.eq.f32.partialorder %v2954, 8.507059e+37
        %v2956 = vand.u32 %v2869, 2147483648
        %v2957 = vor.u32 1.1754944e-38, %v2956
        %v2958 = vsel %vm2955, %v2957, %v2953
        %v2959 = vmul.f32 %v2750, %v2958
        %v2960 = vmul.f32 %v2752, %v2958
        %v2961 = vrcp.pop %v2870
        %v2962 = vmul.f32 %v2870, %v2961
        %v2963 = vsub.f32 1.0, %v2962
        %v2964 = vmul.f32 %v2961, %v2963
        %v2965 = vadd.f32 %v2961, %v2964
        %vm2966 = vweird.f32 %v2870
        %vm2967 = vweird.f32 %v2961
        %vm2968 = vmor %vm2966, %vm2967
        %v2969 = vsel %vm2968, %v2961, %v2965
        %v2970 = vand.u32 2147483647, %v2870
        %vm2971 = vcmp.eq.f32.partialorder %v2970, 8.507059e+37
        %v2972 = vand.u32 %v2870, 2147483648
        %v2973 = vor.u32 1.1754944e-38, %v2972
        %v2974 = vsel %vm2971, %v2973, %v2969
        %v2975 = vmul.f32 %v2754, %v2974
        %v2976 = vmul.f32 %v2756, %v2974
        %v2977 = vrcp.pop %v2871
        %v2978 = vmul.f32 %v2871, %v2977
        %v2979 = vsub.f32 1.0, %v2978
        %v2980 = vmul.f32 %v2977, %v2979
        %v2981 = vadd.f32 %v2977, %v2980
        %vm2982 = vweird.f32 %v2871
        %vm2983 = vweird.f32 %v2977
        %vm2984 = vmor %vm2982, %vm2983
        %v2985 = vsel %vm2984, %v2977, %v2981
        %v2986 = vand.u32 2147483647, %v2871
        %vm2987 = vcmp.eq.f32.partialorder %v2986, 8.507059e+37
        %v2988 = vand.u32 %v2871, 2147483648
        %v2989 = vor.u32 1.1754944e-38, %v2988
        %v2990 = vsel %vm2987, %v2989, %v2985
        %v2991 = vmul.f32 %v2758, %v2990
        %v2992 = vmul.f32 %v2760, %v2990
        %v2993 = vrcp.pop %v2872
        %v2994 = vmul.f32 %v2872, %v2993
        %v2995 = vsub.f32 1.0, %v2994
        %v2996 = vmul.f32 %v2993, %v2995
        %v2997 = vadd.f32 %v2993, %v2996
        %vm2998 = vweird.f32 %v2872
        %vm2999 = vweird.f32 %v2993
        %vm3000 = vmor %vm2998, %vm2999
        %v3001 = vsel %vm3000, %v2993, %v2997
        %v3002 = vand.u32 2147483647, %v2872
        %vm3003 = vcmp.eq.f32.partialorder %v3002, 8.507059e+37
        %v3004 = vand.u32 %v2872, 2147483648
        %v3005 = vor.u32 1.1754944e-38, %v3004
        %v3006 = vsel %vm3003, %v3005, %v3001
        %v3007 = vmul.f32 %v2762, %v3006
        %v3008 = vmul.f32 %v2764, %v3006
        %3009 = vst.msk [vmem:[%s302] sm:$0xff] %vm528, %v526
        %3026 = vset.pattern.permute.xlu0 0
        %3027 = vperm.xlu0 %3026, %v2603
        %v3028 = vpop.permute.xlu0 %3027
        %3029 = vset.pattern.permute.xlu0 0
        %3030 = vperm.xlu0 %3029, %v2604
        %v3031 = vpop.permute.xlu0 %3030
        %3032 = vset.pattern.permute.xlu0 0
        %3033 = vperm.xlu0 %3032, %v2619
        %v3034 = vpop.permute.xlu0 %3033
        %3035 = vset.pattern.permute.xlu0 0
        %3036 = vperm.xlu0 %3035, %v2620
        %v3037 = vpop.permute.xlu0 %3036
        %3038 = vset.pattern.permute.xlu0 0
        %3039 = vperm.xlu0 %3038, %v2635
        %v3040 = vpop.permute.xlu0 %3039
        %3041 = vset.pattern.permute.xlu0 0
        %3042 = vperm.xlu0 %3041, %v2636
        %v3043 = vpop.permute.xlu0 %3042
        %3044 = vset.pattern.permute.xlu0 0
        %3045 = vperm.xlu0 %3044, %v2651
        %v3046 = vpop.permute.xlu0 %3045
        %3047 = vset.pattern.permute.xlu0 0
        %3048 = vperm.xlu0 %3047, %v2652
        %v3049 = vpop.permute.xlu0 %3048
        %3050 = vset.pattern.permute.xlu0 0
        %3051 = vperm.xlu0 %3050, %v2667
        %v3052 = vpop.permute.xlu0 %3051
        %3053 = vset.pattern.permute.xlu0 0
        %3054 = vperm.xlu0 %3053, %v2668
        %v3055 = vpop.permute.xlu0 %3054
        %3056 = vset.pattern.permute.xlu0 0
        %3057 = vperm.xlu0 %3056, %v2683
        %v3058 = vpop.permute.xlu0 %3057
        %3059 = vset.pattern.permute.xlu0 0
        %3060 = vperm.xlu0 %3059, %v2684
        %v3061 = vpop.permute.xlu0 %3060
        %3062 = vset.pattern.permute.xlu0 0
        %3063 = vperm.xlu0 %3062, %v2699
        %v3064 = vpop.permute.xlu0 %3063
        %3065 = vset.pattern.permute.xlu0 0
        %3066 = vperm.xlu0 %3065, %v2700
        %v3067 = vpop.permute.xlu0 %3066
        %3068 = vset.pattern.permute.xlu0 0
        %3069 = vperm.xlu0 %3068, %v2715
        %v3070 = vpop.permute.xlu0 %3069
        %3071 = vset.pattern.permute.xlu0 0
        %3072 = vperm.xlu0 %3071, %v2716
        %v3073 = vpop.permute.xlu0 %3072
        %v3074 = vadd.s32 %v358, 4294967264
        %v3075 = vperm.slane %v3028, %v3074
        %v3076 = vadd.s32 %v358, 4294967256
        %v3077 = vperm.slane %v3031, %v3076
        %vm3078 = vcmask 392512
        %v3079 = vsel %vm3078, %v3077, %v3075
        %v3080 = vperm.slane %v3034, %v3074
        %v3081 = vperm.slane %v3037, %v3076
        %v3082 = vsel %vm3078, %v3081, %v3080
        %v3083 = vperm.slane %v3040, %v3074
        %v3084 = vperm.slane %v3043, %v3076
        %v3085 = vsel %vm3078, %v3084, %v3083
        %v3086 = vperm.slane %v3046, %v3074
        %v3087 = vperm.slane %v3049, %v3076
        %v3088 = vsel %vm3078, %v3087, %v3086
        %v3089 = vperm.slane %v3052, %v3074
        %v3090 = vperm.slane %v3055, %v3076
        %v3091 = vsel %vm3078, %v3090, %v3089
        %v3092 = vperm.slane %v3058, %v3074
        %v3093 = vperm.slane %v3061, %v3076
        %v3094 = vsel %vm3078, %v3093, %v3092
        %v3095 = vperm.slane %v3064, %v3074
        %v3096 = vperm.slane %v3067, %v3076
        %v3097 = vsel %vm3078, %v3096, %v3095
        %v3098 = vperm.slane %v3070, %v3074
        %v3099 = vperm.slane %v3073, %v3076
        %v3100 = vsel %vm3078, %v3099, %v3098
        %v3101 = vsel %vm2057, %v3082, %v3079
        %v3102 = vsel %vm2059, %v3085, %v3101
        %v3103 = vsel %vm2061, %v3088, %v3102
        %v3104 = vsel %vm2063, %v3091, %v3103
        %v3105 = vsel %vm2065, %v3094, %v3104
        %v3106 = vsel %vm2067, %v3097, %v3105
        %v3107 = vsel %vm2069, %v3100, %v3106
        %vm3109 = vcmask 392448
        %3110 = vst.msk [vmem:[%s302] sm:$0xff] %vm3109, %v3107
        %3127 = vset.pattern.permute.xlu0 0
        %3128 = vperm.xlu0 %3127, %v2895
        %v3129 = vpop.permute.xlu0 %3128
        %3130 = vset.pattern.permute.xlu0 0
        %3131 = vperm.xlu0 %3130, %v2896
        %v3132 = vpop.permute.xlu0 %3131
        %3133 = vset.pattern.permute.xlu0 0
        %3134 = vperm.xlu0 %3133, %v2911
        %v3135 = vpop.permute.xlu0 %3134
        %3136 = vset.pattern.permute.xlu0 0
        %3137 = vperm.xlu0 %3136, %v2912
        %v3138 = vpop.permute.xlu0 %3137
        %3139 = vset.pattern.permute.xlu0 0
        %3140 = vperm.xlu0 %3139, %v2927
        %v3141 = vpop.permute.xlu0 %3140
        %3142 = vset.pattern.permute.xlu0 0
        %3143 = vperm.xlu0 %3142, %v2928
        %v3144 = vpop.permute.xlu0 %3143
        %3145 = vset.pattern.permute.xlu0 0
        %3146 = vperm.xlu0 %3145, %v2943
        %v3147 = vpop.permute.xlu0 %3146
        %3148 = vset.pattern.permute.xlu0 0
        %3149 = vperm.xlu0 %3148, %v2944
        %v3150 = vpop.permute.xlu0 %3149
        %3151 = vset.pattern.permute.xlu0 0
        %3152 = vperm.xlu0 %3151, %v2959
        %v3153 = vpop.permute.xlu0 %3152
        %3154 = vset.pattern.permute.xlu0 0
        %3155 = vperm.xlu0 %3154, %v2960
        %v3156 = vpop.permute.xlu0 %3155
        %3157 = vset.pattern.permute.xlu0 0
        %3158 = vperm.xlu0 %3157, %v2975
        %v3159 = vpop.permute.xlu0 %3158
        %3160 = vset.pattern.permute.xlu0 0
        %3161 = vperm.xlu0 %3160, %v2976
        %v3162 = vpop.permute.xlu0 %3161
        %3163 = vset.pattern.permute.xlu0 0
        %3164 = vperm.xlu0 %3163, %v2991
        %v3165 = vpop.permute.xlu0 %3164
        %3166 = vset.pattern.permute.xlu0 0
        %3167 = vperm.xlu0 %3166, %v2992
        %v3168 = vpop.permute.xlu0 %3167
        %3169 = vset.pattern.permute.xlu0 0
        %3170 = vperm.xlu0 %3169, %v3007
        %v3171 = vpop.permute.xlu0 %3170
        %3172 = vset.pattern.permute.xlu0 0
        %3173 = vperm.xlu0 %3172, %v3008
        %v3174 = vpop.permute.xlu0 %3173
        %v3175 = vadd.s32 %v358, 4294967248
        %v3176 = vperm.slane %v3129, %v3175
        %v3177 = vadd.s32 %v358, 4294967240
        %v3178 = vperm.slane %v3132, %v3177
        %vm3179 = vcmask 523712
        %v3180 = vsel %vm3179, %v3178, %v3176
        %v3181 = vperm.slane %v3135, %v3175
        %v3182 = vperm.slane %v3138, %v3177
        %v3183 = vsel %vm3179, %v3182, %v3181
        %v3184 = vperm.slane %v3141, %v3175
        %v3185 = vperm.slane %v3144, %v3177
        %v3186 = vsel %vm3179, %v3185, %v3184
        %v3187 = vperm.slane %v3147, %v3175
        %v3188 = vperm.slane %v3150, %v3177
        %v3189 = vsel %vm3179, %v3188, %v3187
        %v3190 = vperm.slane %v3153, %v3175
        %v3191 = vperm.slane %v3156, %v3177
        %v3192 = vsel %vm3179, %v3191, %v3190
        %v3193 = vperm.slane %v3159, %v3175
        %v3194 = vperm.slane %v3162, %v3177
        %v3195 = vsel %vm3179, %v3194, %v3193
        %v3196 = vperm.slane %v3165, %v3175
        %v3197 = vperm.slane %v3168, %v3177
        %v3198 = vsel %vm3179, %v3197, %v3196
        %v3199 = vperm.slane %v3171, %v3175
        %v3200 = vperm.slane %v3174, %v3177
        %v3201 = vsel %vm3179, %v3200, %v3199
        %v3202 = vsel %vm2057, %v3183, %v3180
        %v3203 = vsel %vm2059, %v3186, %v3202
        %v3204 = vsel %vm2061, %v3189, %v3203
        %v3205 = vsel %vm2063, %v3192, %v3204
        %v3206 = vsel %vm2065, %v3195, %v3205
        %v3207 = vsel %vm2067, %v3198, %v3206
        %v3208 = vsel %vm2069, %v3201, %v3207
        %vm3210 = vcmask 523648
        %3211 = vst.msk [vmem:[%s302] sm:$0xff] %vm3210, %v3208
        %vm3212 = vcmp.eq.s32.totalorder %v358, 0
        %vm3213 = vcmp.eq.s32.totalorder %v358, 1
        %vm3214 = vcmp.eq.s32.totalorder %v358, 2
        %v3215 = vsel %vm3214, %v2424, 0
        %v3216 = vsel %vm3213, %v2230, %v3215
        %v3217 = vsel %vm3212, %v375, %v3216
        %3218 = vst.msk [vmem:[%s318] sm:$0xff] %vm353, %v3217
        %s3219 = sand.u32 %s133, 1
        %s3220 = scalar_lea.sflag [#allocation4], %s3219
        %s3221 = sand.u32 %s133, 1
        %s3222 = smul.addr %s3221, 8
        %s3223 = scalar_lea.vmem [#allocation7], %s3222
        %p3224 = scmp.lt.s32.totalorder %s26, 3
        %s3225 = scalar_select %p3224, %s26, 3
        %s3226 = smul.addr %s3225, 8
        %s3227 = scalar_lea.vmem %s5, %s3226
        // Predicated region
        $region45: #{tpu_custom_call.1} parent=35 // pred_check
          %p3228 = pneg %p143
        $region46: #{tpu_custom_call.1} parent=35 // pred_check_branch
          %3230 = sbr.rel (%p3228) target = $region48
        $region47: #{tpu_custom_call.1} parent=35 // pred_region
          %3232 = vsyncadd %s3220, 0
          %s3233 = smul.addr %s26, 8
          %s3234 = scalar_lea.hbm %s4, %s3233
          %s3236 = sshll.u32 %s3223, 4
          %s3237 = int_to_ptr.vmem [resolvable:$true] %s3236
          %s3238 = sshll.u32 %s3234, 4
          %s3239 = int_to_ptr.hbm [resolvable:$true] %s3238
          %3241 = dma.vmem_to_hbm [thread:$0]  %s3237, 128, %s3239, %s3220
        $region48: #{tpu_custom_call.1} parent=35 // pred_fallthru
          _
        // Predicated region
        $region49: #{tpu_custom_call.1} parent=35 // pred_check
          %p3242 = pneg %p169
        $region50: #{tpu_custom_call.1} parent=35 // pred_check_branch
          %3244 = sbr.rel (%p3242) target = $region52
        $region51: #{tpu_custom_call.1} parent=35 // pred_region
          _
        $region52: #{tpu_custom_call.1} parent=35 // pred_fallthru
          _
      $region36: #{tpu_custom_call.1} parent=5 // pred_fallthru
        _
      %p3245 = scmp.le.s32.totalorder 2, %s21
      // Predicated region
      $region53: #{tpu_custom_call.1} parent=5 // pred_check
        %p3246 = pneg %p3245
      $region54: #{tpu_custom_call.1} parent=5 // pred_check_branch
        %3248 = sbr.rel (%p3246) target = $region56
      $region55: #{tpu_custom_call.1} parent=5 // pred_region
        %s3249 = ssub.s32 %s21, 2
        // Predicated region
        $region57: #{tpu_custom_call.1} parent=55 // pred_check
          %p3250 = pneg %p149
        $region58: #{tpu_custom_call.1} parent=55 // pred_check_branch
          %3252 = sbr.rel (%p3250) target = $region60
        $region59: #{tpu_custom_call.1} parent=55 // pred_region
          %s3253 = sand.u32 %s134, 1
          %s3254 = scalar_lea.sflag [#allocation4], %s3253
          %s3255 = sand.u32 %s134, 1
          %s3256 = smul.addr %s3255, 8
          %s3257 = scalar_lea.vmem [#allocation7], %s3256
          %3259 = dma.done %s3254, 128
        $region60: #{tpu_custom_call.1} parent=55 // pred_fallthru
          _
        // Predicated region
        $region61: #{tpu_custom_call.1} parent=55 // pred_check
          %p3260 = pneg %p175
        $region62: #{tpu_custom_call.1} parent=55 // pred_check_branch
          %3262 = sbr.rel (%p3260) target = $region64
        $region63: #{tpu_custom_call.1} parent=55 // pred_region
          %p3263 = scmp.lt.s32.totalorder %s27, 3
          %s3264 = scalar_select %p3263, %s27, 3
          %s3265 = smul.addr %s3264, 8
          %s3266 = scalar_lea.vmem %s5, %s3265
        $region64: #{tpu_custom_call.1} parent=55 // pred_fallthru
          _
      $region56: #{tpu_custom_call.1} parent=5 // pred_fallthru
        _
    $region6: #{tpu_custom_call.1} parent=1 // loop_footer
      %s25 = sadd.s32 1, %s21
    $region7: #{tpu_custom_call.1} parent=1 // loop_footer_branch
      %20 = sbr.rel target = $region3
    $region8: #{tpu_custom_call.1} parent=1 // loop_exit
      _
    %3267 = vsyncpa [#allocation3], 1
    %s3268 = scalar_lea.sflag [#allocation3], 1
    %3269 = vsyncpa %s3268, 1
    %3270 = vsyncpa [#allocation6], 1
    %s3271 = scalar_lea.sflag [#allocation6], 1
    %3272 = vsyncpa %s3271, 1
    %3273 = vsyncpa [#allocation4], 1
    %s3274 = scalar_lea.sflag [#allocation4], 1
    %3275 = vsyncpa %s3274, 1

</llo_original>
